<compile_context>
chip_gen: v7x
topology: tpu7x:2x2x1
jax: 0.10.0
libtpu: 0.0.40
codegen_flags: <defaults>
</compile_context>

<pallas_src>
import jax
import jax.numpy as jnp
from jax.experimental import pallas as pl
from jax.experimental.pallas import tpu as pltpu


def _pick_row_tile(n, cap=2048):
    """Largest divisor of n that is <= cap and a multiple of 8, else n."""
    if n <= cap:
        return n
    for t in range(cap - (cap % 8), 7, -8):
        if n % t == 0:
            return t
    # TODO(synk): ragged N with no multiple-of-8 divisor falls back to one tile.
    return n


# ----------------------------------------------------------------------------
# Kernel 1: point MLP + running-max pool.   grid = (B, N // TN)
# ----------------------------------------------------------------------------
def _point_mlp_kernel(x_ref, w1_ref, b1_ref, w2_ref, b2_ref, w3_ref,
                      pooled_ref):
    t = pl.program_id(1)
    x = x_ref[...]                                     # (TN, Cin) f32
    cin = x.shape[-1]

    # conv1 (K=Cin tiny): VPU broadcast-FMAs, skip the MXU.
    w1 = w1_ref[...]                                   # (Cin, 64) f32
    h = x[:, 0:1] * w1[0:1, :]
    for c in range(1, cin):
        h = h + x[:, c:c + 1] * w1[c:c + 1, :]
    h = jnp.maximum(h + b1_ref[...], 0.0)              # (TN, 64)

    # conv2 on the MXU (bf16 operands, f32 accumulate).
    h = jnp.dot(h.astype(jnp.bfloat16), w2_ref[...],
                preferred_element_type=jnp.float32) + b2_ref[...]
    h = jnp.maximum(h, 0.0)                            # (TN, 128)

    # conv3 raw accumulator — bias + ReLU are applied after the max-pool
    # (exactly equivalent: max commutes with +const and with ReLU).
    h3 = jnp.dot(h.astype(jnp.bfloat16), w3_ref[...],
                 preferred_element_type=jnp.float32)   # (TN, 1024)

    tile_max = jnp.max(h3, axis=0, keepdims=True)      # (1, 1024)
    tile_max = tile_max.reshape(1, 8, 128)             # lane->(sublane,lane), (8,128)-aligned

    @pl.when(t == 0)
    def _():
        pooled_ref[...] = tile_max

    @pl.when(t > 0)
    def _():
        pooled_ref[...] = jnp.maximum(pooled_ref[...], tile_max)


# ----------------------------------------------------------------------------
# Kernel 2: pooled bias+ReLU -> head MLP -> transform + ortho loss.
# ----------------------------------------------------------------------------
def _head_kernel(pooled_ref, b3_ref, w4_ref, b4_ref, w5_ref, b5_ref,
                 w6_ref, b6_ref, mat_ref, loss_ref):
    # conv3 bias + ReLU (commuted past the max-pool).
    p = jnp.maximum(pooled_ref[...] + b3_ref[...], 0.0)            # (B, 1024)

    g = jnp.dot(p.astype(jnp.bfloat16), w4_ref[...],
                preferred_element_type=jnp.float32) + b4_ref[...]
    g = jnp.maximum(g, 0.0)                                        # (B, 512)
    g = jnp.dot(g.astype(jnp.bfloat16), w5_ref[...],
                preferred_element_type=jnp.float32) + b5_ref[...]
    g = jnp.maximum(g, 0.0)                                        # (B, 256)
    y = jnp.dot(g.astype(jnp.bfloat16), w6_ref[...],
                preferred_element_type=jnp.float32) + b6_ref[...]  # (B, 9), identity folded
    mat_ref[...] = y

    # Orthogonality loss: mean_b || M_b M_b^T - I ||_F  via the 6 unique Gram
    # entries (lane reductions over width-3 slices).
    r0, r1, r2 = y[:, 0:3], y[:, 3:6], y[:, 6:9]
    g00 = jnp.sum(r0 * r0, axis=1, keepdims=True)
    g11 = jnp.sum(r1 * r1, axis=1, keepdims=True)
    g22 = jnp.sum(r2 * r2, axis=1, keepdims=True)
    g01 = jnp.sum(r0 * r1, axis=1, keepdims=True)
    g02 = jnp.sum(r0 * r2, axis=1, keepdims=True)
    g12 = jnp.sum(r1 * r2, axis=1, keepdims=True)
    sq = ((g00 - 1.0) ** 2 + (g11 - 1.0) ** 2 + (g22 - 1.0) ** 2
          + 2.0 * (g01 * g01 + g02 * g02 + g12 * g12))             # (B, 1)
    loss_ref[...] = jnp.mean(jnp.sqrt(sq), axis=0, keepdims=True)  # (1, 1)


# ----------------------------------------------------------------------------
# Wrapper
# ----------------------------------------------------------------------------
def enhanced_stn_forward(x, params, ortho_weight=0.01):
    """x: (B, N, C_in) float32. Returns (transform (B,3,3), weighted ortho loss)."""
    B, N, Cin = x.shape
    TN = _pick_row_tile(N)
    assert N % TN == 0
    n_tiles = N // TN

    flops = 2 * B * N * (Cin * 64 + 64 * 128 + 128 * 1024)
    bytes_accessed = int(
        x.size * 4
        + sum(int(params[k].size) * params[k].dtype.itemsize
              for k in ("w1", "b1", "w2", "b2", "w3"))
        + B * 1024 * 4)
    point_cost = pl.CostEstimate(flops=flops, transcendentals=0,
                                 bytes_accessed=bytes_accessed)

    # ---- Kernel 1: tiled point MLP + running max-pool ------------------------
    pooled = pl.pallas_call(
        _point_mlp_kernel,
        out_shape=jax.ShapeDtypeStruct((B, 8, 128), jnp.float32),
        grid_spec=pltpu.PrefetchScalarGridSpec(
            num_scalar_prefetch=0,
            grid=(B, n_tiles),
            in_specs=[
                pl.BlockSpec((None, TN, Cin), lambda b, t: (b, t, 0)),   # x tiles
                pl.BlockSpec((Cin, 64), lambda b, t: (0, 0)),            # w1 (resident)
                pl.BlockSpec((1, 64), lambda b, t: (0, 0)),              # b1
                pl.BlockSpec((64, 128), lambda b, t: (0, 0)),            # w2
                pl.BlockSpec((1, 128), lambda b, t: (0, 0)),             # b2
                pl.BlockSpec((128, 1024), lambda b, t: (0, 0)),          # w3
            ],
            out_specs=pl.BlockSpec((1, 8, 128), lambda b, t: (b, 0, 0)),
        ),
        compiler_params=pltpu.CompilerParams(
            dimension_semantics=("parallel", "arbitrary"),
            vmem_limit_bytes=32 * 1024 * 1024),
        cost_estimate=point_cost,
    )(x, params["w1"], params["b1"], params["w2"], params["b2"], params["w3"])

    pooled = pooled.reshape(B, 1024)

    # ---- Kernel 2: head MLP + ortho loss (single step, tiny) -----------------
    mat9, loss = pl.pallas_call(
        _head_kernel,
        out_shape=(jax.ShapeDtypeStruct((B, 9), jnp.float32),
                   jax.ShapeDtypeStruct((1, 1), jnp.float32)),
        compiler_params=pltpu.CompilerParams(
            vmem_limit_bytes=32 * 1024 * 1024),
    )(pooled, params["b3"], params["w4"], params["b4"],
      params["w5"], params["b5"], params["w6"], params["b6"])

    return mat9.reshape(B, 3, 3), ortho_weight * loss[0, 0]


# ----------------------------------------------------------------------------
# Deterministic parameter construction (synthetic weights, BN folded, eval
# mode).  MXU-layer weights (w2..w6) are stored in bf16.
# ----------------------------------------------------------------------------
def _fold_bn(w, b, gamma, beta, mean, var, eps=1e-5):
    scale = gamma / jnp.sqrt(var + eps)
    return w * scale[None, :], (b - mean) * scale + beta


def init_params(key, in_channels):
    dims = [(in_channels, 64), (64, 128), (128, 1024),
            (1024, 512), (512, 256), (256, 9)]
    keys = iter(jax.random.split(key, len(dims) * 6))
    params = {}
    for li, (cin, cout) in enumerate(dims, start=1):
        bound = 1.0 / float(cin) ** 0.5
        w = jax.random.uniform(next(keys), (cin, cout), jnp.float32, -bound, bound)
        b = jax.random.uniform(next(keys), (cout,), jnp.float32, -bound, bound)
        if li <= 5:  # layers followed by BatchNorm (eval mode, folded)
            gamma = jax.random.uniform(next(keys), (cout,), jnp.float32, 0.5, 1.5)
            beta = jax.random.uniform(next(keys), (cout,), jnp.float32, -0.1, 0.1)
            mean = jax.random.uniform(next(keys), (cout,), jnp.float32, -0.1, 0.1)
            var = jax.random.uniform(next(keys), (cout,), jnp.float32, 0.5, 1.5)
            w, b = _fold_bn(w, b, gamma, beta, mean, var)
        else:
            next(keys); next(keys); next(keys); next(keys)
        if li == 6:
            # fold the identity matrix added in forward() into the last bias
            b = b + jnp.array([1, 0, 0, 0, 1, 0, 0, 0, 1], jnp.float32)
        if li >= 2:
            # MXU layers: bf16 weights halve weight HBM traffic (native bf16 MXU).
            w = w.astype(jnp.bfloat16)
        params[f"w{li}"] = w
        params[f"b{li}"] = b.reshape(1, cout)
    return params


# ----------------------------------------------------------------------------
# Plain-JAX reference (same stored params, same bf16 operand casts; standard
# bias+ReLU-before-max order) for a tight correctness check.
# ----------------------------------------------------------------------------
def reference_forward(x, p, ortho_weight=0.01):
    B, N, Cin = x.shape
    xf = x.reshape(B * N, Cin)

    def mm(a, w, b):
        return jnp.dot(a.astype(jnp.bfloat16), w,
                       preferred_element_type=jnp.float32) + b

    h = jnp.maximum(
        jnp.einsum("mc,cd->md", xf, p["w1"],
                   precision=jax.lax.Precision.HIGHEST) + p["b1"], 0.0)
    h = jnp.maximum(mm(h, p["w2"], p["b2"]), 0.0)
    h = jnp.maximum(mm(h, p["w3"], p["b3"]), 0.0)
    pooled = jnp.max(h.reshape(B, N, 1024), axis=1)
    h = jnp.maximum(mm(pooled, p["w4"], p["b4"]), 0.0)
    h = jnp.maximum(mm(h, p["w5"], p["b5"]), 0.0)
    y = mm(h, p["w6"], p["b6"])
    m = y.reshape(B, 3, 3)
    diff = jnp.einsum("bij,bkj->bik", m, m) - jnp.eye(3)[None]
    loss = jnp.mean(jnp.sqrt(jnp.sum(diff * diff, axis=(1, 2))))
    return m, ortho_weight * loss


if __name__ == "__main__":
    key = jax.random.PRNGKey(0)
    B, N, Cin = 2, 128, 3        # torch input would be (B, Cin, N) = (2, 3, 128)
    kx, kp = jax.random.split(key)
    x = jax.random.normal(kx, (B, N, Cin), jnp.float32)
    params = init_params(kp, Cin)

    mat, loss = jax.jit(enhanced_stn_forward)(x, params)
    jax.block_until_ready((mat, loss))

    mat_ref, loss_ref = reference_forward(x, params)
    assert mat.shape == (B, 3, 3) and loss.shape == ()
    assert jnp.allclose(mat, mat_ref, atol=2e-3, rtol=2e-3), "transform mismatch"
    assert jnp.allclose(loss, loss_ref, atol=1e-3, rtol=5e-3), "ortho loss mismatch"

    print("KERNEL_OK")
</pallas_src>

<mosaic_0001>
module attributes {stable_mosaic.version = 11 : i64} {
  func.func @_point_mlp_kernel(%arg0: i32, %arg1: i32, %arg2: memref<1x128x3xf32, #tpu.memory_space<vmem>>, %arg3: memref<3x64xf32, #tpu.memory_space<vmem>>, %arg4: memref<1x64xf32, #tpu.memory_space<vmem>>, %arg5: memref<64x128xbf16, #tpu.memory_space<vmem>>, %arg6: memref<1x128xf32, #tpu.memory_space<vmem>>, %arg7: memref<128x1024xbf16, #tpu.memory_space<vmem>>, %arg8: memref<1x8x128xf32, #tpu.memory_space<vmem>>) attributes {dimension_semantics = [#tpu.dimension_semantics<parallel>, #tpu.dimension_semantics<arbitrary>], iteration_bounds = array<i64: 2, 1>, scalar_prefetch = 0 : i64, scratch_operands = 0 : i64, tpu.core_type = #tpu.core_type<tc>, window_params = [{transform_indices = @transform_0, window_bounds = array<i64: 1, 128, 3>}, {pipeline_mode = #tpu.pipeline_mode<synchronous>, transform_indices = @transform_1, window_bounds = array<i64: 3, 64>}, {pipeline_mode = #tpu.pipeline_mode<synchronous>, transform_indices = @transform_2, window_bounds = array<i64: 1, 64>}, {pipeline_mode = #tpu.pipeline_mode<synchronous>, transform_indices = @transform_3, window_bounds = array<i64: 64, 128>}, {pipeline_mode = #tpu.pipeline_mode<synchronous>, transform_indices = @transform_4, window_bounds = array<i64: 1, 128>}, {pipeline_mode = #tpu.pipeline_mode<synchronous>, transform_indices = @transform_5, window_bounds = array<i64: 128, 1024>}, {transform_indices = @transform_6, window_bounds = array<i64: 1, 8, 128>}]} {
    %c0 = arith.constant 0 : index
    %c0_0 = arith.constant 0 : index
    %c0_1 = arith.constant 0 : index
    %0 = vector.load %arg2[%c0, %c0_0, %c0_1] : memref<1x128x3xf32, #tpu.memory_space<vmem>>, vector<1x128x3xf32>
    %1 = vector.shape_cast %0 : vector<1x128x3xf32> to vector<128x3xf32>
    %c0_2 = arith.constant 0 : index
    %c0_3 = arith.constant 0 : index
    %2 = vector.load %arg3[%c0_2, %c0_3] : memref<3x64xf32, #tpu.memory_space<vmem>>, vector<3x64xf32>
    %3 = vector.extract_strided_slice %1 {offsets = [0, 0], sizes = [128, 1], strides = [1, 1]} : vector<128x3xf32> to vector<128x1xf32>
    %4 = vector.extract_strided_slice %2 {offsets = [0, 0], sizes = [1, 64], strides = [1, 1]} : vector<3x64xf32> to vector<1x64xf32>
    %5 = vector.broadcast %3 : vector<128x1xf32> to vector<128x64xf32>
    %6 = vector.broadcast %4 : vector<1x64xf32> to vector<128x64xf32>
    %7 = arith.mulf %5, %6 : vector<128x64xf32>
    %8 = vector.extract_strided_slice %1 {offsets = [0, 1], sizes = [128, 1], strides = [1, 1]} : vector<128x3xf32> to vector<128x1xf32>
    %9 = vector.extract_strided_slice %2 {offsets = [1, 0], sizes = [1, 64], strides = [1, 1]} : vector<3x64xf32> to vector<1x64xf32>
    %10 = vector.broadcast %8 : vector<128x1xf32> to vector<128x64xf32>
    %11 = vector.broadcast %9 : vector<1x64xf32> to vector<128x64xf32>
    %12 = arith.mulf %10, %11 : vector<128x64xf32>
    %13 = arith.addf %7, %12 : vector<128x64xf32>
    %14 = vector.extract_strided_slice %1 {offsets = [0, 2], sizes = [128, 1], strides = [1, 1]} : vector<128x3xf32> to vector<128x1xf32>
    %15 = vector.extract_strided_slice %2 {offsets = [2, 0], sizes = [1, 64], strides = [1, 1]} : vector<3x64xf32> to vector<1x64xf32>
    %16 = vector.broadcast %14 : vector<128x1xf32> to vector<128x64xf32>
    %17 = vector.broadcast %15 : vector<1x64xf32> to vector<128x64xf32>
    %18 = arith.mulf %16, %17 : vector<128x64xf32>
    %19 = arith.addf %13, %18 : vector<128x64xf32>
    %c0_4 = arith.constant 0 : index
    %c0_5 = arith.constant 0 : index
    %20 = vector.load %arg4[%c0_4, %c0_5] : memref<1x64xf32, #tpu.memory_space<vmem>>, vector<1x64xf32>
    %21 = vector.broadcast %20 : vector<1x64xf32> to vector<128x64xf32>
    %22 = arith.addf %19, %21 : vector<128x64xf32>
    %cst = arith.constant 0.000000e+00 : f32
    %23 = vector.broadcast %cst : f32 to vector<128x64xf32>
    %24 = arith.maximumf %22, %23 : vector<128x64xf32>
    %25 = arith.truncf %24 : vector<128x64xf32> to vector<128x64xbf16>
    %c0_6 = arith.constant 0 : index
    %c0_7 = arith.constant 0 : index
    %26 = vector.load %arg5[%c0_6, %c0_7] : memref<64x128xbf16, #tpu.memory_space<vmem>>, vector<64x128xbf16>
    %cst_8 = arith.constant dense<0.000000e+00> : vector<128x128xf32>
    %27 = tpu.matmul %25, %26, %cst_8 {dimension_numbers = #tpu.dot_dimension_numbers<[1], [0], [0], [1], [0, 0, 1, 1], [], []>} : vector<128x64xbf16>, vector<64x128xbf16>, vector<128x128xf32> -> vector<128x128xf32>
    %c0_9 = arith.constant 0 : index
    %c0_10 = arith.constant 0 : index
    %28 = vector.load %arg6[%c0_9, %c0_10] : memref<1x128xf32, #tpu.memory_space<vmem>>, vector<1x128xf32>
    %29 = vector.broadcast %28 : vector<1x128xf32> to vector<128x128xf32>
    %30 = arith.addf %27, %29 : vector<128x128xf32>
    %cst_11 = arith.constant 0.000000e+00 : f32
    %31 = vector.broadcast %cst_11 : f32 to vector<128x128xf32>
    %32 = arith.maximumf %30, %31 : vector<128x128xf32>
    %33 = arith.truncf %32 : vector<128x128xf32> to vector<128x128xbf16>
    %c0_12 = arith.constant 0 : index
    %c0_13 = arith.constant 0 : index
    %34 = vector.load %arg7[%c0_12, %c0_13] : memref<128x1024xbf16, #tpu.memory_space<vmem>>, vector<128x1024xbf16>
    %cst_14 = arith.constant dense<0.000000e+00> : vector<128x1024xf32>
    %35 = tpu.matmul %33, %34, %cst_14 {dimension_numbers = #tpu.dot_dimension_numbers<[1], [0], [0], [1], [0, 0, 1, 1], [], []>} : vector<128x128xbf16>, vector<128x1024xbf16>, vector<128x1024xf32> -> vector<128x1024xf32>
    %cst_15 = arith.constant dense<0xFF800000> : vector<1024xf32>
    %36 = vector.multi_reduction <maximumf>, %35, %cst_15 [0] : vector<128x1024xf32> to vector<1024xf32>
    %37 = vector.shape_cast %36 : vector<1024xf32> to vector<1x1024xf32>
    %38 = vector.shape_cast %37 : vector<1x1024xf32> to vector<1x8x128xf32>
    %c0_i32 = arith.constant 0 : i32
    %39 = arith.cmpi eq, %arg1, %c0_i32 : i32
    %40 = arith.extui %39 : i1 to i32
    %c0_i32_16 = arith.constant 0 : i32
    %41 = arith.cmpi ne, %40, %c0_i32_16 : i32
    scf.if %41 {
      %c0_19 = arith.constant 0 : index
      %c0_20 = arith.constant 0 : index
      %c0_21 = arith.constant 0 : index
      %45 = vector.load %arg8[%c0_19, %c0_20, %c0_21] : memref<1x8x128xf32, #tpu.memory_space<vmem>>, vector<1x8x128xf32>
      tpu.vector_store %arg8[%c0_19, %c0_20, %c0_21], %38 {strides = array<i32>} : memref<1x8x128xf32, #tpu.memory_space<vmem>>, vector<1x8x128xf32>,
    } else {
    }
    %c0_i32_17 = arith.constant 0 : i32
    %42 = arith.cmpi sgt, %arg1, %c0_i32_17 : i32
    %43 = arith.extui %42 : i1 to i32
    %c0_i32_18 = arith.constant 0 : i32
    %44 = arith.cmpi ne, %43, %c0_i32_18 : i32
    scf.if %44 {
      %c0_19 = arith.constant 0 : index
      %c0_20 = arith.constant 0 : index
      %c0_21 = arith.constant 0 : index
      %45 = vector.load %arg8[%c0_19, %c0_20, %c0_21] : memref<1x8x128xf32, #tpu.memory_space<vmem>>, vector<1x8x128xf32>
      %46 = arith.maximumf %45, %38 : vector<1x8x128xf32>
      %c0_22 = arith.constant 0 : index
      %c0_23 = arith.constant 0 : index
      %c0_24 = arith.constant 0 : index
      %47 = vector.load %arg8[%c0_22, %c0_23, %c0_24] : memref<1x8x128xf32, #tpu.memory_space<vmem>>, vector<1x8x128xf32>
      tpu.vector_store %arg8[%c0_22, %c0_23, %c0_24], %46 {strides = array<i32>} : memref<1x8x128xf32, #tpu.memory_space<vmem>>, vector<1x8x128xf32>,
    } else {
    }
    return
  }
  func.func @transform_0(%arg0: i32, %arg1: i32) -> (i32, i32, i32) {
    %c0_i32 = arith.constant 0 : i32
    %c0_i32_0 = arith.constant 0 : i32
    return %arg0, %arg1, %c0_i32 : i32, i32, i32
  }
  func.func @transform_1(%arg0: i32, %arg1: i32) -> (i32, i32) {
    %c0_i32 = arith.constant 0 : i32
    %c0_i32_0 = arith.constant 0 : i32
    %c0_i32_1 = arith.constant 0 : i32
    return %c0_i32, %c0_i32_0 : i32, i32
  }
  func.func @transform_2(%arg0: i32, %arg1: i32) -> (i32, i32) {
    %c0_i32 = arith.constant 0 : i32
    %c0_i32_0 = arith.constant 0 : i32
    %c0_i32_1 = arith.constant 0 : i32
    return %c0_i32, %c0_i32_0 : i32, i32
  }
  func.func @transform_3(%arg0: i32, %arg1: i32) -> (i32, i32) {
    %c0_i32 = arith.constant 0 : i32
    %c0_i32_0 = arith.constant 0 : i32
    %c0_i32_1 = arith.constant 0 : i32
    return %c0_i32, %c0_i32_0 : i32, i32
  }
  func.func @transform_4(%arg0: i32, %arg1: i32) -> (i32, i32) {
    %c0_i32 = arith.constant 0 : i32
    %c0_i32_0 = arith.constant 0 : i32
    %c0_i32_1 = arith.constant 0 : i32
    return %c0_i32, %c0_i32_0 : i32, i32
  }
  func.func @transform_5(%arg0: i32, %arg1: i32) -> (i32, i32) {
    %c0_i32 = arith.constant 0 : i32
    %c0_i32_0 = arith.constant 0 : i32
    %c0_i32_1 = arith.constant 0 : i32
    return %c0_i32, %c0_i32_0 : i32, i32
  }
  func.func @transform_6(%arg0: i32, %arg1: i32) -> (i32, i32, i32) {
    %c0_i32 = arith.constant 0 : i32
    %c0_i32_0 = arith.constant 0 : i32
    %c0_i32_1 = arith.constant 0 : i32
    return %arg0, %c0_i32, %c0_i32_0 : i32, i32, i32
  }
}

module attributes {stable_mosaic.version = 11 : i64} {
  func.func @_head_kernel(%arg0: memref<2x1024xf32, #tpu.memory_space<vmem>>, %arg1: memref<1x1024xf32, #tpu.memory_space<vmem>>, %arg2: memref<1024x512xbf16, #tpu.memory_space<vmem>>, %arg3: memref<1x512xf32, #tpu.memory_space<vmem>>, %arg4: memref<512x256xbf16, #tpu.memory_space<vmem>>, %arg5: memref<1x256xf32, #tpu.memory_space<vmem>>, %arg6: memref<256x9xbf16, #tpu.memory_space<vmem>>, %arg7: memref<1x9xf32, #tpu.memory_space<vmem>>, %arg8: memref<2x9xf32, #tpu.memory_space<vmem>>, %arg9: memref<1x1xf32, #tpu.memory_space<vmem>>) attributes {dimension_semantics = [], scalar_prefetch = 0 : i64, scratch_operands = 0 : i64, tpu.core_type = #tpu.core_type<tc>} {
    %c0 = arith.constant 0 : index
    %c0_0 = arith.constant 0 : index
    %0 = vector.load %arg0[%c0, %c0_0] : memref<2x1024xf32, #tpu.memory_space<vmem>>, vector<2x1024xf32>
    %c0_1 = arith.constant 0 : index
    %c0_2 = arith.constant 0 : index
    %1 = vector.load %arg1[%c0_1, %c0_2] : memref<1x1024xf32, #tpu.memory_space<vmem>>, vector<1x1024xf32>
    %2 = vector.broadcast %1 : vector<1x1024xf32> to vector<2x1024xf32>
    %3 = arith.addf %0, %2 : vector<2x1024xf32>
    %cst = arith.constant 0.000000e+00 : f32
    %4 = vector.broadcast %cst : f32 to vector<2x1024xf32>
    %5 = arith.maximumf %3, %4 : vector<2x1024xf32>
    %6 = arith.truncf %5 : vector<2x1024xf32> to vector<2x1024xbf16>
    %c0_3 = arith.constant 0 : index
    %c0_4 = arith.constant 0 : index
    %7 = vector.load %arg2[%c0_3, %c0_4] : memref<1024x512xbf16, #tpu.memory_space<vmem>>, vector<1024x512xbf16>
    %cst_5 = arith.constant dense<0.000000e+00> : vector<2x512xf32>
    %8 = tpu.matmul %6, %7, %cst_5 {dimension_numbers = #tpu.dot_dimension_numbers<[1], [0], [0], [1], [0, 0, 1, 1], [], []>} : vector<2x1024xbf16>, vector<1024x512xbf16>, vector<2x512xf32> -> vector<2x512xf32>
    %c0_6 = arith.constant 0 : index
    %c0_7 = arith.constant 0 : index
    %9 = vector.load %arg3[%c0_6, %c0_7] : memref<1x512xf32, #tpu.memory_space<vmem>>, vector<1x512xf32>
    %10 = vector.broadcast %9 : vector<1x512xf32> to vector<2x512xf32>
    %11 = arith.addf %8, %10 : vector<2x512xf32>
    %cst_8 = arith.constant 0.000000e+00 : f32
    %12 = vector.broadcast %cst_8 : f32 to vector<2x512xf32>
    %13 = arith.maximumf %11, %12 : vector<2x512xf32>
    %14 = arith.truncf %13 : vector<2x512xf32> to vector<2x512xbf16>
    %c0_9 = arith.constant 0 : index
    %c0_10 = arith.constant 0 : index
    %15 = vector.load %arg4[%c0_9, %c0_10] : memref<512x256xbf16, #tpu.memory_space<vmem>>, vector<512x256xbf16>
    %cst_11 = arith.constant dense<0.000000e+00> : vector<2x256xf32>
    %16 = tpu.matmul %14, %15, %cst_11 {dimension_numbers = #tpu.dot_dimension_numbers<[1], [0], [0], [1], [0, 0, 1, 1], [], []>} : vector<2x512xbf16>, vector<512x256xbf16>, vector<2x256xf32> -> vector<2x256xf32>
    %c0_12 = arith.constant 0 : index
    %c0_13 = arith.constant 0 : index
    %17 = vector.load %arg5[%c0_12, %c0_13] : memref<1x256xf32, #tpu.memory_space<vmem>>, vector<1x256xf32>
    %18 = vector.broadcast %17 : vector<1x256xf32> to vector<2x256xf32>
    %19 = arith.addf %16, %18 : vector<2x256xf32>
    %cst_14 = arith.constant 0.000000e+00 : f32
    %20 = vector.broadcast %cst_14 : f32 to vector<2x256xf32>
    %21 = arith.maximumf %19, %20 : vector<2x256xf32>
    %22 = arith.truncf %21 : vector<2x256xf32> to vector<2x256xbf16>
    %c0_15 = arith.constant 0 : index
    %c0_16 = arith.constant 0 : index
    %23 = vector.load %arg6[%c0_15, %c0_16] : memref<256x9xbf16, #tpu.memory_space<vmem>>, vector<256x9xbf16>
    %cst_17 = arith.constant dense<0.000000e+00> : vector<2x9xf32>
    %24 = tpu.matmul %22, %23, %cst_17 {dimension_numbers = #tpu.dot_dimension_numbers<[1], [0], [0], [1], [0, 0, 1, 1], [], []>} : vector<2x256xbf16>, vector<256x9xbf16>, vector<2x9xf32> -> vector<2x9xf32>
    %c0_18 = arith.constant 0 : index
    %c0_19 = arith.constant 0 : index
    %25 = vector.load %arg7[%c0_18, %c0_19] : memref<1x9xf32, #tpu.memory_space<vmem>>, vector<1x9xf32>
    %26 = vector.broadcast %25 : vector<1x9xf32> to vector<2x9xf32>
    %27 = arith.addf %24, %26 : vector<2x9xf32>
    %c0_20 = arith.constant 0 : index
    %c0_21 = arith.constant 0 : index
    %28 = vector.load %arg8[%c0_20, %c0_21] : memref<2x9xf32, #tpu.memory_space<vmem>>, vector<2x9xf32>
    tpu.vector_store %arg8[%c0_20, %c0_21], %27 {strides = array<i32>} : memref<2x9xf32, #tpu.memory_space<vmem>>, vector<2x9xf32>,
    %29 = vector.extract_strided_slice %27 {offsets = [0, 0], sizes = [2, 3], strides = [1, 1]} : vector<2x9xf32> to vector<2x3xf32>
    %30 = vector.extract_strided_slice %27 {offsets = [0, 3], sizes = [2, 3], strides = [1, 1]} : vector<2x9xf32> to vector<2x3xf32>
    %31 = vector.extract_strided_slice %27 {offsets = [0, 6], sizes = [2, 3], strides = [1, 1]} : vector<2x9xf32> to vector<2x3xf32>
    %32 = arith.mulf %29, %29 : vector<2x3xf32>
    %cst_22 = arith.constant dense<0.000000e+00> : vector<2xf32>
    %33 = vector.multi_reduction <add>, %32, %cst_22 [1] : vector<2x3xf32> to vector<2xf32>
    %34 = vector.shape_cast %33 : vector<2xf32> to vector<2x1xf32>
    %35 = arith.mulf %30, %30 : vector<2x3xf32>
    %cst_23 = arith.constant dense<0.000000e+00> : vector<2xf32>
    %36 = vector.multi_reduction <add>, %35, %cst_23 [1] : vector<2x3xf32> to vector<2xf32>
    %37 = vector.shape_cast %36 : vector<2xf32> to vector<2x1xf32>
    %38 = arith.mulf %31, %31 : vector<2x3xf32>
    %cst_24 = arith.constant dense<0.000000e+00> : vector<2xf32>
    %39 = vector.multi_reduction <add>, %38, %cst_24 [1] : vector<2x3xf32> to vector<2xf32>
    %40 = vector.shape_cast %39 : vector<2xf32> to vector<2x1xf32>
    %41 = arith.mulf %29, %30 : vector<2x3xf32>
    %cst_25 = arith.constant dense<0.000000e+00> : vector<2xf32>
    %42 = vector.multi_reduction <add>, %41, %cst_25 [1] : vector<2x3xf32> to vector<2xf32>
    %43 = vector.shape_cast %42 : vector<2xf32> to vector<2x1xf32>
    %44 = arith.mulf %29, %31 : vector<2x3xf32>
    %cst_26 = arith.constant dense<0.000000e+00> : vector<2xf32>
    %45 = vector.multi_reduction <add>, %44, %cst_26 [1] : vector<2x3xf32> to vector<2xf32>
    %46 = vector.shape_cast %45 : vector<2xf32> to vector<2x1xf32>
    %47 = arith.mulf %30, %31 : vector<2x3xf32>
    %cst_27 = arith.constant dense<0.000000e+00> : vector<2xf32>
    %48 = vector.multi_reduction <add>, %47, %cst_27 [1] : vector<2x3xf32> to vector<2xf32>
    %49 = vector.shape_cast %48 : vector<2xf32> to vector<2x1xf32>
    %cst_28 = arith.constant 1.000000e+00 : f32
    %50 = vector.broadcast %cst_28 : f32 to vector<2x1xf32>
    %51 = arith.subf %34, %50 : vector<2x1xf32>
    %52 = arith.mulf %51, %51 : vector<2x1xf32>
    %cst_29 = arith.constant 1.000000e+00 : f32
    %53 = vector.broadcast %cst_29 : f32 to vector<2x1xf32>
    %54 = arith.subf %37, %53 : vector<2x1xf32>
    %55 = arith.mulf %54, %54 : vector<2x1xf32>
    %56 = arith.addf %52, %55 : vector<2x1xf32>
    %cst_30 = arith.constant 1.000000e+00 : f32
    %57 = vector.broadcast %cst_30 : f32 to vector<2x1xf32>
    %58 = arith.subf %40, %57 : vector<2x1xf32>
    %59 = arith.mulf %58, %58 : vector<2x1xf32>
    %60 = arith.addf %56, %59 : vector<2x1xf32>
    %61 = arith.mulf %43, %43 : vector<2x1xf32>
    %62 = arith.mulf %46, %46 : vector<2x1xf32>
    %63 = arith.addf %61, %62 : vector<2x1xf32>
    %64 = arith.mulf %49, %49 : vector<2x1xf32>
    %65 = arith.addf %63, %64 : vector<2x1xf32>
    %cst_31 = arith.constant 2.000000e+00 : f32
    %66 = vector.broadcast %cst_31 : f32 to vector<2x1xf32>
    %67 = arith.mulf %66, %65 : vector<2x1xf32>
    %68 = arith.addf %60, %67 : vector<2x1xf32>
    %69 = math.sqrt %68 : vector<2x1xf32>
    %cst_32 = arith.constant dense<0.000000e+00> : vector<1xf32>
    %70 = vector.multi_reduction <add>, %69, %cst_32 [0] : vector<2x1xf32> to vector<1xf32>
    %71 = vector.shape_cast %70 : vector<1xf32> to vector<1x1xf32>
    %cst_33 = arith.constant 2.000000e+00 : f32
    %72 = vector.broadcast %cst_33 : f32 to vector<1x1xf32>
    %73 = arith.divf %71, %72 : vector<1x1xf32>
    %c0_34 = arith.constant 0 : index
    %c0_35 = arith.constant 0 : index
    %74 = vector.load %arg9[%c0_34, %c0_35] : memref<1x1xf32, #tpu.memory_space<vmem>>, vector<1x1xf32>
    tpu.vector_store %arg9[%c0_34, %c0_35], %73 {strides = array<i32>} : memref<1x1xf32, #tpu.memory_space<vmem>>, vector<1x1xf32>,
    return
  }
}

</mosaic_0001>

<llo_original>
// kernel: enhanced_stn_forward.2
$region0: #{enhanced_stn_forward.2}
  #allocation0 [shape = 'u32[]', space=smem, size = 0x4, offset = 0x4, fixed_abs, tag = 'smem constant byte address 0x4 - core index']
  #allocation1 [shape = 'u32[144,128]{1,0:T(1,128)}', space=vmem, size = 0x12000, scoped, tag = 'internal scratch']
  %s0 = inlined_call_operand.vmem [shape: f32[2,128,3], index: 0, kind: input, shape index: {}]
  %s1 = inlined_call_operand.vmem [shape: f32[3,64], index: 1, kind: input, shape index: {}]
  %s2 = inlined_call_operand.vmem [shape: f32[1,64], index: 2, kind: input, shape index: {}]
  %s3 = inlined_call_operand.vmem [shape: bf16[64,128], index: 3, kind: input, shape index: {}]
  %s4 = inlined_call_operand.vmem [shape: f32[1,128], index: 4, kind: input, shape index: {}]
  %s5 = inlined_call_operand.hbm [shape: bf16[128,1024], index: 5, kind: input, shape index: {}]
  %s6 = inlined_call_operand.vmem [shape: f32[2,8,128], index: 6, kind: output, shape index: {}]
  %s7 = sld [smem:[#allocation0]]
  $region69: #{enhanced_stn_forward.2} parent=0
    _
  %s9 = ssub.s32 1, %s7
  %s10 = scalar_select 0, %s9, %s7
  $region1: #{enhanced_stn_forward.2} parent=0
    #allocation2 [shape = 'u8[262144]{0}', space=vmem, size = 0x40000, scoped, tag = 'input window, operand 5, single buffered']
    #allocation3 [shape = 's32[2]{0}', space=sflag, size = 0x8, scoped, tag = 'scoped memory for enhanced_stn_forward.2']
    %11 = vsyncpa [#allocation3], 0
    loop: start=0, step=1, limit=4
    $region2: #{enhanced_stn_forward.2} parent=1 // loop_pre_header
      _
    $region3: #{enhanced_stn_forward.2} parent=1 // loop_header
      %s13 = sphi 0, %s17
      %p14 = scmp.ge.s32.totalorder %s13, 4
      %s20 = sphi 0, %s32
      %s21 = sphi 0, %s28
      %s22 = sphi 0, %s20
      %s23 = sphi 0, %s21
      %s24 = sphi 0, %s22
      %s25 = sphi 0, %s23
      %s37 = sphi 0, %s39
      %s40 = sphi 0, %s37
      %s41 = sphi 0, %s40
      %s57 = sphi 0, %s41
      %s61 = sphi 0, %s61
      %s63 = sphi 0, %s61
      %s64 = sphi 0, %s63
      %s78 = sphi 0, %s64
      %s82 = sphi 0, %s82
      %s84 = sphi 0, %s82
      %s85 = sphi 0, %s84
      %s99 = sphi 0, %s85
      %s103 = sphi 0, %s103
      %s105 = sphi 0, %s103
      %s106 = sphi 0, %s105
      %s120 = sphi 0, %s106
      %s124 = sphi 0, %s124
      %s126 = sphi 0, %s124
      %s127 = sphi 0, %s126
      %s141 = sphi 0, %s127
      %s145 = sphi 0, %s145
      %s147 = sphi 0, %s145
      %s148 = sphi 0, %s147
      %s162 = sphi 0, %s148
      %s168 = sphi 0, %s170
      %s171 = sphi 0, %s168
      %s172 = sphi 0, %s171
      %s188 = sphi 0, %s172
    $region4: #{enhanced_stn_forward.2} parent=1 // loop_header_branch
      %16 = sbr.rel (%p14) target = $region8
    $region5: #{enhanced_stn_forward.2} parent=1 // loop_body
      %s18 = ssub.s32 %s13, 1
      %s19 = ssub.s32 %s13, 2
      %s26 = sadd.s32 1, %s21
      %p27 = scmp.ge.s32.totalorder %s26, 1
      %s28 = scalar_select %p27, 0, %s26
      %s29 = sadd.s32 1, %s20
      %s30 = scalar_select %p27, %s29, %s20
      %p31 = scmp.ge.s32.totalorder %s30, 2
      %s32 = scalar_select %p31, 0, %s30
      %s33 = ssub.s32 %s20, %s32
      %s34 = ssub.s32 %s21, %s28
      %s35 = sor.u32 %s33, %s34
      %p36 = scmp.eq.s32.totalorder %s35, 0
      %s38 = sadd.s32 %s37, 1
      %s39 = scalar_select %p36, %s37, %s38
      %p42 = pneg %p36
      %p43 = scmp.eq.s32.totalorder %s13, 1
      %p44 = por %p42, %p43
      %p45 = scmp.ne.s32.totalorder %s37, %s40
      %p46 = scmp.eq.s32.totalorder %s13, 0
      %p47 = por %p45, %p46
      %p48 = scmp.ne.s32.totalorder %s37, %s40
      %p49 = scmp.eq.s32.totalorder %s18, 1
      %p50 = por %p48, %p49
      %p51 = scmp.ne.s32.totalorder %s40, %s41
      %p52 = scmp.eq.s32.totalorder %s18, 0
      %p53 = por %p51, %p52
      %p54 = scmp.ne.s32.totalorder %s40, %s41
      %p55 = scmp.eq.s32.totalorder %s19, 1
      %p56 = por %p54, %p55
      %p58 = scmp.ne.s32.totalorder %s41, %s57
      %p59 = scmp.eq.s32.totalorder %s19, 0
      %p60 = por %p58, %p59
      %s62 = sadd.s32 %s61, 1
      %p65 = scmp.eq.s32.totalorder %s13, 1
      %p66 = scmp.ne.s32.totalorder %s61, %s63
      %p67 = scmp.eq.s32.totalorder %s13, 0
      %p68 = por %p66, %p67
      %p69 = scmp.ne.s32.totalorder %s61, %s63
      %p70 = scmp.eq.s32.totalorder %s18, 1
      %p71 = por %p69, %p70
      %p72 = scmp.ne.s32.totalorder %s63, %s64
      %p73 = scmp.eq.s32.totalorder %s18, 0
      %p74 = por %p72, %p73
      %p75 = scmp.ne.s32.totalorder %s63, %s64
      %p76 = scmp.eq.s32.totalorder %s19, 1
      %p77 = por %p75, %p76
      %p79 = scmp.ne.s32.totalorder %s64, %s78
      %p80 = scmp.eq.s32.totalorder %s19, 0
      %p81 = por %p79, %p80
      %s83 = sadd.s32 %s82, 1
      %p86 = scmp.eq.s32.totalorder %s13, 1
      %p87 = scmp.ne.s32.totalorder %s82, %s84
      %p88 = scmp.eq.s32.totalorder %s13, 0
      %p89 = por %p87, %p88
      %p90 = scmp.ne.s32.totalorder %s82, %s84
      %p91 = scmp.eq.s32.totalorder %s18, 1
      %p92 = por %p90, %p91
      %p93 = scmp.ne.s32.totalorder %s84, %s85
      %p94 = scmp.eq.s32.totalorder %s18, 0
      %p95 = por %p93, %p94
      %p96 = scmp.ne.s32.totalorder %s84, %s85
      %p97 = scmp.eq.s32.totalorder %s19, 1
      %p98 = por %p96, %p97
      %p100 = scmp.ne.s32.totalorder %s85, %s99
      %p101 = scmp.eq.s32.totalorder %s19, 0
      %p102 = por %p100, %p101
      %s104 = sadd.s32 %s103, 1
      %p107 = scmp.eq.s32.totalorder %s13, 1
      %p108 = scmp.ne.s32.totalorder %s103, %s105
      %p109 = scmp.eq.s32.totalorder %s13, 0
      %p110 = por %p108, %p109
      %p111 = scmp.ne.s32.totalorder %s103, %s105
      %p112 = scmp.eq.s32.totalorder %s18, 1
      %p113 = por %p111, %p112
      %p114 = scmp.ne.s32.totalorder %s105, %s106
      %p115 = scmp.eq.s32.totalorder %s18, 0
      %p116 = por %p114, %p115
      %p117 = scmp.ne.s32.totalorder %s105, %s106
      %p118 = scmp.eq.s32.totalorder %s19, 1
      %p119 = por %p117, %p118
      %p121 = scmp.ne.s32.totalorder %s106, %s120
      %p122 = scmp.eq.s32.totalorder %s19, 0
      %p123 = por %p121, %p122
      %s125 = sadd.s32 %s124, 1
      %p128 = scmp.eq.s32.totalorder %s13, 1
      %p129 = scmp.ne.s32.totalorder %s124, %s126
      %p130 = scmp.eq.s32.totalorder %s13, 0
      %p131 = por %p129, %p130
      %p132 = scmp.ne.s32.totalorder %s124, %s126
      %p133 = scmp.eq.s32.totalorder %s18, 1
      %p134 = por %p132, %p133
      %p135 = scmp.ne.s32.totalorder %s126, %s127
      %p136 = scmp.eq.s32.totalorder %s18, 0
      %p137 = por %p135, %p136
      %p138 = scmp.ne.s32.totalorder %s126, %s127
      %p139 = scmp.eq.s32.totalorder %s19, 1
      %p140 = por %p138, %p139
      %p142 = scmp.ne.s32.totalorder %s127, %s141
      %p143 = scmp.eq.s32.totalorder %s19, 0
      %p144 = por %p142, %p143
      %s146 = sadd.s32 %s145, 1
      %p149 = scmp.eq.s32.totalorder %s13, 1
      %p150 = scmp.ne.s32.totalorder %s145, %s147
      %p151 = scmp.eq.s32.totalorder %s13, 0
      %p152 = por %p150, %p151
      %p153 = scmp.ne.s32.totalorder %s145, %s147
      %p154 = scmp.eq.s32.totalorder %s18, 1
      %p155 = por %p153, %p154
      %p156 = scmp.ne.s32.totalorder %s147, %s148
      %p157 = scmp.eq.s32.totalorder %s18, 0
      %p158 = por %p156, %p157
      %p159 = scmp.ne.s32.totalorder %s147, %s148
      %p160 = scmp.eq.s32.totalorder %s19, 1
      %p161 = por %p159, %p160
      %p163 = scmp.ne.s32.totalorder %s148, %s162
      %p164 = scmp.eq.s32.totalorder %s19, 0
      %p165 = por %p163, %p164
      %s166 = ssub.s32 %s20, %s32
      %p167 = scmp.eq.s32.totalorder %s166, 0
      %s169 = sadd.s32 %s168, 1
      %s170 = scalar_select %p167, %s168, %s169
      %p173 = pneg %p167
      %p174 = scmp.eq.s32.totalorder %s13, 1
      %p175 = por %p173, %p174
      %p176 = scmp.ne.s32.totalorder %s168, %s171
      %p177 = scmp.eq.s32.totalorder %s13, 0
      %p178 = por %p176, %p177
      %p179 = scmp.ne.s32.totalorder %s168, %s171
      %p180 = scmp.eq.s32.totalorder %s18, 1
      %p181 = por %p179, %p180
      %p182 = scmp.ne.s32.totalorder %s171, %s172
      %p183 = scmp.eq.s32.totalorder %s18, 0
      %p184 = por %p182, %p183
      %p185 = scmp.ne.s32.totalorder %s171, %s172
      %p186 = scmp.eq.s32.totalorder %s19, 1
      %p187 = por %p185, %p186
      %p189 = scmp.ne.s32.totalorder %s172, %s188
      %p190 = scmp.eq.s32.totalorder %s19, 0
      %p191 = por %p189, %p190
      %p192 = scmp.le.s32.totalorder 1, %s13
      %p193 = scmp.lt.s32.totalorder %s13, 3
      %p194 = pnand %p192, %p193
      %p195 = pneg %p194
      // Predicated region
      $region9: #{enhanced_stn_forward.2} parent=5 // pred_check
        _
      $region10: #{enhanced_stn_forward.2} parent=5 // pred_check_branch
        %197 = sbr.rel (%p194) target = $region12
      $region11: #{enhanced_stn_forward.2} parent=5 // pred_region
        %s198 = ssub.s32 %s13, 1
        // Predicated region
        $region13: #{enhanced_stn_forward.2} parent=11 // pred_check
          %p199 = pneg %p74
        $region14: #{enhanced_stn_forward.2} parent=11 // pred_check_branch
          %201 = sbr.rel (%p199) target = $region16
        $region15: #{enhanced_stn_forward.2} parent=11 // pred_region
          _
        $region16: #{enhanced_stn_forward.2} parent=11 // pred_fallthru
          _
        // Predicated region
        $region17: #{enhanced_stn_forward.2} parent=11 // pred_check
          %p202 = pneg %p95
        $region18: #{enhanced_stn_forward.2} parent=11 // pred_check_branch
          %204 = sbr.rel (%p202) target = $region20
        $region19: #{enhanced_stn_forward.2} parent=11 // pred_region
          _
        $region20: #{enhanced_stn_forward.2} parent=11 // pred_fallthru
          _
        // Predicated region
        $region21: #{enhanced_stn_forward.2} parent=11 // pred_check
          %p205 = pneg %p116
        $region22: #{enhanced_stn_forward.2} parent=11 // pred_check_branch
          %207 = sbr.rel (%p205) target = $region24
        $region23: #{enhanced_stn_forward.2} parent=11 // pred_region
          _
        $region24: #{enhanced_stn_forward.2} parent=11 // pred_fallthru
          _
        // Predicated region
        $region25: #{enhanced_stn_forward.2} parent=11 // pred_check
          %p208 = pneg %p137
        $region26: #{enhanced_stn_forward.2} parent=11 // pred_check_branch
          %210 = sbr.rel (%p208) target = $region28
        $region27: #{enhanced_stn_forward.2} parent=11 // pred_region
          _
        $region28: #{enhanced_stn_forward.2} parent=11 // pred_fallthru
          _
        // Predicated region
        $region29: #{enhanced_stn_forward.2} parent=11 // pred_check
          %p211 = pneg %p158
        $region30: #{enhanced_stn_forward.2} parent=11 // pred_check_branch
          %213 = sbr.rel (%p211) target = $region32
        $region31: #{enhanced_stn_forward.2} parent=11 // pred_region
          %s215 = ssub.s32 8192, 8192
          %216 = vsyncadd [#allocation3], %s215
          %s217 = sshll.u32 [#allocation2], 4
          %s218 = int_to_ptr.vmem [resolvable:$true] %s217
          %223 = dma.hbm_to_vmem [thread:$0]  %s5, 8192, %s218, [#allocation3], 512, 512, 32
        $region32: #{enhanced_stn_forward.2} parent=11 // pred_fallthru
          _
      $region12: #{enhanced_stn_forward.2} parent=5 // pred_fallthru
        _
      %p224 = scmp.lt.s32.totalorder %s13, 2
      // Predicated region
      $region33: #{enhanced_stn_forward.2} parent=5 // pred_check
        %p225 = pneg %p224
      $region34: #{enhanced_stn_forward.2} parent=5 // pred_check_branch
        %227 = sbr.rel (%p225) target = $region36
      $region35: #{enhanced_stn_forward.2} parent=5 // pred_region
        // Predicated region
        $region37: #{enhanced_stn_forward.2} parent=35 // pred_check
          %p228 = pneg %p47
        $region38: #{enhanced_stn_forward.2} parent=35 // pred_check_branch
          %230 = sbr.rel (%p228) target = $region40
        $region39: #{enhanced_stn_forward.2} parent=35 // pred_region
          %s231 = smul.u32 16, %s21
          %p232 = scmp.lt.s32.totalorder %s20, 1
          %s233 = scalar_select %p232, %s20, 1
          %p234 = scmp.lt.s32.totalorder %s231, 15
          %s235 = scalar_select %p234, %s231, 15
          %s236 = smul.addr %s233, 16
          %s237 = sadd.s32 %s235, %s236
          %s238 = smul.addr %s237, 8
          %s239 = scalar_lea.vmem %s0, %s238
          %s240 = smul.u32 16, %s21
        $region40: #{enhanced_stn_forward.2} parent=35 // pred_fallthru
          _
      $region36: #{enhanced_stn_forward.2} parent=5 // pred_fallthru
        _
      %p241 = scmp.le.s32.totalorder 1, %s13
      %p242 = scmp.lt.s32.totalorder %s13, 3
      %p243 = pnand %p241, %p242
      %p244 = pneg %p243
      // Predicated region
      $region41: #{enhanced_stn_forward.2} parent=5 // pred_check
        _
      $region42: #{enhanced_stn_forward.2} parent=5 // pred_check_branch
        %246 = sbr.rel (%p243) target = $region44
      $region43: #{enhanced_stn_forward.2} parent=5 // pred_region
        %s247 = ssub.s32 %s13, 1
        // Predicated region
        $region45: #{enhanced_stn_forward.2} parent=43 // pred_check
          %p248 = pneg %p158
        $region46: #{enhanced_stn_forward.2} parent=43 // pred_check_branch
          %250 = sbr.rel (%p248) target = $region48
        $region47: #{enhanced_stn_forward.2} parent=43 // pred_region
          %251 = dma.done [#allocation3], 8192
        $region48: #{enhanced_stn_forward.2} parent=43 // pred_fallthru
          _
        %s252 = smul.u32 16, %s23
        %p253 = scmp.lt.s32.totalorder %s22, 1
        %s254 = scalar_select %p253, %s22, 1
        %p255 = scmp.lt.s32.totalorder %s252, 15
        %s256 = scalar_select %p255, %s252, 15
        %s257 = smul.addr %s254, 16
        %s258 = sadd.s32 %s256, %s257
        %s259 = smul.addr %s258, 8
        %s260 = scalar_lea.vmem %s0, %s259
        %p261 = pneg %p53
        %p262 = pneg %p50
        %p263 = pneg %p74
        %p264 = pneg %p71
        %p265 = pneg %p95
        %p266 = pneg %p92
        %p267 = pneg %p116
        %p268 = pneg %p113
        %p269 = pneg %p137
        %p270 = pneg %p134
        %p271 = pneg %p158
        %p272 = pneg %p155
        %p273 = pneg %p184
        %p274 = pneg %p181
        %p275 = scmp.lt.s32.totalorder %s22, 1
        %s276 = scalar_select %p275, %s22, 1
        %s277 = smul.addr %s276, 8
        %s278 = scalar_lea.vmem %s6, %s277
        %s279 = smul.u32 16, %s23
        %p280 = scmp.lt.s32.totalorder %s22, 1
        %s281 = scalar_select %p280, %s22, 1
        %p282 = scmp.lt.s32.totalorder %s279, 15
        %s283 = scalar_select %p282, %s279, 15
        %s284 = smul.addr %s281, 16
        %s285 = sadd.s32 %s283, %s284
        %s286 = smul.addr %s285, 8
        %s287 = scalar_lea.vmem %s0, %s286
        %s288 = smul.u32 16, %s23
        %p289 = scmp.lt.s32.totalorder %s22, 1
        %s290 = scalar_select %p289, %s22, 1
        %s291 = smul.addr %s290, 8
        %s292 = scalar_lea.vmem %s6, %s291
        %v294 = vld [vmem:[%s287] sm:$0xff]
        %v295 = vld [vmem:[%s287 + $0x8] sm:$0xff]
        %v296 = vld [vmem:[%s287 + $0x10] sm:$0xff]
        %v297 = vld [vmem:[%s287 + $0x18] sm:$0xff]
        %v298 = vld [vmem:[%s287 + $0x20] sm:$0xff]
        %v299 = vld [vmem:[%s287 + $0x28] sm:$0xff]
        %v300 = vld [vmem:[%s287 + $0x30] sm:$0xff]
        %v301 = vld [vmem:[%s287 + $0x38] sm:$0xff]
        %v302 = vld [vmem:[%s287 + $0x40] sm:$0xff]
        %v303 = vld [vmem:[%s287 + $0x48] sm:$0xff]
        %v304 = vld [vmem:[%s287 + $0x50] sm:$0xff]
        %v305 = vld [vmem:[%s287 + $0x58] sm:$0xff]
        %v306 = vld [vmem:[%s287 + $0x60] sm:$0xff]
        %v307 = vld [vmem:[%s287 + $0x68] sm:$0xff]
        %v308 = vld [vmem:[%s287 + $0x70] sm:$0xff]
        %v309 = vld [vmem:[%s287 + $0x78] sm:$0xff]
        %v310 = vld [vmem:[%s1] sm:$0x7]
        %312 = vset.pattern.permute.xlu0 0
        %313 = vperm.xlu0 %312, %v294
        %v314 = vpop.permute.xlu0 %313
        %317 = vset.pattern.permute.xlu0 0
        %318 = vperm.xlu0 %317, %v295
        %v319 = vpop.permute.xlu0 %318
        %322 = vset.pattern.permute.xlu0 0
        %323 = vperm.xlu0 %322, %v296
        %v324 = vpop.permute.xlu0 %323
        %327 = vset.pattern.permute.xlu0 0
        %328 = vperm.xlu0 %327, %v297
        %v329 = vpop.permute.xlu0 %328
        %332 = vset.pattern.permute.xlu0 0
        %333 = vperm.xlu0 %332, %v298
        %v334 = vpop.permute.xlu0 %333
        %337 = vset.pattern.permute.xlu0 0
        %338 = vperm.xlu0 %337, %v299
        %v339 = vpop.permute.xlu0 %338
        %342 = vset.pattern.permute.xlu0 0
        %343 = vperm.xlu0 %342, %v300
        %v344 = vpop.permute.xlu0 %343
        %347 = vset.pattern.permute.xlu0 0
        %348 = vperm.xlu0 %347, %v301
        %v349 = vpop.permute.xlu0 %348
        %352 = vset.pattern.permute.xlu0 0
        %353 = vperm.xlu0 %352, %v302
        %v354 = vpop.permute.xlu0 %353
        %357 = vset.pattern.permute.xlu0 0
        %358 = vperm.xlu0 %357, %v303
        %v359 = vpop.permute.xlu0 %358
        %362 = vset.pattern.permute.xlu0 0
        %363 = vperm.xlu0 %362, %v304
        %v364 = vpop.permute.xlu0 %363
        %367 = vset.pattern.permute.xlu0 0
        %368 = vperm.xlu0 %367, %v305
        %v369 = vpop.permute.xlu0 %368
        %372 = vset.pattern.permute.xlu0 0
        %373 = vperm.xlu0 %372, %v306
        %v374 = vpop.permute.xlu0 %373
        %377 = vset.pattern.permute.xlu0 0
        %378 = vperm.xlu0 %377, %v307
        %v379 = vpop.permute.xlu0 %378
        %382 = vset.pattern.permute.xlu0 0
        %383 = vperm.xlu0 %382, %v308
        %v384 = vpop.permute.xlu0 %383
        %387 = vset.pattern.permute.xlu0 0
        %388 = vperm.xlu0 %387, %v309
        %v389 = vpop.permute.xlu0 %388
        %v391 = vlaneseq
        %v392 = vshrl.u32 %v391, 7
        %v393 = vsub.s32 0, %v392
        %v394 = vrot.slane %v310, %v393
        %v395 = vmul.f32 %v314, %v394
        %v396 = vmul.f32 %v319, %v394
        %v397 = vmul.f32 %v324, %v394
        %v398 = vmul.f32 %v329, %v394
        %v399 = vmul.f32 %v334, %v394
        %v400 = vmul.f32 %v339, %v394
        %v401 = vmul.f32 %v344, %v394
        %v402 = vmul.f32 %v349, %v394
        %v403 = vmul.f32 %v354, %v394
        %v404 = vmul.f32 %v359, %v394
        %v405 = vmul.f32 %v364, %v394
        %v406 = vmul.f32 %v369, %v394
        %v407 = vmul.f32 %v374, %v394
        %v408 = vmul.f32 %v379, %v394
        %v409 = vmul.f32 %v384, %v394
        %v410 = vmul.f32 %v389, %v394
        %411 = vset.pattern.permute.xlu0 1
        %412 = vperm.xlu0 %411, %v294
        %v413 = vpop.permute.xlu0 %412
        %415 = vset.pattern.permute.xlu0 1
        %416 = vperm.xlu0 %415, %v295
        %v417 = vpop.permute.xlu0 %416
        %419 = vset.pattern.permute.xlu0 1
        %420 = vperm.xlu0 %419, %v296
        %v421 = vpop.permute.xlu0 %420
        %423 = vset.pattern.permute.xlu0 1
        %424 = vperm.xlu0 %423, %v297
        %v425 = vpop.permute.xlu0 %424
        %427 = vset.pattern.permute.xlu0 1
        %428 = vperm.xlu0 %427, %v298
        %v429 = vpop.permute.xlu0 %428
        %431 = vset.pattern.permute.xlu0 1
        %432 = vperm.xlu0 %431, %v299
        %v433 = vpop.permute.xlu0 %432
        %435 = vset.pattern.permute.xlu0 1
        %436 = vperm.xlu0 %435, %v300
        %v437 = vpop.permute.xlu0 %436
        %439 = vset.pattern.permute.xlu0 1
        %440 = vperm.xlu0 %439, %v301
        %v441 = vpop.permute.xlu0 %440
        %443 = vset.pattern.permute.xlu0 1
        %444 = vperm.xlu0 %443, %v302
        %v445 = vpop.permute.xlu0 %444
        %447 = vset.pattern.permute.xlu0 1
        %448 = vperm.xlu0 %447, %v303
        %v449 = vpop.permute.xlu0 %448
        %451 = vset.pattern.permute.xlu0 1
        %452 = vperm.xlu0 %451, %v304
        %v453 = vpop.permute.xlu0 %452
        %455 = vset.pattern.permute.xlu0 1
        %456 = vperm.xlu0 %455, %v305
        %v457 = vpop.permute.xlu0 %456
        %459 = vset.pattern.permute.xlu0 1
        %460 = vperm.xlu0 %459, %v306
        %v461 = vpop.permute.xlu0 %460
        %463 = vset.pattern.permute.xlu0 1
        %464 = vperm.xlu0 %463, %v307
        %v465 = vpop.permute.xlu0 %464
        %467 = vset.pattern.permute.xlu0 1
        %468 = vperm.xlu0 %467, %v308
        %v469 = vpop.permute.xlu0 %468
        %471 = vset.pattern.permute.xlu0 1
        %472 = vperm.xlu0 %471, %v309
        %v473 = vpop.permute.xlu0 %472
        %v475 = vlaneseq
        %v476 = vshrl.u32 %v475, 7
        %v477 = vsub.s32 1, %v476
        %v478 = vrot.slane %v310, %v477
        %v479 = vmul.f32 %v413, %v478
        %v480 = vmul.f32 %v417, %v478
        %v481 = vmul.f32 %v421, %v478
        %v482 = vmul.f32 %v425, %v478
        %v483 = vmul.f32 %v429, %v478
        %v484 = vmul.f32 %v433, %v478
        %v485 = vmul.f32 %v437, %v478
        %v486 = vmul.f32 %v441, %v478
        %v487 = vmul.f32 %v445, %v478
        %v488 = vmul.f32 %v449, %v478
        %v489 = vmul.f32 %v453, %v478
        %v490 = vmul.f32 %v457, %v478
        %v491 = vmul.f32 %v461, %v478
        %v492 = vmul.f32 %v465, %v478
        %v493 = vmul.f32 %v469, %v478
        %v494 = vmul.f32 %v473, %v478
        %v495 = vadd.f32 %v395, %v479
        %v496 = vadd.f32 %v396, %v480
        %v497 = vadd.f32 %v397, %v481
        %v498 = vadd.f32 %v398, %v482
        %v499 = vadd.f32 %v399, %v483
        %v500 = vadd.f32 %v400, %v484
        %v501 = vadd.f32 %v401, %v485
        %v502 = vadd.f32 %v402, %v486
        %v503 = vadd.f32 %v403, %v487
        %v504 = vadd.f32 %v404, %v488
        %v505 = vadd.f32 %v405, %v489
        %v506 = vadd.f32 %v406, %v490
        %v507 = vadd.f32 %v407, %v491
        %v508 = vadd.f32 %v408, %v492
        %v509 = vadd.f32 %v409, %v493
        %v510 = vadd.f32 %v410, %v494
        %511 = vset.pattern.permute.xlu0 2
        %512 = vperm.xlu0 %511, %v294
        %v513 = vpop.permute.xlu0 %512
        %515 = vset.pattern.permute.xlu0 2
        %516 = vperm.xlu0 %515, %v295
        %v517 = vpop.permute.xlu0 %516
        %519 = vset.pattern.permute.xlu0 2
        %520 = vperm.xlu0 %519, %v296
        %v521 = vpop.permute.xlu0 %520
        %523 = vset.pattern.permute.xlu0 2
        %524 = vperm.xlu0 %523, %v297
        %v525 = vpop.permute.xlu0 %524
        %527 = vset.pattern.permute.xlu0 2
        %528 = vperm.xlu0 %527, %v298
        %v529 = vpop.permute.xlu0 %528
        %531 = vset.pattern.permute.xlu0 2
        %532 = vperm.xlu0 %531, %v299
        %v533 = vpop.permute.xlu0 %532
        %535 = vset.pattern.permute.xlu0 2
        %536 = vperm.xlu0 %535, %v300
        %v537 = vpop.permute.xlu0 %536
        %539 = vset.pattern.permute.xlu0 2
        %540 = vperm.xlu0 %539, %v301
        %v541 = vpop.permute.xlu0 %540
        %543 = vset.pattern.permute.xlu0 2
        %544 = vperm.xlu0 %543, %v302
        %v545 = vpop.permute.xlu0 %544
        %547 = vset.pattern.permute.xlu0 2
        %548 = vperm.xlu0 %547, %v303
        %v549 = vpop.permute.xlu0 %548
        %551 = vset.pattern.permute.xlu0 2
        %552 = vperm.xlu0 %551, %v304
        %v553 = vpop.permute.xlu0 %552
        %555 = vset.pattern.permute.xlu0 2
        %556 = vperm.xlu0 %555, %v305
        %v557 = vpop.permute.xlu0 %556
        %559 = vset.pattern.permute.xlu0 2
        %560 = vperm.xlu0 %559, %v306
        %v561 = vpop.permute.xlu0 %560
        %563 = vset.pattern.permute.xlu0 2
        %564 = vperm.xlu0 %563, %v307
        %v565 = vpop.permute.xlu0 %564
        %567 = vset.pattern.permute.xlu0 2
        %568 = vperm.xlu0 %567, %v308
        %v569 = vpop.permute.xlu0 %568
        %571 = vset.pattern.permute.xlu0 2
        %572 = vperm.xlu0 %571, %v309
        %v573 = vpop.permute.xlu0 %572
        %v575 = vlaneseq
        %v576 = vshrl.u32 %v575, 7
        %v577 = vsub.s32 2, %v576
        %v578 = vrot.slane %v310, %v577
        %v579 = vmul.f32 %v513, %v578
        %v580 = vmul.f32 %v517, %v578
        %v581 = vmul.f32 %v521, %v578
        %v582 = vmul.f32 %v525, %v578
        %v583 = vmul.f32 %v529, %v578
        %v584 = vmul.f32 %v533, %v578
        %v585 = vmul.f32 %v537, %v578
        %v586 = vmul.f32 %v541, %v578
        %v587 = vmul.f32 %v545, %v578
        %v588 = vmul.f32 %v549, %v578
        %v589 = vmul.f32 %v553, %v578
        %v590 = vmul.f32 %v557, %v578
        %v591 = vmul.f32 %v561, %v578
        %v592 = vmul.f32 %v565, %v578
        %v593 = vmul.f32 %v569, %v578
        %v594 = vmul.f32 %v573, %v578
        %v595 = vadd.f32 %v495, %v579
        %v596 = vadd.f32 %v496, %v580
        %v597 = vadd.f32 %v497, %v581
        %v598 = vadd.f32 %v498, %v582
        %v599 = vadd.f32 %v499, %v583
        %v600 = vadd.f32 %v500, %v584
        %v601 = vadd.f32 %v501, %v585
        %v602 = vadd.f32 %v502, %v586
        %v603 = vadd.f32 %v503, %v587
        %v604 = vadd.f32 %v504, %v588
        %v605 = vadd.f32 %v505, %v589
        %v606 = vadd.f32 %v506, %v590
        %v607 = vadd.f32 %v507, %v591
        %v608 = vadd.f32 %v508, %v592
        %v609 = vadd.f32 %v509, %v593
        %v610 = vadd.f32 %v510, %v594
        %v611 = vld [vmem:[%s2] sm:$0x1]
        %v613 = vlaneseq
        %v614 = vshrl.u32 %v613, 7
        %v615 = vsub.s32 0, %v614
        %v616 = vrot.slane %v611, %v615
        %v618 = vadd.f32 %v595, %v616
        %v619 = vadd.f32 %v596, %v616
        %v620 = vadd.f32 %v597, %v616
        %v621 = vadd.f32 %v598, %v616
        %v622 = vadd.f32 %v599, %v616
        %v623 = vadd.f32 %v600, %v616
        %v624 = vadd.f32 %v601, %v616
        %v625 = vadd.f32 %v602, %v616
        %v626 = vadd.f32 %v603, %v616
        %v627 = vadd.f32 %v604, %v616
        %v628 = vadd.f32 %v605, %v616
        %v629 = vadd.f32 %v606, %v616
        %v630 = vadd.f32 %v607, %v616
        %v631 = vadd.f32 %v608, %v616
        %v632 = vadd.f32 %v609, %v616
        %v633 = vadd.f32 %v610, %v616
        %v634 = vmax.f32 %v618, 0.0
        %v635 = vmax.f32 %v619, 0.0
        %v636 = vmax.f32 %v620, 0.0
        %v637 = vmax.f32 %v621, 0.0
        %v638 = vmax.f32 %v622, 0.0
        %v639 = vmax.f32 %v623, 0.0
        %v640 = vmax.f32 %v624, 0.0
        %v641 = vmax.f32 %v625, 0.0
        %v642 = vmax.f32 %v626, 0.0
        %v643 = vmax.f32 %v627, 0.0
        %v644 = vmax.f32 %v628, 0.0
        %v645 = vmax.f32 %v629, 0.0
        %v646 = vmax.f32 %v630, 0.0
        %v647 = vmax.f32 %v631, 0.0
        %v648 = vmax.f32 %v632, 0.0
        %v649 = vmax.f32 %v633, 0.0
        %v650 = vpack.c.bf16 %v635, %v634
        %v651 = vpack.c.bf16 %v637, %v636
        %v652 = vpack.c.bf16 %v639, %v638
        %v653 = vpack.c.bf16 %v641, %v640
        %v654 = vpack.c.bf16 %v643, %v642
        %v655 = vpack.c.bf16 %v645, %v644
        %v656 = vpack.c.bf16 %v647, %v646
        %v657 = vpack.c.bf16 %v649, %v648
        %v658 = vld [vmem:[%s3] sm:$0xf]
        %v659 = vld [vmem:[%s3 + $0x4] sm:$0xf]
        %v660 = vld [vmem:[%s3 + $0x8] sm:$0xf]
        %v661 = vld [vmem:[%s3 + $0xc] sm:$0xf]
        %v662 = vld [vmem:[%s3 + $0x10] sm:$0xf]
        %v663 = vld [vmem:[%s3 + $0x14] sm:$0xf]
        %v664 = vld [vmem:[%s3 + $0x18] sm:$0xf]
        %v665 = vld [vmem:[%s3 + $0x1c] sm:$0xf]
        %v666 = vld [vmem:[%s4] sm:$0x1]
        %v668 = vlaneseq
        %v669 = vshrl.u32 %v668, 7
        %v670 = vsub.s32 0, %v669
        %v671 = vrot.slane %v666, %v670
        %v681 = vunpack.c.l.b16 %v658
        %v682 = vunpack.c.l.b16 %v659
        %v683 = vunpack.c.l.b16 %v660
        %v684 = vunpack.c.l.b16 %v661
        %v685 = vunpack.c.l.b16 %v662
        %v686 = vunpack.c.l.b16 %v663
        %v687 = vunpack.c.l.b16 %v664
        %v688 = vunpack.c.l.b16 %v665
        %v689 = vpack.c.b16 %v682, %v681
        %v690 = vpack.c.b16 %v684, %v683
        %v691 = vpack.c.b16 %v686, %v685
        %v692 = vpack.c.b16 %v688, %v687
        %vm697 = vcmask 523264
        %v699 = vsel %vm697, %v650, 0
        %v702 = vsel %vm697, %v651, 0
        %v705 = vsel %vm697, %v652, 0
        %v708 = vsel %vm697, %v653, 0
        %v711 = vsel %vm697, %v654, 0
        %v714 = vsel %vm697, %v655, 0
        %v717 = vsel %vm697, %v656, 0
        %v720 = vsel %vm697, %v657, 0
        %722 = vmatprep.subr.bf16.mxu0 0
        %723 = vmatpush1.bf16.msra.mxu0 %v689
        %724 = vmatprep.subr.bf16.mxu0 0
        %725 = vmatpush1.bf16.msra.mxu0 %v690
        %726 = vmatprep.subr.bf16.mxu0 0
        %727 = vmatpush1.bf16.msra.mxu0 %v691
        %728 = vmatprep.subr.bf16.mxu0 0
        %729 = vmatpush1.bf16.msra.mxu0 %v692
        %730 = vmatprep.subr.bf16.mxu0 0
        %731 = vmatpush1.bf16.msra.mxu0 0
        %732 = vmatprep.subr.bf16.mxu0 0
        %733 = vmatpush1.bf16.msra.mxu0 0
        %734 = vmatprep.subr.bf16.mxu0 0
        %735 = vmatpush1.bf16.msra.mxu0 0
        %736 = vmatprep.subr.bf16.mxu0 0
        %737 = vmatpush1.bf16.msra.mxu0 0
        %738 = vmatprep.subr.bf16.mxu0 0
        %739 = vmatpush1.bf16.msra.mxu0 0
        %740 = vmatprep.subr.bf16.mxu0 0
        %741 = vmatpush1.bf16.msra.mxu0 0
        %742 = vmatprep.subr.bf16.mxu0 0
        %743 = vmatpush1.bf16.msra.mxu0 0
        %744 = vmatprep.subr.bf16.mxu0 0
        %745 = vmatpush1.bf16.msra.mxu0 0
        %746 = vmatprep.subr.bf16.mxu0 0
        %747 = vmatpush1.bf16.msra.mxu0 0
        %748 = vmatprep.subr.bf16.mxu0 0
        %749 = vmatpush1.bf16.msra.mxu0 0
        %750 = vmatprep.subr.bf16.mxu0 0
        %751 = vmatpush1.bf16.msra.mxu0 0
        %752 = vmatprep.subr.bf16.mxu0 0
        %753 = vmatpush1.bf16.msra.mxu0 0
        %754 = vmatprep.mubr.bf16.mxu0 0
        %755 = vmatmul.mubr.bf16.gmra.mrb[0].mxu0 %v699
        %v756 = vpop.f32.mrb[0].mxu0
        %v757 = vadd.f32 %v671, %v756
        %v758 = vpop.f32.mrb[0].mxu0
        %v759 = vpop.f32.mrb[0].mxu0
        %v760 = vadd.f32 %v671, %v759
        %v761 = vpop.f32.mrb[0].mxu0
        %762 = vmatprep.mubr.bf16.mxu0 0
        %763 = vmatmul.mubr.bf16.gmra.mrb[0].mxu0 %v702
        %v764 = vpop.f32.mrb[0].mxu0
        %v765 = vadd.f32 %v671, %v764
        %v766 = vpop.f32.mrb[0].mxu0
        %v767 = vpop.f32.mrb[0].mxu0
        %v768 = vadd.f32 %v671, %v767
        %v769 = vpop.f32.mrb[0].mxu0
        %770 = vmatprep.mubr.bf16.mxu0 0
        %771 = vmatmul.mubr.bf16.gmra.mrb[0].mxu0 %v705
        %v772 = vpop.f32.mrb[0].mxu0
        %v773 = vadd.f32 %v671, %v772
        %v774 = vpop.f32.mrb[0].mxu0
        %v775 = vpop.f32.mrb[0].mxu0
        %v776 = vadd.f32 %v671, %v775
        %v777 = vpop.f32.mrb[0].mxu0
        %778 = vmatprep.mubr.bf16.mxu0 0
        %779 = vmatmul.mubr.bf16.gmra.mrb[0].mxu0 %v708
        %v780 = vpop.f32.mrb[0].mxu0
        %v781 = vadd.f32 %v671, %v780
        %v782 = vpop.f32.mrb[0].mxu0
        %v783 = vpop.f32.mrb[0].mxu0
        %v784 = vadd.f32 %v671, %v783
        %v785 = vpop.f32.mrb[0].mxu0
        %786 = vmatprep.mubr.bf16.mxu0 0
        %787 = vmatmul.mubr.bf16.gmra.mrb[0].mxu0 %v711
        %v788 = vpop.f32.mrb[0].mxu0
        %v789 = vadd.f32 %v671, %v788
        %v790 = vpop.f32.mrb[0].mxu0
        %v791 = vpop.f32.mrb[0].mxu0
        %v792 = vadd.f32 %v671, %v791
        %v793 = vpop.f32.mrb[0].mxu0
        %794 = vmatprep.mubr.bf16.mxu0 0
        %795 = vmatmul.mubr.bf16.gmra.mrb[0].mxu0 %v714
        %v796 = vpop.f32.mrb[0].mxu0
        %v797 = vadd.f32 %v671, %v796
        %v798 = vpop.f32.mrb[0].mxu0
        %v799 = vpop.f32.mrb[0].mxu0
        %v800 = vadd.f32 %v671, %v799
        %v801 = vpop.f32.mrb[0].mxu0
        %802 = vmatprep.mubr.bf16.mxu0 0
        %803 = vmatmul.mubr.bf16.gmra.mrb[0].mxu0 %v717
        %v804 = vpop.f32.mrb[0].mxu0
        %v805 = vadd.f32 %v671, %v804
        %v806 = vpop.f32.mrb[0].mxu0
        %v807 = vpop.f32.mrb[0].mxu0
        %v808 = vadd.f32 %v671, %v807
        %v809 = vpop.f32.mrb[0].mxu0
        %810 = vmatprep.mubr.bf16.mxu0 0
        %811 = vmatmul.mubr.bf16.gmra.mrb[0].mxu0 %v720
        %v812 = vpop.f32.mrb[0].mxu0
        %v813 = vadd.f32 %v671, %v812
        %v814 = vpop.f32.mrb[0].mxu0
        %v815 = vpop.f32.mrb[0].mxu0
        %v816 = vadd.f32 %v671, %v815
        %v817 = vpop.f32.mrb[0].mxu0
        %818 = vdwg.mxu0
        %v819 = vmax.f32 %v757, 0.0
        %v820 = vmax.f32 %v760, 0.0
        %v821 = vmax.f32 %v765, 0.0
        %v822 = vmax.f32 %v768, 0.0
        %v823 = vmax.f32 %v773, 0.0
        %v824 = vmax.f32 %v776, 0.0
        %v825 = vmax.f32 %v781, 0.0
        %v826 = vmax.f32 %v784, 0.0
        %v827 = vmax.f32 %v789, 0.0
        %v828 = vmax.f32 %v792, 0.0
        %v829 = vmax.f32 %v797, 0.0
        %v830 = vmax.f32 %v800, 0.0
        %v831 = vmax.f32 %v805, 0.0
        %v832 = vmax.f32 %v808, 0.0
        %v833 = vmax.f32 %v813, 0.0
        %v834 = vmax.f32 %v816, 0.0
        %v835 = vpack.c.bf16 %v820, %v819
        %v836 = vpack.c.bf16 %v822, %v821
        %v837 = vpack.c.bf16 %v824, %v823
        %v838 = vpack.c.bf16 %v826, %v825
        %v839 = vpack.c.bf16 %v828, %v827
        %v840 = vpack.c.bf16 %v830, %v829
        %v841 = vpack.c.bf16 %v832, %v831
        %v842 = vpack.c.bf16 %v834, %v833
        %v843 = vld [vmem:[#allocation2] sm:$0xff]
        %v844 = vld [vmem:[#allocation2 + $0x8] sm:$0xff]
        %v845 = vld [vmem:[#allocation2 + $0x10] sm:$0xff]
        %v846 = vld [vmem:[#allocation2 + $0x18] sm:$0xff]
        %v847 = vld [vmem:[#allocation2 + $0x20] sm:$0xff]
        %v848 = vld [vmem:[#allocation2 + $0x28] sm:$0xff]
        %v849 = vld [vmem:[#allocation2 + $0x30] sm:$0xff]
        %v850 = vld [vmem:[#allocation2 + $0x38] sm:$0xff]
        %v851 = vld [vmem:[#allocation2 + $0x40] sm:$0xff]
        %v852 = vld [vmem:[#allocation2 + $0x48] sm:$0xff]
        %v853 = vld [vmem:[#allocation2 + $0x50] sm:$0xff]
        %v854 = vld [vmem:[#allocation2 + $0x58] sm:$0xff]
        %v855 = vld [vmem:[#allocation2 + $0x60] sm:$0xff]
        %v856 = vld [vmem:[#allocation2 + $0x68] sm:$0xff]
        %v857 = vld [vmem:[#allocation2 + $0x70] sm:$0xff]
        %v858 = vld [vmem:[#allocation2 + $0x78] sm:$0xff]
        %v859 = vld [vmem:[#allocation2 + $0x80] sm:$0xff]
        %v860 = vld [vmem:[#allocation2 + $0x88] sm:$0xff]
        %v861 = vld [vmem:[#allocation2 + $0x90] sm:$0xff]
        %v862 = vld [vmem:[#allocation2 + $0x98] sm:$0xff]
        %v863 = vld [vmem:[#allocation2 + $0xa0] sm:$0xff]
        %v864 = vld [vmem:[#allocation2 + $0xa8] sm:$0xff]
        %v865 = vld [vmem:[#allocation2 + $0xb0] sm:$0xff]
        %v866 = vld [vmem:[#allocation2 + $0xb8] sm:$0xff]
        %v867 = vld [vmem:[#allocation2 + $0xc0] sm:$0xff]
        %v868 = vld [vmem:[#allocation2 + $0xc8] sm:$0xff]
        %v869 = vld [vmem:[#allocation2 + $0xd0] sm:$0xff]
        %v870 = vld [vmem:[#allocation2 + $0xd8] sm:$0xff]
        %v871 = vld [vmem:[#allocation2 + $0xe0] sm:$0xff]
        %v872 = vld [vmem:[#allocation2 + $0xe8] sm:$0xff]
        %v873 = vld [vmem:[#allocation2 + $0xf0] sm:$0xff]
        %v874 = vld [vmem:[#allocation2 + $0xf8] sm:$0xff]
        %v875 = vld [vmem:[#allocation2 + $0x100] sm:$0xff]
        %v876 = vld [vmem:[#allocation2 + $0x108] sm:$0xff]
        %v877 = vld [vmem:[#allocation2 + $0x110] sm:$0xff]
        %v878 = vld [vmem:[#allocation2 + $0x118] sm:$0xff]
        %v879 = vld [vmem:[#allocation2 + $0x120] sm:$0xff]
        %v880 = vld [vmem:[#allocation2 + $0x128] sm:$0xff]
        %v881 = vld [vmem:[#allocation2 + $0x130] sm:$0xff]
        %v882 = vld [vmem:[#allocation2 + $0x138] sm:$0xff]
        %v883 = vld [vmem:[#allocation2 + $0x140] sm:$0xff]
        %v884 = vld [vmem:[#allocation2 + $0x148] sm:$0xff]
        %v885 = vld [vmem:[#allocation2 + $0x150] sm:$0xff]
        %v886 = vld [vmem:[#allocation2 + $0x158] sm:$0xff]
        %v887 = vld [vmem:[#allocation2 + $0x160] sm:$0xff]
        %v888 = vld [vmem:[#allocation2 + $0x168] sm:$0xff]
        %v889 = vld [vmem:[#allocation2 + $0x170] sm:$0xff]
        %v890 = vld [vmem:[#allocation2 + $0x178] sm:$0xff]
        %v891 = vld [vmem:[#allocation2 + $0x180] sm:$0xff]
        %v892 = vld [vmem:[#allocation2 + $0x188] sm:$0xff]
        %v893 = vld [vmem:[#allocation2 + $0x190] sm:$0xff]
        %v894 = vld [vmem:[#allocation2 + $0x198] sm:$0xff]
        %v895 = vld [vmem:[#allocation2 + $0x1a0] sm:$0xff]
        %v896 = vld [vmem:[#allocation2 + $0x1a8] sm:$0xff]
        %v897 = vld [vmem:[#allocation2 + $0x1b0] sm:$0xff]
        %v898 = vld [vmem:[#allocation2 + $0x1b8] sm:$0xff]
        %v899 = vld [vmem:[#allocation2 + $0x1c0] sm:$0xff]
        %v900 = vld [vmem:[#allocation2 + $0x1c8] sm:$0xff]
        %v901 = vld [vmem:[#allocation2 + $0x1d0] sm:$0xff]
        %v902 = vld [vmem:[#allocation2 + $0x1d8] sm:$0xff]
        %v903 = vld [vmem:[#allocation2 + $0x1e0] sm:$0xff]
        %v904 = vld [vmem:[#allocation2 + $0x1e8] sm:$0xff]
        %v905 = vld [vmem:[#allocation2 + $0x1f0] sm:$0xff]
        %v906 = vld [vmem:[#allocation2 + $0x1f8] sm:$0xff]
        %v971 = vunpack.c.l.b16 %v843
        %v972 = vunpack.c.h.b16 %v843
        %v973 = vunpack.c.l.b16 %v844
        %v974 = vunpack.c.h.b16 %v844
        %v975 = vunpack.c.l.b16 %v845
        %v976 = vunpack.c.h.b16 %v845
        %v977 = vunpack.c.l.b16 %v846
        %v978 = vunpack.c.h.b16 %v846
        %v979 = vunpack.c.l.b16 %v847
        %v980 = vunpack.c.h.b16 %v847
        %v981 = vunpack.c.l.b16 %v848
        %v982 = vunpack.c.h.b16 %v848
        %v983 = vunpack.c.l.b16 %v849
        %v984 = vunpack.c.h.b16 %v849
        %v985 = vunpack.c.l.b16 %v850
        %v986 = vunpack.c.h.b16 %v850
        %v987 = vunpack.c.l.b16 %v851
        %v988 = vunpack.c.h.b16 %v851
        %v989 = vunpack.c.l.b16 %v852
        %v990 = vunpack.c.h.b16 %v852
        %v991 = vunpack.c.l.b16 %v853
        %v992 = vunpack.c.h.b16 %v853
        %v993 = vunpack.c.l.b16 %v854
        %v994 = vunpack.c.h.b16 %v854
        %v995 = vunpack.c.l.b16 %v855
        %v996 = vunpack.c.h.b16 %v855
        %v997 = vunpack.c.l.b16 %v856
        %v998 = vunpack.c.h.b16 %v856
        %v999 = vunpack.c.l.b16 %v857
        %v1000 = vunpack.c.h.b16 %v857
        %v1001 = vunpack.c.l.b16 %v858
        %v1002 = vunpack.c.h.b16 %v858
        %v1003 = vunpack.c.l.b16 %v859
        %v1004 = vunpack.c.h.b16 %v859
        %v1005 = vunpack.c.l.b16 %v860
        %v1006 = vunpack.c.h.b16 %v860
        %v1007 = vunpack.c.l.b16 %v861
        %v1008 = vunpack.c.h.b16 %v861
        %v1009 = vunpack.c.l.b16 %v862
        %v1010 = vunpack.c.h.b16 %v862
        %v1011 = vunpack.c.l.b16 %v863
        %v1012 = vunpack.c.h.b16 %v863
        %v1013 = vunpack.c.l.b16 %v864
        %v1014 = vunpack.c.h.b16 %v864
        %v1015 = vunpack.c.l.b16 %v865
        %v1016 = vunpack.c.h.b16 %v865
        %v1017 = vunpack.c.l.b16 %v866
        %v1018 = vunpack.c.h.b16 %v866
        %v1019 = vunpack.c.l.b16 %v867
        %v1020 = vunpack.c.h.b16 %v867
        %v1021 = vunpack.c.l.b16 %v868
        %v1022 = vunpack.c.h.b16 %v868
        %v1023 = vunpack.c.l.b16 %v869
        %v1024 = vunpack.c.h.b16 %v869
        %v1025 = vunpack.c.l.b16 %v870
        %v1026 = vunpack.c.h.b16 %v870
        %v1027 = vunpack.c.l.b16 %v871
        %v1028 = vunpack.c.h.b16 %v871
        %v1029 = vunpack.c.l.b16 %v872
        %v1030 = vunpack.c.h.b16 %v872
        %v1031 = vunpack.c.l.b16 %v873
        %v1032 = vunpack.c.h.b16 %v873
        %v1033 = vunpack.c.l.b16 %v874
        %v1034 = vunpack.c.h.b16 %v874
        %v1035 = vunpack.c.l.b16 %v875
        %v1036 = vunpack.c.h.b16 %v875
        %v1037 = vunpack.c.l.b16 %v876
        %v1038 = vunpack.c.h.b16 %v876
        %v1039 = vunpack.c.l.b16 %v877
        %v1040 = vunpack.c.h.b16 %v877
        %v1041 = vunpack.c.l.b16 %v878
        %v1042 = vunpack.c.h.b16 %v878
        %v1043 = vunpack.c.l.b16 %v879
        %v1044 = vunpack.c.h.b16 %v879
        %v1045 = vunpack.c.l.b16 %v880
        %v1046 = vunpack.c.h.b16 %v880
        %v1047 = vunpack.c.l.b16 %v881
        %v1048 = vunpack.c.h.b16 %v881
        %v1049 = vunpack.c.l.b16 %v882
        %v1050 = vunpack.c.h.b16 %v882
        %v1051 = vunpack.c.l.b16 %v883
        %v1052 = vunpack.c.h.b16 %v883
        %v1053 = vunpack.c.l.b16 %v884
        %v1054 = vunpack.c.h.b16 %v884
        %v1055 = vunpack.c.l.b16 %v885
        %v1056 = vunpack.c.h.b16 %v885
        %v1057 = vunpack.c.l.b16 %v886
        %v1058 = vunpack.c.h.b16 %v886
        %v1059 = vunpack.c.l.b16 %v887
        %v1060 = vunpack.c.h.b16 %v887
        %v1061 = vunpack.c.l.b16 %v888
        %v1062 = vunpack.c.h.b16 %v888
        %v1063 = vunpack.c.l.b16 %v889
        %v1064 = vunpack.c.h.b16 %v889
        %v1065 = vunpack.c.l.b16 %v890
        %v1066 = vunpack.c.h.b16 %v890
        %v1067 = vunpack.c.l.b16 %v891
        %v1068 = vunpack.c.h.b16 %v891
        %v1069 = vunpack.c.l.b16 %v892
        %v1070 = vunpack.c.h.b16 %v892
        %v1071 = vunpack.c.l.b16 %v893
        %v1072 = vunpack.c.h.b16 %v893
        %v1073 = vunpack.c.l.b16 %v894
        %v1074 = vunpack.c.h.b16 %v894
        %v1075 = vunpack.c.l.b16 %v895
        %v1076 = vunpack.c.h.b16 %v895
        %v1077 = vunpack.c.l.b16 %v896
        %v1078 = vunpack.c.h.b16 %v896
        %v1079 = vunpack.c.l.b16 %v897
        %v1080 = vunpack.c.h.b16 %v897
        %v1081 = vunpack.c.l.b16 %v898
        %v1082 = vunpack.c.h.b16 %v898
        %v1083 = vunpack.c.l.b16 %v899
        %v1084 = vunpack.c.h.b16 %v899
        %v1085 = vunpack.c.l.b16 %v900
        %v1086 = vunpack.c.h.b16 %v900
        %v1087 = vunpack.c.l.b16 %v901
        %v1088 = vunpack.c.h.b16 %v901
        %v1089 = vunpack.c.l.b16 %v902
        %v1090 = vunpack.c.h.b16 %v902
        %v1091 = vunpack.c.l.b16 %v903
        %v1092 = vunpack.c.h.b16 %v903
        %v1093 = vunpack.c.l.b16 %v904
        %v1094 = vunpack.c.h.b16 %v904
        %v1095 = vunpack.c.l.b16 %v905
        %v1096 = vunpack.c.h.b16 %v905
        %v1097 = vunpack.c.l.b16 %v906
        %v1098 = vunpack.c.h.b16 %v906
        %v1099 = vpack.c.b16 %v979, %v971
        %v1100 = vpack.c.b16 %v980, %v972
        %v1101 = vpack.c.b16 %v981, %v973
        %v1102 = vpack.c.b16 %v982, %v974
        %v1103 = vpack.c.b16 %v983, %v975
        %v1104 = vpack.c.b16 %v984, %v976
        %v1105 = vpack.c.b16 %v985, %v977
        %v1106 = vpack.c.b16 %v986, %v978
        %v1107 = vpack.c.b16 %v995, %v987
        %v1108 = vpack.c.b16 %v996, %v988
        %v1109 = vpack.c.b16 %v997, %v989
        %v1110 = vpack.c.b16 %v998, %v990
        %v1111 = vpack.c.b16 %v999, %v991
        %v1112 = vpack.c.b16 %v1000, %v992
        %v1113 = vpack.c.b16 %v1001, %v993
        %v1114 = vpack.c.b16 %v1002, %v994
        %v1115 = vpack.c.b16 %v1011, %v1003
        %v1116 = vpack.c.b16 %v1012, %v1004
        %v1117 = vpack.c.b16 %v1013, %v1005
        %v1118 = vpack.c.b16 %v1014, %v1006
        %v1119 = vpack.c.b16 %v1015, %v1007
        %v1120 = vpack.c.b16 %v1016, %v1008
        %v1121 = vpack.c.b16 %v1017, %v1009
        %v1122 = vpack.c.b16 %v1018, %v1010
        %v1123 = vpack.c.b16 %v1027, %v1019
        %v1124 = vpack.c.b16 %v1028, %v1020
        %v1125 = vpack.c.b16 %v1029, %v1021
        %v1126 = vpack.c.b16 %v1030, %v1022
        %v1127 = vpack.c.b16 %v1031, %v1023
        %v1128 = vpack.c.b16 %v1032, %v1024
        %v1129 = vpack.c.b16 %v1033, %v1025
        %v1130 = vpack.c.b16 %v1034, %v1026
        %v1131 = vpack.c.b16 %v1043, %v1035
        %v1132 = vpack.c.b16 %v1044, %v1036
        %v1133 = vpack.c.b16 %v1045, %v1037
        %v1134 = vpack.c.b16 %v1046, %v1038
        %v1135 = vpack.c.b16 %v1047, %v1039
        %v1136 = vpack.c.b16 %v1048, %v1040
        %v1137 = vpack.c.b16 %v1049, %v1041
        %v1138 = vpack.c.b16 %v1050, %v1042
        %v1139 = vpack.c.b16 %v1059, %v1051
        %v1140 = vpack.c.b16 %v1060, %v1052
        %v1141 = vpack.c.b16 %v1061, %v1053
        %v1142 = vpack.c.b16 %v1062, %v1054
        %v1143 = vpack.c.b16 %v1063, %v1055
        %v1144 = vpack.c.b16 %v1064, %v1056
        %v1145 = vpack.c.b16 %v1065, %v1057
        %v1146 = vpack.c.b16 %v1066, %v1058
        %v1147 = vpack.c.b16 %v1075, %v1067
        %v1148 = vpack.c.b16 %v1076, %v1068
        %v1149 = vpack.c.b16 %v1077, %v1069
        %v1150 = vpack.c.b16 %v1078, %v1070
        %v1151 = vpack.c.b16 %v1079, %v1071
        %v1152 = vpack.c.b16 %v1080, %v1072
        %v1153 = vpack.c.b16 %v1081, %v1073
        %v1154 = vpack.c.b16 %v1082, %v1074
        %v1155 = vpack.c.b16 %v1091, %v1083
        %v1156 = vpack.c.b16 %v1092, %v1084
        %v1157 = vpack.c.b16 %v1093, %v1085
        %v1158 = vpack.c.b16 %v1094, %v1086
        %v1159 = vpack.c.b16 %v1095, %v1087
        %v1160 = vpack.c.b16 %v1096, %v1088
        %v1161 = vpack.c.b16 %v1097, %v1089
        %v1162 = vpack.c.b16 %v1098, %v1090
        %1227 = vmatprep.subr.bf16.mxu0 %v1100
        %1228 = vmatpush1.bf16.msra.mxu0 %v1099
        %1229 = vmatprep.subr.bf16.mxu0 %v1108
        %1230 = vmatpush1.bf16.msra.mxu0 %v1107
        %1231 = vmatprep.subr.bf16.mxu0 %v1116
        %1232 = vmatpush1.bf16.msra.mxu0 %v1115
        %1233 = vmatprep.subr.bf16.mxu0 %v1124
        %1234 = vmatpush1.bf16.msra.mxu0 %v1123
        %1235 = vmatprep.subr.bf16.mxu0 %v1132
        %1236 = vmatpush1.bf16.msra.mxu0 %v1131
        %1237 = vmatprep.subr.bf16.mxu0 %v1140
        %1238 = vmatpush1.bf16.msra.mxu0 %v1139
        %1239 = vmatprep.subr.bf16.mxu0 %v1148
        %1240 = vmatpush1.bf16.msra.mxu0 %v1147
        %1241 = vmatprep.subr.bf16.mxu0 %v1156
        %1242 = vmatpush1.bf16.msra.mxu0 %v1155
        %1243 = vmatprep.subr.bf16.mxu0 0
        %1244 = vmatpush1.bf16.msra.mxu0 0
        %1245 = vmatprep.subr.bf16.mxu0 0
        %1246 = vmatpush1.bf16.msra.mxu0 0
        %1247 = vmatprep.subr.bf16.mxu0 0
        %1248 = vmatpush1.bf16.msra.mxu0 0
        %1249 = vmatprep.subr.bf16.mxu0 0
        %1250 = vmatpush1.bf16.msra.mxu0 0
        %1251 = vmatprep.subr.bf16.mxu0 0
        %1252 = vmatpush1.bf16.msra.mxu0 0
        %1253 = vmatprep.subr.bf16.mxu0 0
        %1254 = vmatpush1.bf16.msra.mxu0 0
        %1255 = vmatprep.subr.bf16.mxu0 0
        %1256 = vmatpush1.bf16.msra.mxu0 0
        %1257 = vmatprep.subr.bf16.mxu0 0
        %1258 = vmatpush1.bf16.msra.mxu0 0
        %1259 = vmatprep.mubr.bf16.mxu0 0
        %1260 = vmatmul.mubr.bf16.gmra.mrb[0].mxu0 %v835
        %v1261 = vpop.f32.mrb[0].mxu0
        %v1262 = vadd.f32 0.0, %v1261
        %v1263 = vpop.f32.mrb[0].mxu0
        %v1264 = vadd.f32 0.0, %v1263
        %v1265 = vpop.f32.mrb[0].mxu0
        %v1266 = vadd.f32 0.0, %v1265
        %v1267 = vpop.f32.mrb[0].mxu0
        %v1268 = vadd.f32 0.0, %v1267
        %1269 = vmatprep.mubr.bf16.mxu0 0
        %1270 = vmatmul.mubr.bf16.gmra.mrb[0].mxu0 %v836
        %v1271 = vpop.f32.mrb[0].mxu0
        %v1272 = vadd.f32 0.0, %v1271
        %v1273 = vpop.f32.mrb[0].mxu0
        %v1274 = vadd.f32 0.0, %v1273
        %v1275 = vpop.f32.mrb[0].mxu0
        %v1276 = vadd.f32 0.0, %v1275
        %v1277 = vpop.f32.mrb[0].mxu0
        %v1278 = vadd.f32 0.0, %v1277
        %1279 = vmatprep.mubr.bf16.mxu0 0
        %1280 = vmatmul.mubr.bf16.gmra.mrb[0].mxu0 %v837
        %v1281 = vpop.f32.mrb[0].mxu0
        %v1282 = vadd.f32 0.0, %v1281
        %v1283 = vpop.f32.mrb[0].mxu0
        %v1284 = vadd.f32 0.0, %v1283
        %v1285 = vpop.f32.mrb[0].mxu0
        %v1286 = vadd.f32 0.0, %v1285
        %v1287 = vpop.f32.mrb[0].mxu0
        %v1288 = vadd.f32 0.0, %v1287
        %1289 = vmatprep.mubr.bf16.mxu0 0
        %1290 = vmatmul.mubr.bf16.gmra.mrb[0].mxu0 %v838
        %v1291 = vpop.f32.mrb[0].mxu0
        %v1292 = vadd.f32 0.0, %v1291
        %v1293 = vpop.f32.mrb[0].mxu0
        %v1294 = vadd.f32 0.0, %v1293
        %v1295 = vpop.f32.mrb[0].mxu0
        %v1296 = vadd.f32 0.0, %v1295
        %v1297 = vpop.f32.mrb[0].mxu0
        %v1298 = vadd.f32 0.0, %v1297
        %1299 = vmatprep.mubr.bf16.mxu0 0
        %1300 = vmatmul.mubr.bf16.gmra.mrb[0].mxu0 %v839
        %v1301 = vpop.f32.mrb[0].mxu0
        %v1302 = vadd.f32 0.0, %v1301
        %v1303 = vpop.f32.mrb[0].mxu0
        %v1304 = vadd.f32 0.0, %v1303
        %v1305 = vpop.f32.mrb[0].mxu0
        %v1306 = vadd.f32 0.0, %v1305
        %v1307 = vpop.f32.mrb[0].mxu0
        %v1308 = vadd.f32 0.0, %v1307
        %1309 = vmatprep.mubr.bf16.mxu0 0
        %1310 = vmatmul.mubr.bf16.gmra.mrb[0].mxu0 %v840
        %v1311 = vpop.f32.mrb[0].mxu0
        %v1312 = vadd.f32 0.0, %v1311
        %v1313 = vpop.f32.mrb[0].mxu0
        %v1314 = vadd.f32 0.0, %v1313
        %v1315 = vpop.f32.mrb[0].mxu0
        %v1316 = vadd.f32 0.0, %v1315
        %v1317 = vpop.f32.mrb[0].mxu0
        %v1318 = vadd.f32 0.0, %v1317
        %1319 = vmatprep.mubr.bf16.mxu0 0
        %1320 = vmatmul.mubr.bf16.gmra.mrb[0].mxu0 %v841
        %v1321 = vpop.f32.mrb[0].mxu0
        %v1322 = vadd.f32 0.0, %v1321
        %v1323 = vpop.f32.mrb[0].mxu0
        %v1324 = vadd.f32 0.0, %v1323
        %v1325 = vpop.f32.mrb[0].mxu0
        %v1326 = vadd.f32 0.0, %v1325
        %v1327 = vpop.f32.mrb[0].mxu0
        %v1328 = vadd.f32 0.0, %v1327
        %1329 = vmatprep.mubr.bf16.mxu0 0
        %1330 = vmatmul.mubr.bf16.gmra.mrb[0].mxu0 %v842
        %v1331 = vpop.f32.mrb[0].mxu0
        %v1332 = vadd.f32 0.0, %v1331
        %v1333 = vpop.f32.mrb[0].mxu0
        %v1334 = vadd.f32 0.0, %v1333
        %v1335 = vpop.f32.mrb[0].mxu0
        %v1336 = vadd.f32 0.0, %v1335
        %v1337 = vpop.f32.mrb[0].mxu0
        %v1338 = vadd.f32 0.0, %v1337
        %1339 = vdwg.mxu0
        %1340 = vmatprep.subr.bf16.mxu0 %v1102
        %1341 = vmatpush1.bf16.msra.mxu0 %v1101
        %1342 = vmatprep.subr.bf16.mxu0 %v1110
        %1343 = vmatpush1.bf16.msra.mxu0 %v1109
        %1344 = vmatprep.subr.bf16.mxu0 %v1118
        %1345 = vmatpush1.bf16.msra.mxu0 %v1117
        %1346 = vmatprep.subr.bf16.mxu0 %v1126
        %1347 = vmatpush1.bf16.msra.mxu0 %v1125
        %1348 = vmatprep.subr.bf16.mxu0 %v1134
        %1349 = vmatpush1.bf16.msra.mxu0 %v1133
        %1350 = vmatprep.subr.bf16.mxu0 %v1142
        %1351 = vmatpush1.bf16.msra.mxu0 %v1141
        %1352 = vmatprep.subr.bf16.mxu0 %v1150
        %1353 = vmatpush1.bf16.msra.mxu0 %v1149
        %1354 = vmatprep.subr.bf16.mxu0 %v1158
        %1355 = vmatpush1.bf16.msra.mxu0 %v1157
        %1356 = vmatprep.subr.bf16.mxu0 0
        %1357 = vmatpush1.bf16.msra.mxu0 0
        %1358 = vmatprep.subr.bf16.mxu0 0
        %1359 = vmatpush1.bf16.msra.mxu0 0
        %1360 = vmatprep.subr.bf16.mxu0 0
        %1361 = vmatpush1.bf16.msra.mxu0 0
        %1362 = vmatprep.subr.bf16.mxu0 0
        %1363 = vmatpush1.bf16.msra.mxu0 0
        %1364 = vmatprep.subr.bf16.mxu0 0
        %1365 = vmatpush1.bf16.msra.mxu0 0
        %1366 = vmatprep.subr.bf16.mxu0 0
        %1367 = vmatpush1.bf16.msra.mxu0 0
        %1368 = vmatprep.subr.bf16.mxu0 0
        %1369 = vmatpush1.bf16.msra.mxu0 0
        %1370 = vmatprep.subr.bf16.mxu0 0
        %1371 = vmatpush1.bf16.msra.mxu0 0
        %1372 = vmatprep.mubr.bf16.mxu0 0
        %1373 = vmatmul.mubr.bf16.gmra.mrb[0].mxu0 %v835
        %v1374 = vpop.f32.mrb[0].mxu0
        %v1375 = vadd.f32 0.0, %v1374
        %v1376 = vpop.f32.mrb[0].mxu0
        %v1377 = vadd.f32 0.0, %v1376
        %v1378 = vpop.f32.mrb[0].mxu0
        %v1379 = vadd.f32 0.0, %v1378
        %v1380 = vpop.f32.mrb[0].mxu0
        %v1381 = vadd.f32 0.0, %v1380
        %1382 = vmatprep.mubr.bf16.mxu0 0
        %1383 = vmatmul.mubr.bf16.gmra.mrb[0].mxu0 %v836
        %v1384 = vpop.f32.mrb[0].mxu0
        %v1385 = vadd.f32 0.0, %v1384
        %v1386 = vpop.f32.mrb[0].mxu0
        %v1387 = vadd.f32 0.0, %v1386
        %v1388 = vpop.f32.mrb[0].mxu0
        %v1389 = vadd.f32 0.0, %v1388
        %v1390 = vpop.f32.mrb[0].mxu0
        %v1391 = vadd.f32 0.0, %v1390
        %1392 = vmatprep.mubr.bf16.mxu0 0
        %1393 = vmatmul.mubr.bf16.gmra.mrb[0].mxu0 %v837
        %v1394 = vpop.f32.mrb[0].mxu0
        %v1395 = vadd.f32 0.0, %v1394
        %v1396 = vpop.f32.mrb[0].mxu0
        %v1397 = vadd.f32 0.0, %v1396
        %v1398 = vpop.f32.mrb[0].mxu0
        %v1399 = vadd.f32 0.0, %v1398
        %v1400 = vpop.f32.mrb[0].mxu0
        %v1401 = vadd.f32 0.0, %v1400
        %1402 = vmatprep.mubr.bf16.mxu0 0
        %1403 = vmatmul.mubr.bf16.gmra.mrb[0].mxu0 %v838
        %v1404 = vpop.f32.mrb[0].mxu0
        %v1405 = vadd.f32 0.0, %v1404
        %v1406 = vpop.f32.mrb[0].mxu0
        %v1407 = vadd.f32 0.0, %v1406
        %v1408 = vpop.f32.mrb[0].mxu0
        %v1409 = vadd.f32 0.0, %v1408
        %v1410 = vpop.f32.mrb[0].mxu0
        %v1411 = vadd.f32 0.0, %v1410
        %1412 = vmatprep.mubr.bf16.mxu0 0
        %1413 = vmatmul.mubr.bf16.gmra.mrb[0].mxu0 %v839
        %v1414 = vpop.f32.mrb[0].mxu0
        %v1415 = vadd.f32 0.0, %v1414
        %v1416 = vpop.f32.mrb[0].mxu0
        %v1417 = vadd.f32 0.0, %v1416
        %v1418 = vpop.f32.mrb[0].mxu0
        %v1419 = vadd.f32 0.0, %v1418
        %v1420 = vpop.f32.mrb[0].mxu0
        %v1421 = vadd.f32 0.0, %v1420
        %1422 = vmatprep.mubr.bf16.mxu0 0
        %1423 = vmatmul.mubr.bf16.gmra.mrb[0].mxu0 %v840
        %v1424 = vpop.f32.mrb[0].mxu0
        %v1425 = vadd.f32 0.0, %v1424
        %v1426 = vpop.f32.mrb[0].mxu0
        %v1427 = vadd.f32 0.0, %v1426
        %v1428 = vpop.f32.mrb[0].mxu0
        %v1429 = vadd.f32 0.0, %v1428
        %v1430 = vpop.f32.mrb[0].mxu0
        %v1431 = vadd.f32 0.0, %v1430
        %1432 = vmatprep.mubr.bf16.mxu0 0
        %1433 = vmatmul.mubr.bf16.gmra.mrb[0].mxu0 %v841
        %v1434 = vpop.f32.mrb[0].mxu0
        %v1435 = vadd.f32 0.0, %v1434
        %v1436 = vpop.f32.mrb[0].mxu0
        %v1437 = vadd.f32 0.0, %v1436
        %v1438 = vpop.f32.mrb[0].mxu0
        %v1439 = vadd.f32 0.0, %v1438
        %v1440 = vpop.f32.mrb[0].mxu0
        %v1441 = vadd.f32 0.0, %v1440
        %1442 = vmatprep.mubr.bf16.mxu0 0
        %1443 = vmatmul.mubr.bf16.gmra.mrb[0].mxu0 %v842
        %v1444 = vpop.f32.mrb[0].mxu0
        %v1445 = vadd.f32 0.0, %v1444
        %v1446 = vpop.f32.mrb[0].mxu0
        %v1447 = vadd.f32 0.0, %v1446
        %v1448 = vpop.f32.mrb[0].mxu0
        %v1449 = vadd.f32 0.0, %v1448
        %v1450 = vpop.f32.mrb[0].mxu0
        %v1451 = vadd.f32 0.0, %v1450
        %1452 = vdwg.mxu0
        %1453 = vmatprep.subr.bf16.mxu0 %v1104
        %1454 = vmatpush1.bf16.msra.mxu0 %v1103
        %1455 = vmatprep.subr.bf16.mxu0 %v1112
        %1456 = vmatpush1.bf16.msra.mxu0 %v1111
        %1457 = vmatprep.subr.bf16.mxu0 %v1120
        %1458 = vmatpush1.bf16.msra.mxu0 %v1119
        %1459 = vmatprep.subr.bf16.mxu0 %v1128
        %1460 = vmatpush1.bf16.msra.mxu0 %v1127
        %1461 = vmatprep.subr.bf16.mxu0 %v1136
        %1462 = vmatpush1.bf16.msra.mxu0 %v1135
        %1463 = vmatprep.subr.bf16.mxu0 %v1144
        %1464 = vmatpush1.bf16.msra.mxu0 %v1143
        %1465 = vmatprep.subr.bf16.mxu0 %v1152
        %1466 = vmatpush1.bf16.msra.mxu0 %v1151
        %1467 = vmatprep.subr.bf16.mxu0 %v1160
        %1468 = vmatpush1.bf16.msra.mxu0 %v1159
        %1469 = vmatprep.subr.bf16.mxu0 0
        %1470 = vmatpush1.bf16.msra.mxu0 0
        %1471 = vmatprep.subr.bf16.mxu0 0
        %1472 = vmatpush1.bf16.msra.mxu0 0
        %1473 = vmatprep.subr.bf16.mxu0 0
        %1474 = vmatpush1.bf16.msra.mxu0 0
        %1475 = vmatprep.subr.bf16.mxu0 0
        %1476 = vmatpush1.bf16.msra.mxu0 0
        %1477 = vmatprep.subr.bf16.mxu0 0
        %1478 = vmatpush1.bf16.msra.mxu0 0
        %1479 = vmatprep.subr.bf16.mxu0 0
        %1480 = vmatpush1.bf16.msra.mxu0 0
        %1481 = vmatprep.subr.bf16.mxu0 0
        %1482 = vmatpush1.bf16.msra.mxu0 0
        %1483 = vmatprep.subr.bf16.mxu0 0
        %1484 = vmatpush1.bf16.msra.mxu0 0
        %1485 = vmatprep.mubr.bf16.mxu0 0
        %1486 = vmatmul.mubr.bf16.gmra.mrb[0].mxu0 %v835
        %v1487 = vpop.f32.mrb[0].mxu0
        %v1488 = vadd.f32 0.0, %v1487
        %v1489 = vpop.f32.mrb[0].mxu0
        %v1490 = vadd.f32 0.0, %v1489
        %v1491 = vpop.f32.mrb[0].mxu0
        %v1492 = vadd.f32 0.0, %v1491
        %v1493 = vpop.f32.mrb[0].mxu0
        %v1494 = vadd.f32 0.0, %v1493
        %1495 = vmatprep.mubr.bf16.mxu0 0
        %1496 = vmatmul.mubr.bf16.gmra.mrb[0].mxu0 %v836
        %v1497 = vpop.f32.mrb[0].mxu0
        %v1498 = vadd.f32 0.0, %v1497
        %v1499 = vpop.f32.mrb[0].mxu0
        %v1500 = vadd.f32 0.0, %v1499
        %v1501 = vpop.f32.mrb[0].mxu0
        %v1502 = vadd.f32 0.0, %v1501
        %v1503 = vpop.f32.mrb[0].mxu0
        %v1504 = vadd.f32 0.0, %v1503
        %1505 = vmatprep.mubr.bf16.mxu0 0
        %1506 = vmatmul.mubr.bf16.gmra.mrb[0].mxu0 %v837
        %v1507 = vpop.f32.mrb[0].mxu0
        %v1508 = vadd.f32 0.0, %v1507
        %v1509 = vpop.f32.mrb[0].mxu0
        %v1510 = vadd.f32 0.0, %v1509
        %v1511 = vpop.f32.mrb[0].mxu0
        %v1512 = vadd.f32 0.0, %v1511
        %v1513 = vpop.f32.mrb[0].mxu0
        %v1514 = vadd.f32 0.0, %v1513
        %1515 = vmatprep.mubr.bf16.mxu0 0
        %1516 = vmatmul.mubr.bf16.gmra.mrb[0].mxu0 %v838
        %v1517 = vpop.f32.mrb[0].mxu0
        %v1518 = vadd.f32 0.0, %v1517
        %v1519 = vpop.f32.mrb[0].mxu0
        %v1520 = vadd.f32 0.0, %v1519
        %v1521 = vpop.f32.mrb[0].mxu0
        %v1522 = vadd.f32 0.0, %v1521
        %v1523 = vpop.f32.mrb[0].mxu0
        %v1524 = vadd.f32 0.0, %v1523
        %1525 = vmatprep.mubr.bf16.mxu0 0
        %1526 = vmatmul.mubr.bf16.gmra.mrb[0].mxu0 %v839
        %v1527 = vpop.f32.mrb[0].mxu0
        %v1528 = vadd.f32 0.0, %v1527
        %v1529 = vpop.f32.mrb[0].mxu0
        %v1530 = vadd.f32 0.0, %v1529
        %v1531 = vpop.f32.mrb[0].mxu0
        %v1532 = vadd.f32 0.0, %v1531
        %v1533 = vpop.f32.mrb[0].mxu0
        %v1534 = vadd.f32 0.0, %v1533
        %1535 = vmatprep.mubr.bf16.mxu0 0
        %1536 = vmatmul.mubr.bf16.gmra.mrb[0].mxu0 %v840
        %v1537 = vpop.f32.mrb[0].mxu0
        %v1538 = vadd.f32 0.0, %v1537
        %v1539 = vpop.f32.mrb[0].mxu0
        %v1540 = vadd.f32 0.0, %v1539
        %v1541 = vpop.f32.mrb[0].mxu0
        %v1542 = vadd.f32 0.0, %v1541
        %v1543 = vpop.f32.mrb[0].mxu0
        %v1544 = vadd.f32 0.0, %v1543
        %1545 = vmatprep.mubr.bf16.mxu0 0
        %1546 = vmatmul.mubr.bf16.gmra.mrb[0].mxu0 %v841
        %v1547 = vpop.f32.mrb[0].mxu0
        %v1548 = vadd.f32 0.0, %v1547
        %v1549 = vpop.f32.mrb[0].mxu0
        %v1550 = vadd.f32 0.0, %v1549
        %v1551 = vpop.f32.mrb[0].mxu0
        %v1552 = vadd.f32 0.0, %v1551
        %v1553 = vpop.f32.mrb[0].mxu0
        %v1554 = vadd.f32 0.0, %v1553
        %1555 = vmatprep.mubr.bf16.mxu0 0
        %1556 = vmatmul.mubr.bf16.gmra.mrb[0].mxu0 %v842
        %v1557 = vpop.f32.mrb[0].mxu0
        %v1558 = vadd.f32 0.0, %v1557
        %v1559 = vpop.f32.mrb[0].mxu0
        %v1560 = vadd.f32 0.0, %v1559
        %v1561 = vpop.f32.mrb[0].mxu0
        %v1562 = vadd.f32 0.0, %v1561
        %v1563 = vpop.f32.mrb[0].mxu0
        %v1564 = vadd.f32 0.0, %v1563
        %1565 = vdwg.mxu0
        %1566 = vmatprep.subr.bf16.mxu0 %v1106
        %1567 = vmatpush1.bf16.msra.mxu0 %v1105
        %1568 = vmatprep.subr.bf16.mxu0 %v1114
        %1569 = vmatpush1.bf16.msra.mxu0 %v1113
        %1570 = vmatprep.subr.bf16.mxu0 %v1122
        %1571 = vmatpush1.bf16.msra.mxu0 %v1121
        %1572 = vmatprep.subr.bf16.mxu0 %v1130
        %1573 = vmatpush1.bf16.msra.mxu0 %v1129
        %1574 = vmatprep.subr.bf16.mxu0 %v1138
        %1575 = vmatpush1.bf16.msra.mxu0 %v1137
        %1576 = vmatprep.subr.bf16.mxu0 %v1146
        %1577 = vmatpush1.bf16.msra.mxu0 %v1145
        %1578 = vmatprep.subr.bf16.mxu0 %v1154
        %1579 = vmatpush1.bf16.msra.mxu0 %v1153
        %1580 = vmatprep.subr.bf16.mxu0 %v1162
        %1581 = vmatpush1.bf16.msra.mxu0 %v1161
        %1582 = vmatprep.subr.bf16.mxu0 0
        %1583 = vmatpush1.bf16.msra.mxu0 0
        %1584 = vmatprep.subr.bf16.mxu0 0
        %1585 = vmatpush1.bf16.msra.mxu0 0
        %1586 = vmatprep.subr.bf16.mxu0 0
        %1587 = vmatpush1.bf16.msra.mxu0 0
        %1588 = vmatprep.subr.bf16.mxu0 0
        %1589 = vmatpush1.bf16.msra.mxu0 0
        %1590 = vmatprep.subr.bf16.mxu0 0
        %1591 = vmatpush1.bf16.msra.mxu0 0
        %1592 = vmatprep.subr.bf16.mxu0 0
        %1593 = vmatpush1.bf16.msra.mxu0 0
        %1594 = vmatprep.subr.bf16.mxu0 0
        %1595 = vmatpush1.bf16.msra.mxu0 0
        %1596 = vmatprep.subr.bf16.mxu0 0
        %1597 = vmatpush1.bf16.msra.mxu0 0
        %1598 = vmatprep.mubr.bf16.mxu0 0
        %1599 = vmatmul.mubr.bf16.gmra.mrb[0].mxu0 %v835
        %v1600 = vpop.f32.mrb[0].mxu0
        %v1601 = vadd.f32 0.0, %v1600
        %v1602 = vpop.f32.mrb[0].mxu0
        %v1603 = vadd.f32 0.0, %v1602
        %v1604 = vpop.f32.mrb[0].mxu0
        %v1605 = vadd.f32 0.0, %v1604
        %v1606 = vpop.f32.mrb[0].mxu0
        %v1607 = vadd.f32 0.0, %v1606
        %1608 = vmatprep.mubr.bf16.mxu0 0
        %1609 = vmatmul.mubr.bf16.gmra.mrb[0].mxu0 %v836
        %v1610 = vpop.f32.mrb[0].mxu0
        %v1611 = vadd.f32 0.0, %v1610
        %v1612 = vpop.f32.mrb[0].mxu0
        %v1613 = vadd.f32 0.0, %v1612
        %v1614 = vpop.f32.mrb[0].mxu0
        %v1615 = vadd.f32 0.0, %v1614
        %v1616 = vpop.f32.mrb[0].mxu0
        %v1617 = vadd.f32 0.0, %v1616
        %1618 = vmatprep.mubr.bf16.mxu0 0
        %1619 = vmatmul.mubr.bf16.gmra.mrb[0].mxu0 %v837
        %v1620 = vpop.f32.mrb[0].mxu0
        %v1621 = vadd.f32 0.0, %v1620
        %v1622 = vpop.f32.mrb[0].mxu0
        %v1623 = vadd.f32 0.0, %v1622
        %v1624 = vpop.f32.mrb[0].mxu0
        %v1625 = vadd.f32 0.0, %v1624
        %v1626 = vpop.f32.mrb[0].mxu0
        %v1627 = vadd.f32 0.0, %v1626
        %1628 = vmatprep.mubr.bf16.mxu0 0
        %1629 = vmatmul.mubr.bf16.gmra.mrb[0].mxu0 %v838
        %v1630 = vpop.f32.mrb[0].mxu0
        %v1631 = vadd.f32 0.0, %v1630
        %v1632 = vpop.f32.mrb[0].mxu0
        %v1633 = vadd.f32 0.0, %v1632
        %v1634 = vpop.f32.mrb[0].mxu0
        %v1635 = vadd.f32 0.0, %v1634
        %v1636 = vpop.f32.mrb[0].mxu0
        %v1637 = vadd.f32 0.0, %v1636
        %1638 = vmatprep.mubr.bf16.mxu0 0
        %1639 = vmatmul.mubr.bf16.gmra.mrb[0].mxu0 %v839
        %v1640 = vpop.f32.mrb[0].mxu0
        %v1641 = vadd.f32 0.0, %v1640
        %v1642 = vpop.f32.mrb[0].mxu0
        %v1643 = vadd.f32 0.0, %v1642
        %v1644 = vpop.f32.mrb[0].mxu0
        %v1645 = vadd.f32 0.0, %v1644
        %v1646 = vpop.f32.mrb[0].mxu0
        %v1647 = vadd.f32 0.0, %v1646
        %1648 = vmatprep.mubr.bf16.mxu0 0
        %1649 = vmatmul.mubr.bf16.gmra.mrb[0].mxu0 %v840
        %v1650 = vpop.f32.mrb[0].mxu0
        %v1651 = vadd.f32 0.0, %v1650
        %v1652 = vpop.f32.mrb[0].mxu0
        %v1653 = vadd.f32 0.0, %v1652
        %v1654 = vpop.f32.mrb[0].mxu0
        %v1655 = vadd.f32 0.0, %v1654
        %v1656 = vpop.f32.mrb[0].mxu0
        %v1657 = vadd.f32 0.0, %v1656
        %1658 = vmatprep.mubr.bf16.mxu0 0
        %1659 = vmatmul.mubr.bf16.gmra.mrb[0].mxu0 %v841
        %v1660 = vpop.f32.mrb[0].mxu0
        %v1661 = vadd.f32 0.0, %v1660
        %v1662 = vpop.f32.mrb[0].mxu0
        %v1663 = vadd.f32 0.0, %v1662
        %v1664 = vpop.f32.mrb[0].mxu0
        %v1665 = vadd.f32 0.0, %v1664
        %v1666 = vpop.f32.mrb[0].mxu0
        %v1667 = vadd.f32 0.0, %v1666
        %1668 = vmatprep.mubr.bf16.mxu0 0
        %1669 = vmatmul.mubr.bf16.gmra.mrb[0].mxu0 %v842
        %v1670 = vpop.f32.mrb[0].mxu0
        %v1671 = vadd.f32 0.0, %v1670
        %v1672 = vpop.f32.mrb[0].mxu0
        %v1673 = vadd.f32 0.0, %v1672
        %v1674 = vpop.f32.mrb[0].mxu0
        %v1675 = vadd.f32 0.0, %v1674
        %v1676 = vpop.f32.mrb[0].mxu0
        %v1677 = vadd.f32 0.0, %v1676
        %1678 = vdwg.mxu0
        %v1679 = vmax.f32 %v1262, %v1266
        %v1680 = vmax.f32 %v1679, %v1272
        %v1681 = vmax.f32 %v1680, %v1276
        %v1682 = vmax.f32 %v1681, %v1282
        %v1683 = vmax.f32 %v1682, %v1286
        %v1684 = vmax.f32 %v1683, %v1292
        %v1685 = vmax.f32 %v1684, %v1296
        %v1686 = vmax.f32 %v1685, %v1302
        %v1687 = vmax.f32 %v1686, %v1306
        %v1688 = vmax.f32 %v1687, %v1312
        %v1689 = vmax.f32 %v1688, %v1316
        %v1690 = vmax.f32 %v1689, %v1322
        %v1691 = vmax.f32 %v1690, %v1326
        %v1692 = vmax.f32 %v1691, %v1332
        %v1693 = vmax.f32 %v1692, %v1336
        %v1694 = vrot.slane %v1693, 4
        %v1695 = vmax.f32 %v1693, %v1694
        %v1696 = vrot.slane %v1695, 2
        %v1697 = vmax.f32 %v1695, %v1696
        %v1698 = vrot.slane %v1697, 1
        %v1699 = vmax.f32 %v1697, %v1698
        %v1700 = vmax.f32 %v1264, %v1268
        %v1701 = vmax.f32 %v1700, %v1274
        %v1702 = vmax.f32 %v1701, %v1278
        %v1703 = vmax.f32 %v1702, %v1284
        %v1704 = vmax.f32 %v1703, %v1288
        %v1705 = vmax.f32 %v1704, %v1294
        %v1706 = vmax.f32 %v1705, %v1298
        %v1707 = vmax.f32 %v1706, %v1304
        %v1708 = vmax.f32 %v1707, %v1308
        %v1709 = vmax.f32 %v1708, %v1314
        %v1710 = vmax.f32 %v1709, %v1318
        %v1711 = vmax.f32 %v1710, %v1324
        %v1712 = vmax.f32 %v1711, %v1328
        %v1713 = vmax.f32 %v1712, %v1334
        %v1714 = vmax.f32 %v1713, %v1338
        %v1715 = vrot.slane %v1714, 4
        %v1716 = vmax.f32 %v1714, %v1715
        %v1717 = vrot.slane %v1716, 2
        %v1718 = vmax.f32 %v1716, %v1717
        %v1719 = vrot.slane %v1718, 1
        %v1720 = vmax.f32 %v1718, %v1719
        %v1721 = vmax.f32 %v1375, %v1379
        %v1722 = vmax.f32 %v1721, %v1385
        %v1723 = vmax.f32 %v1722, %v1389
        %v1724 = vmax.f32 %v1723, %v1395
        %v1725 = vmax.f32 %v1724, %v1399
        %v1726 = vmax.f32 %v1725, %v1405
        %v1727 = vmax.f32 %v1726, %v1409
        %v1728 = vmax.f32 %v1727, %v1415
        %v1729 = vmax.f32 %v1728, %v1419
        %v1730 = vmax.f32 %v1729, %v1425
        %v1731 = vmax.f32 %v1730, %v1429
        %v1732 = vmax.f32 %v1731, %v1435
        %v1733 = vmax.f32 %v1732, %v1439
        %v1734 = vmax.f32 %v1733, %v1445
        %v1735 = vmax.f32 %v1734, %v1449
        %v1736 = vrot.slane %v1735, 4
        %v1737 = vmax.f32 %v1735, %v1736
        %v1738 = vrot.slane %v1737, 2
        %v1739 = vmax.f32 %v1737, %v1738
        %v1740 = vrot.slane %v1739, 1
        %v1741 = vmax.f32 %v1739, %v1740
        %v1742 = vmax.f32 %v1377, %v1381
        %v1743 = vmax.f32 %v1742, %v1387
        %v1744 = vmax.f32 %v1743, %v1391
        %v1745 = vmax.f32 %v1744, %v1397
        %v1746 = vmax.f32 %v1745, %v1401
        %v1747 = vmax.f32 %v1746, %v1407
        %v1748 = vmax.f32 %v1747, %v1411
        %v1749 = vmax.f32 %v1748, %v1417
        %v1750 = vmax.f32 %v1749, %v1421
        %v1751 = vmax.f32 %v1750, %v1427
        %v1752 = vmax.f32 %v1751, %v1431
        %v1753 = vmax.f32 %v1752, %v1437
        %v1754 = vmax.f32 %v1753, %v1441
        %v1755 = vmax.f32 %v1754, %v1447
        %v1756 = vmax.f32 %v1755, %v1451
        %v1757 = vrot.slane %v1756, 4
        %v1758 = vmax.f32 %v1756, %v1757
        %v1759 = vrot.slane %v1758, 2
        %v1760 = vmax.f32 %v1758, %v1759
        %v1761 = vrot.slane %v1760, 1
        %v1762 = vmax.f32 %v1760, %v1761
        %v1763 = vmax.f32 %v1488, %v1492
        %v1764 = vmax.f32 %v1763, %v1498
        %v1765 = vmax.f32 %v1764, %v1502
        %v1766 = vmax.f32 %v1765, %v1508
        %v1767 = vmax.f32 %v1766, %v1512
        %v1768 = vmax.f32 %v1767, %v1518
        %v1769 = vmax.f32 %v1768, %v1522
        %v1770 = vmax.f32 %v1769, %v1528
        %v1771 = vmax.f32 %v1770, %v1532
        %v1772 = vmax.f32 %v1771, %v1538
        %v1773 = vmax.f32 %v1772, %v1542
        %v1774 = vmax.f32 %v1773, %v1548
        %v1775 = vmax.f32 %v1774, %v1552
        %v1776 = vmax.f32 %v1775, %v1558
        %v1777 = vmax.f32 %v1776, %v1562
        %v1778 = vrot.slane %v1777, 4
        %v1779 = vmax.f32 %v1777, %v1778
        %v1780 = vrot.slane %v1779, 2
        %v1781 = vmax.f32 %v1779, %v1780
        %v1782 = vrot.slane %v1781, 1
        %v1783 = vmax.f32 %v1781, %v1782
        %v1784 = vmax.f32 %v1490, %v1494
        %v1785 = vmax.f32 %v1784, %v1500
        %v1786 = vmax.f32 %v1785, %v1504
        %v1787 = vmax.f32 %v1786, %v1510
        %v1788 = vmax.f32 %v1787, %v1514
        %v1789 = vmax.f32 %v1788, %v1520
        %v1790 = vmax.f32 %v1789, %v1524
        %v1791 = vmax.f32 %v1790, %v1530
        %v1792 = vmax.f32 %v1791, %v1534
        %v1793 = vmax.f32 %v1792, %v1540
        %v1794 = vmax.f32 %v1793, %v1544
        %v1795 = vmax.f32 %v1794, %v1550
        %v1796 = vmax.f32 %v1795, %v1554
        %v1797 = vmax.f32 %v1796, %v1560
        %v1798 = vmax.f32 %v1797, %v1564
        %v1799 = vrot.slane %v1798, 4
        %v1800 = vmax.f32 %v1798, %v1799
        %v1801 = vrot.slane %v1800, 2
        %v1802 = vmax.f32 %v1800, %v1801
        %v1803 = vrot.slane %v1802, 1
        %v1804 = vmax.f32 %v1802, %v1803
        %v1805 = vmax.f32 %v1601, %v1605
        %v1806 = vmax.f32 %v1805, %v1611
        %v1807 = vmax.f32 %v1806, %v1615
        %v1808 = vmax.f32 %v1807, %v1621
        %v1809 = vmax.f32 %v1808, %v1625
        %v1810 = vmax.f32 %v1809, %v1631
        %v1811 = vmax.f32 %v1810, %v1635
        %v1812 = vmax.f32 %v1811, %v1641
        %v1813 = vmax.f32 %v1812, %v1645
        %v1814 = vmax.f32 %v1813, %v1651
        %v1815 = vmax.f32 %v1814, %v1655
        %v1816 = vmax.f32 %v1815, %v1661
        %v1817 = vmax.f32 %v1816, %v1665
        %v1818 = vmax.f32 %v1817, %v1671
        %v1819 = vmax.f32 %v1818, %v1675
        %v1820 = vrot.slane %v1819, 4
        %v1821 = vmax.f32 %v1819, %v1820
        %v1822 = vrot.slane %v1821, 2
        %v1823 = vmax.f32 %v1821, %v1822
        %v1824 = vrot.slane %v1823, 1
        %v1825 = vmax.f32 %v1823, %v1824
        %v1826 = vmax.f32 %v1603, %v1607
        %v1827 = vmax.f32 %v1826, %v1613
        %v1828 = vmax.f32 %v1827, %v1617
        %v1829 = vmax.f32 %v1828, %v1623
        %v1830 = vmax.f32 %v1829, %v1627
        %v1831 = vmax.f32 %v1830, %v1633
        %v1832 = vmax.f32 %v1831, %v1637
        %v1833 = vmax.f32 %v1832, %v1643
        %v1834 = vmax.f32 %v1833, %v1647
        %v1835 = vmax.f32 %v1834, %v1653
        %v1836 = vmax.f32 %v1835, %v1657
        %v1837 = vmax.f32 %v1836, %v1663
        %v1838 = vmax.f32 %v1837, %v1667
        %v1839 = vmax.f32 %v1838, %v1673
        %v1840 = vmax.f32 %v1839, %v1677
        %v1841 = vrot.slane %v1840, 4
        %v1842 = vmax.f32 %v1840, %v1841
        %v1843 = vrot.slane %v1842, 2
        %v1844 = vmax.f32 %v1842, %v1843
        %v1845 = vrot.slane %v1844, 1
        %v1846 = vmax.f32 %v1844, %v1845
        %v1855 = vcombine.low %v1699, %v1720
        %v1856 = vcombine.low %v1741, %v1762
        %v1857 = vcombine.low %v1783, %v1804
        %v1858 = vcombine.low %v1825, %v1846
        %v1860 = vunpack.c.l.s4 1966171168
        %v1861 = vunpack.c.0.s8 %v1860
        %v1862 = vlaneseq
        %v1863 = vshrl.u32 %v1862, 7
        %v1864 = vsub.s32 %v1861, %v1863
        %v1865 = vrot.slane %v1855, %v1864
        %v1867 = vunpack.c.l.s4 1966171168
        %v1868 = vunpack.c.0.s8 %v1867
        %v1869 = vlaneseq
        %v1870 = vshrl.u32 %v1869, 7
        %v1871 = vsub.s32 %v1868, %v1870
        %v1872 = vrot.slane %v1856, %v1871
        %v1874 = vunpack.c.l.s4 1966171168
        %v1875 = vunpack.c.0.s8 %v1874
        %v1876 = vlaneseq
        %v1877 = vshrl.u32 %v1876, 7
        %v1878 = vsub.s32 %v1875, %v1877
        %v1879 = vrot.slane %v1857, %v1878
        %v1881 = vunpack.c.l.s4 1966171168
        %v1882 = vunpack.c.0.s8 %v1881
        %v1883 = vlaneseq
        %v1884 = vshrl.u32 %v1883, 7
        %v1885 = vsub.s32 %v1882, %v1884
        %v1886 = vrot.slane %v1858, %v1885
        %v1887 = vcombine.low %v1865, %v1872
        %v1888 = vcombine.low %v1879, %v1886
        %v1890 = vunpack.c.l.s4 1966171168
        %v1891 = vunpack.c.0.s8 %v1890
        %v1892 = vlaneseq
        %v1893 = vshrl.u32 %v1892, 7
        %v1894 = vsub.s32 %v1891, %v1893
        %v1895 = vrot.slane %v1887, %v1894
        %v1897 = vunpack.c.l.s4 1966171168
        %v1898 = vunpack.c.0.s8 %v1897
        %v1899 = vlaneseq
        %v1900 = vshrl.u32 %v1899, 7
        %v1901 = vsub.s32 %v1898, %v1900
        %v1902 = vrot.slane %v1888, %v1901
        %v1903 = vcombine.low %v1895, %v1902
        %p1905 = scmp.eq.s32.totalorder %s23, 0
        // Predicated region
        $region49: #{enhanced_stn_forward.2} parent=43 // pred_check
          %p1906 = pneg %p1905
        $region50: #{enhanced_stn_forward.2} parent=43 // pred_check_branch
          %1908 = sbr.rel (%p1906) target = $region52
        $region51: #{enhanced_stn_forward.2} parent=43 // pred_region
          %1909 = vst [vmem:[%s292] sm:$0xff] %v1903
        $region52: #{enhanced_stn_forward.2} parent=43 // pred_fallthru
          _
        %p1910 = scmp.gt.s32.totalorder %s23, 0
        // Predicated region
        $region53: #{enhanced_stn_forward.2} parent=43 // pred_check
          %p1911 = pneg %p1910
        $region54: #{enhanced_stn_forward.2} parent=43 // pred_check_branch
          %1913 = sbr.rel (%p1911) target = $region56
        $region55: #{enhanced_stn_forward.2} parent=43 // pred_region
          %v1914 = vld [vmem:[%s292] sm:$0xff]
          %v1915 = vmax.f32 %v1914, %v1903
          %1916 = vst [vmem:[%s292] sm:$0xff] %v1915
        $region56: #{enhanced_stn_forward.2} parent=43 // pred_fallthru
          _
        %p1917 = scmp.lt.s32.totalorder %s22, 1
        %s1918 = scalar_select %p1917, %s22, 1
        %s1919 = smul.addr %s1918, 8
        %s1920 = scalar_lea.vmem %s6, %s1919
        // Predicated region
        $region57: #{enhanced_stn_forward.2} parent=43 // pred_check
          %p1921 = pneg %p181
        $region58: #{enhanced_stn_forward.2} parent=43 // pred_check_branch
          %1923 = sbr.rel (%p1921) target = $region60
        $region59: #{enhanced_stn_forward.2} parent=43 // pred_region
          _
        $region60: #{enhanced_stn_forward.2} parent=43 // pred_fallthru
          _
      $region44: #{enhanced_stn_forward.2} parent=5 // pred_fallthru
        _
      %p1924 = scmp.le.s32.totalorder 2, %s13
      // Predicated region
      $region61: #{enhanced_stn_forward.2} parent=5 // pred_check
        %p1925 = pneg %p1924
      $region62: #{enhanced_stn_forward.2} parent=5 // pred_check_branch
        %1927 = sbr.rel (%p1925) target = $region64
      $region63: #{enhanced_stn_forward.2} parent=5 // pred_region
        %s1928 = ssub.s32 %s13, 2
        // Predicated region
        $region65: #{enhanced_stn_forward.2} parent=63 // pred_check
          %p1929 = pneg %p187
        $region66: #{enhanced_stn_forward.2} parent=63 // pred_check_branch
          %1931 = sbr.rel (%p1929) target = $region68
        $region67: #{enhanced_stn_forward.2} parent=63 // pred_region
          %p1932 = scmp.lt.s32.totalorder %s24, 1
          %s1933 = scalar_select %p1932, %s24, 1
          %s1934 = smul.addr %s1933, 8
          %s1935 = scalar_lea.vmem %s6, %s1934
        $region68: #{enhanced_stn_forward.2} parent=63 // pred_fallthru
          _
      $region64: #{enhanced_stn_forward.2} parent=5 // pred_fallthru
        _
    $region6: #{enhanced_stn_forward.2} parent=1 // loop_footer
      %s17 = sadd.s32 1, %s13
    $region7: #{enhanced_stn_forward.2} parent=1 // loop_footer_branch
      %12 = sbr.rel target = $region3
    $region8: #{enhanced_stn_forward.2} parent=1 // loop_exit
      _
    %1936 = vsyncpa [#allocation3], 1
    %s1937 = scalar_lea.sflag [#allocation3], 1
    %1938 = vsyncpa %s1937, 1

// kernel: enhanced_stn_forward.3
$region0: #{enhanced_stn_forward.3}
  #allocation0 [shape = 'u32[]', space=smem, size = 0x4, offset = 0x4, fixed_abs, tag = 'smem constant byte address 0x4 - core index']
  #allocation1 [shape = 'u32[144,128]{1,0:T(1,128)}', space=vmem, size = 0x12000, scoped, tag = 'internal scratch']
  %s0 = inlined_call_operand.vmem [shape: f32[2,1024], index: 0, kind: input, shape index: {}]
  %s1 = inlined_call_operand.vmem [shape: f32[1,1024], index: 1, kind: input, shape index: {}]
  %s2 = inlined_call_operand.hbm [shape: bf16[1024,512], index: 2, kind: input, shape index: {}]
  %s3 = inlined_call_operand.vmem [shape: f32[1,512], index: 3, kind: input, shape index: {}]
  %s4 = inlined_call_operand.vmem [shape: bf16[512,256], index: 4, kind: input, shape index: {}]
  %s5 = inlined_call_operand.vmem [shape: f32[1,256], index: 5, kind: input, shape index: {}]
  %s6 = inlined_call_operand.vmem [shape: bf16[256,9], index: 6, kind: input, shape index: {}]
  %s7 = inlined_call_operand.vmem [shape: f32[1,9], index: 7, kind: input, shape index: {}]
  %s8 = inlined_call_operand.vmem [shape: f32[2,9], index: 8, kind: output, shape index: {0}]
  %s9 = inlined_call_operand.hbm [shape: f32[1,1], index: 9, kind: output, shape index: {1}]
  %10 = xla_tuple %s8, %s9
  %s11 = sld [smem:[#allocation0]]
  $region54: #{enhanced_stn_forward.3} parent=0
    _
  %s13 = ssub.s32 1, %s11
  %s14 = scalar_select 0, %s13, %s11
  $region1: #{enhanced_stn_forward.3} parent=0
    #allocation2 [shape = 'u8[1048576]{0}', space=vmem, size = 0x100000, scoped, tag = 'input window, operand 2, single buffered']
    #allocation3 [shape = 's32[1]{0}', space=sflag, size = 0x4, scoped, tag = 'scoped memory for enhanced_stn_forward.3']
    #allocation4 [shape = 's32[1]{0}', space=sflag, size = 0x4, scoped, tag = 'scoped memory for enhanced_stn_forward.3']
    #allocation5 [shape = 'u8[512]{0}', space=vmem, size = 0x400, scoped, tag = 'output window, operand 1, single buffered']
    %15 = vsyncpa [#allocation3], 0
    %16 = vsyncpa [#allocation4], 0
    // Predicated region
    $region2: #{enhanced_stn_forward.3} parent=1 // pred_check
      _
    $region3: #{enhanced_stn_forward.3} parent=1 // pred_check_branch
      %18 = sbr.rel (0) target = $region5
    $region4: #{enhanced_stn_forward.3} parent=1 // pred_region
      _
    $region5: #{enhanced_stn_forward.3} parent=1 // pred_fallthru
      _
    // Predicated region
    $region6: #{enhanced_stn_forward.3} parent=1 // pred_check
      _
    $region7: #{enhanced_stn_forward.3} parent=1 // pred_check_branch
      %20 = sbr.rel (0) target = $region9
    $region8: #{enhanced_stn_forward.3} parent=1 // pred_region
      _
    $region9: #{enhanced_stn_forward.3} parent=1 // pred_fallthru
      _
    // Predicated region
    $region10: #{enhanced_stn_forward.3} parent=1 // pred_check
      _
    $region11: #{enhanced_stn_forward.3} parent=1 // pred_check_branch
      %22 = sbr.rel (0) target = $region13
    $region12: #{enhanced_stn_forward.3} parent=1 // pred_region
      %s24 = ssub.s32 32768, 32768
      %25 = vsyncadd [#allocation3], %s24
      %s26 = sshll.u32 [#allocation2], 4
      %s27 = int_to_ptr.vmem [resolvable:$true] %s26
      %32 = dma.hbm_to_vmem [thread:$0]  %s2, 32768, %s27, [#allocation3], 256, 256, 16
    $region13: #{enhanced_stn_forward.3} parent=1 // pred_fallthru
      _
    // Predicated region
    $region14: #{enhanced_stn_forward.3} parent=1 // pred_check
      _
    $region15: #{enhanced_stn_forward.3} parent=1 // pred_check_branch
      %34 = sbr.rel (0) target = $region17
    $region16: #{enhanced_stn_forward.3} parent=1 // pred_region
      _
    $region17: #{enhanced_stn_forward.3} parent=1 // pred_fallthru
      _
    // Predicated region
    $region18: #{enhanced_stn_forward.3} parent=1 // pred_check
      _
    $region19: #{enhanced_stn_forward.3} parent=1 // pred_check_branch
      %36 = sbr.rel (0) target = $region21
    $region20: #{enhanced_stn_forward.3} parent=1 // pred_region
      _
    $region21: #{enhanced_stn_forward.3} parent=1 // pred_fallthru
      _
    // Predicated region
    $region22: #{enhanced_stn_forward.3} parent=1 // pred_check
      _
    $region23: #{enhanced_stn_forward.3} parent=1 // pred_check_branch
      %38 = sbr.rel (0) target = $region25
    $region24: #{enhanced_stn_forward.3} parent=1 // pred_region
      _
    $region25: #{enhanced_stn_forward.3} parent=1 // pred_fallthru
      _
    // Predicated region
    $region26: #{enhanced_stn_forward.3} parent=1 // pred_check
      _
    $region27: #{enhanced_stn_forward.3} parent=1 // pred_check_branch
      %40 = sbr.rel (0) target = $region29
    $region28: #{enhanced_stn_forward.3} parent=1 // pred_region
      _
    $region29: #{enhanced_stn_forward.3} parent=1 // pred_fallthru
      _
    // Predicated region
    $region30: #{enhanced_stn_forward.3} parent=1 // pred_check
      _
    $region31: #{enhanced_stn_forward.3} parent=1 // pred_check_branch
      %42 = sbr.rel (0) target = $region33
    $region32: #{enhanced_stn_forward.3} parent=1 // pred_region
      _
    $region33: #{enhanced_stn_forward.3} parent=1 // pred_fallthru
      _
    // Predicated region
    $region34: #{enhanced_stn_forward.3} parent=1 // pred_check
      _
    $region35: #{enhanced_stn_forward.3} parent=1 // pred_check_branch
      %44 = sbr.rel (0) target = $region37
    $region36: #{enhanced_stn_forward.3} parent=1 // pred_region
      %45 = dma.done [#allocation3], 32768
    $region37: #{enhanced_stn_forward.3} parent=1 // pred_fallthru
      _
    %v47 = vld [vmem:[%s0] sm:$0xff]
    %v48 = vld [vmem:[%s0 + $0x8] sm:$0xff]
    %v49 = vld [vmem:[%s1] sm:$0xff]
    %v51 = vlaneseq
    %v52 = vshrl.u32 %v51, 7
    %v53 = vsub.s32 0, %v52
    %v54 = vrot.slane %v49, %v53
    %v55 = vlaneseq
    %v56 = vshrl.u32 %v55, 7
    %v57 = vsub.s32 1, %v56
    %v58 = vrot.slane %v49, %v57
    %v59 = vlaneseq
    %v60 = vshrl.u32 %v59, 7
    %v61 = vsub.s32 2, %v60
    %v62 = vrot.slane %v49, %v61
    %v63 = vlaneseq
    %v64 = vshrl.u32 %v63, 7
    %v65 = vsub.s32 3, %v64
    %v66 = vrot.slane %v49, %v65
    %v67 = vlaneseq
    %v68 = vshrl.u32 %v67, 7
    %v69 = vsub.s32 4, %v68
    %v70 = vrot.slane %v49, %v69
    %v71 = vlaneseq
    %v72 = vshrl.u32 %v71, 7
    %v73 = vsub.s32 5, %v72
    %v74 = vrot.slane %v49, %v73
    %v75 = vlaneseq
    %v76 = vshrl.u32 %v75, 7
    %v77 = vsub.s32 6, %v76
    %v78 = vrot.slane %v49, %v77
    %v79 = vlaneseq
    %v80 = vshrl.u32 %v79, 7
    %v81 = vsub.s32 7, %v80
    %v82 = vrot.slane %v49, %v81
    %v83 = vcombine.low %v54, %v58
    %v84 = vcombine.low %v62, %v66
    %v86 = vunpack.c.l.s4 1983009808
    %v87 = vunpack.c.0.s8 %v86
    %v88 = vlaneseq
    %v89 = vshrl.u32 %v88, 7
    %v90 = vsub.s32 %v87, %v89
    %v91 = vrot.slane %v83, %v90
    %v93 = vunpack.c.l.s4 1983009808
    %v94 = vunpack.c.0.s8 %v93
    %v95 = vlaneseq
    %v96 = vshrl.u32 %v95, 7
    %v97 = vsub.s32 %v94, %v96
    %v98 = vrot.slane %v84, %v97
    %v99 = vcombine.low %v91, %v98
    %v100 = vcombine.low %v70, %v74
    %v101 = vcombine.low %v78, %v82
    %v103 = vunpack.c.l.s4 1983009808
    %v104 = vunpack.c.0.s8 %v103
    %v105 = vlaneseq
    %v106 = vshrl.u32 %v105, 7
    %v107 = vsub.s32 %v104, %v106
    %v108 = vrot.slane %v100, %v107
    %v110 = vunpack.c.l.s4 1983009808
    %v111 = vunpack.c.0.s8 %v110
    %v112 = vlaneseq
    %v113 = vshrl.u32 %v112, 7
    %v114 = vsub.s32 %v111, %v113
    %v115 = vrot.slane %v101, %v114
    %v116 = vcombine.low %v108, %v115
    %v119 = vadd.f32 %v47, %v99
    %v120 = vadd.f32 %v48, %v116
    %v121 = vmax.f32 %v119, 0.0
    %v122 = vmax.f32 %v120, 0.0
    %v125 = vcombine.high %v121, %v121
    %v127 = vunpack.c.l.s4 1983009808
    %v128 = vunpack.c.0.s8 %v127
    %v129 = vlaneseq
    %v130 = vshrl.u32 %v129, 7
    %v131 = vsub.s32 %v128, %v130
    %v132 = vrot.slane %v121, %v131
    %v134 = vunpack.c.l.s4 1983009808
    %v135 = vunpack.c.0.s8 %v134
    %v136 = vlaneseq
    %v137 = vshrl.u32 %v136, 7
    %v138 = vsub.s32 %v135, %v137
    %v139 = vrot.slane %v125, %v138
    %v140 = vcombine.high %v132, %v132
    %v141 = vcombine.high %v139, %v139
    %v142 = vcombine.high %v122, %v122
    %v144 = vunpack.c.l.s4 1983009808
    %v145 = vunpack.c.0.s8 %v144
    %v146 = vlaneseq
    %v147 = vshrl.u32 %v146, 7
    %v148 = vsub.s32 %v145, %v147
    %v149 = vrot.slane %v122, %v148
    %v151 = vunpack.c.l.s4 1983009808
    %v152 = vunpack.c.0.s8 %v151
    %v153 = vlaneseq
    %v154 = vshrl.u32 %v153, 7
    %v155 = vsub.s32 %v152, %v154
    %v156 = vrot.slane %v142, %v155
    %v157 = vcombine.high %v149, %v149
    %v158 = vcombine.high %v156, %v156
    %v167 = vpack.c.bf16 %v132, %v132
    %v168 = vpack.c.bf16 %v140, %v140
    %v169 = vpack.c.bf16 %v139, %v139
    %v170 = vpack.c.bf16 %v141, %v141
    %v171 = vpack.c.bf16 %v149, %v149
    %v172 = vpack.c.bf16 %v157, %v157
    %v173 = vpack.c.bf16 %v156, %v156
    %v174 = vpack.c.bf16 %v158, %v158
    %v175 = vld [vmem:[#allocation2] sm:$0xff]
    %v176 = vld [vmem:[#allocation2 + $0x8] sm:$0xff]
    %v177 = vld [vmem:[#allocation2 + $0x10] sm:$0xff]
    %v178 = vld [vmem:[#allocation2 + $0x18] sm:$0xff]
    %v179 = vld [vmem:[#allocation2 + $0x20] sm:$0xff]
    %v180 = vld [vmem:[#allocation2 + $0x28] sm:$0xff]
    %v181 = vld [vmem:[#allocation2 + $0x30] sm:$0xff]
    %v182 = vld [vmem:[#allocation2 + $0x38] sm:$0xff]
    %v183 = vld [vmem:[#allocation2 + $0x40] sm:$0xff]
    %v184 = vld [vmem:[#allocation2 + $0x48] sm:$0xff]
    %v185 = vld [vmem:[#allocation2 + $0x50] sm:$0xff]
    %v186 = vld [vmem:[#allocation2 + $0x58] sm:$0xff]
    %v187 = vld [vmem:[#allocation2 + $0x60] sm:$0xff]
    %v188 = vld [vmem:[#allocation2 + $0x68] sm:$0xff]
    %v189 = vld [vmem:[#allocation2 + $0x70] sm:$0xff]
    %v190 = vld [vmem:[#allocation2 + $0x78] sm:$0xff]
    %v191 = vld [vmem:[#allocation2 + $0x80] sm:$0xff]
    %v192 = vld [vmem:[#allocation2 + $0x88] sm:$0xff]
    %v193 = vld [vmem:[#allocation2 + $0x90] sm:$0xff]
    %v194 = vld [vmem:[#allocation2 + $0x98] sm:$0xff]
    %v195 = vld [vmem:[#allocation2 + $0xa0] sm:$0xff]
    %v196 = vld [vmem:[#allocation2 + $0xa8] sm:$0xff]
    %v197 = vld [vmem:[#allocation2 + $0xb0] sm:$0xff]
    %v198 = vld [vmem:[#allocation2 + $0xb8] sm:$0xff]
    %v199 = vld [vmem:[#allocation2 + $0xc0] sm:$0xff]
    %v200 = vld [vmem:[#allocation2 + $0xc8] sm:$0xff]
    %v201 = vld [vmem:[#allocation2 + $0xd0] sm:$0xff]
    %v202 = vld [vmem:[#allocation2 + $0xd8] sm:$0xff]
    %v203 = vld [vmem:[#allocation2 + $0xe0] sm:$0xff]
    %v204 = vld [vmem:[#allocation2 + $0xe8] sm:$0xff]
    %v205 = vld [vmem:[#allocation2 + $0xf0] sm:$0xff]
    %v206 = vld [vmem:[#allocation2 + $0xf8] sm:$0xff]
    %v207 = vld [vmem:[#allocation2 + $0x100] sm:$0xff]
    %v208 = vld [vmem:[#allocation2 + $0x108] sm:$0xff]
    %v209 = vld [vmem:[#allocation2 + $0x110] sm:$0xff]
    %v210 = vld [vmem:[#allocation2 + $0x118] sm:$0xff]
    %v211 = vld [vmem:[#allocation2 + $0x120] sm:$0xff]
    %v212 = vld [vmem:[#allocation2 + $0x128] sm:$0xff]
    %v213 = vld [vmem:[#allocation2 + $0x130] sm:$0xff]
    %v214 = vld [vmem:[#allocation2 + $0x138] sm:$0xff]
    %v215 = vld [vmem:[#allocation2 + $0x140] sm:$0xff]
    %v216 = vld [vmem:[#allocation2 + $0x148] sm:$0xff]
    %v217 = vld [vmem:[#allocation2 + $0x150] sm:$0xff]
    %v218 = vld [vmem:[#allocation2 + $0x158] sm:$0xff]
    %v219 = vld [vmem:[#allocation2 + $0x160] sm:$0xff]
    %v220 = vld [vmem:[#allocation2 + $0x168] sm:$0xff]
    %v221 = vld [vmem:[#allocation2 + $0x170] sm:$0xff]
    %v222 = vld [vmem:[#allocation2 + $0x178] sm:$0xff]
    %v223 = vld [vmem:[#allocation2 + $0x180] sm:$0xff]
    %v224 = vld [vmem:[#allocation2 + $0x188] sm:$0xff]
    %v225 = vld [vmem:[#allocation2 + $0x190] sm:$0xff]
    %v226 = vld [vmem:[#allocation2 + $0x198] sm:$0xff]
    %v227 = vld [vmem:[#allocation2 + $0x1a0] sm:$0xff]
    %v228 = vld [vmem:[#allocation2 + $0x1a8] sm:$0xff]
    %v229 = vld [vmem:[#allocation2 + $0x1b0] sm:$0xff]
    %v230 = vld [vmem:[#allocation2 + $0x1b8] sm:$0xff]
    %v231 = vld [vmem:[#allocation2 + $0x1c0] sm:$0xff]
    %v232 = vld [vmem:[#allocation2 + $0x1c8] sm:$0xff]
    %v233 = vld [vmem:[#allocation2 + $0x1d0] sm:$0xff]
    %v234 = vld [vmem:[#allocation2 + $0x1d8] sm:$0xff]
    %v235 = vld [vmem:[#allocation2 + $0x1e0] sm:$0xff]
    %v236 = vld [vmem:[#allocation2 + $0x1e8] sm:$0xff]
    %v237 = vld [vmem:[#allocation2 + $0x1f0] sm:$0xff]
    %v238 = vld [vmem:[#allocation2 + $0x1f8] sm:$0xff]
    %v239 = vld [vmem:[#allocation2 + $0x200] sm:$0xff]
    %v240 = vld [vmem:[#allocation2 + $0x208] sm:$0xff]
    %v241 = vld [vmem:[#allocation2 + $0x210] sm:$0xff]
    %v242 = vld [vmem:[#allocation2 + $0x218] sm:$0xff]
    %v243 = vld [vmem:[#allocation2 + $0x220] sm:$0xff]
    %v244 = vld [vmem:[#allocation2 + $0x228] sm:$0xff]
    %v245 = vld [vmem:[#allocation2 + $0x230] sm:$0xff]
    %v246 = vld [vmem:[#allocation2 + $0x238] sm:$0xff]
    %v247 = vld [vmem:[#allocation2 + $0x240] sm:$0xff]
    %v248 = vld [vmem:[#allocation2 + $0x248] sm:$0xff]
    %v249 = vld [vmem:[#allocation2 + $0x250] sm:$0xff]
    %v250 = vld [vmem:[#allocation2 + $0x258] sm:$0xff]
    %v251 = vld [vmem:[#allocation2 + $0x260] sm:$0xff]
    %v252 = vld [vmem:[#allocation2 + $0x268] sm:$0xff]
    %v253 = vld [vmem:[#allocation2 + $0x270] sm:$0xff]
    %v254 = vld [vmem:[#allocation2 + $0x278] sm:$0xff]
    %v255 = vld [vmem:[#allocation2 + $0x280] sm:$0xff]
    %v256 = vld [vmem:[#allocation2 + $0x288] sm:$0xff]
    %v257 = vld [vmem:[#allocation2 + $0x290] sm:$0xff]
    %v258 = vld [vmem:[#allocation2 + $0x298] sm:$0xff]
    %v259 = vld [vmem:[#allocation2 + $0x2a0] sm:$0xff]
    %v260 = vld [vmem:[#allocation2 + $0x2a8] sm:$0xff]
    %v261 = vld [vmem:[#allocation2 + $0x2b0] sm:$0xff]
    %v262 = vld [vmem:[#allocation2 + $0x2b8] sm:$0xff]
    %v263 = vld [vmem:[#allocation2 + $0x2c0] sm:$0xff]
    %v264 = vld [vmem:[#allocation2 + $0x2c8] sm:$0xff]
    %v265 = vld [vmem:[#allocation2 + $0x2d0] sm:$0xff]
    %v266 = vld [vmem:[#allocation2 + $0x2d8] sm:$0xff]
    %v267 = vld [vmem:[#allocation2 + $0x2e0] sm:$0xff]
    %v268 = vld [vmem:[#allocation2 + $0x2e8] sm:$0xff]
    %v269 = vld [vmem:[#allocation2 + $0x2f0] sm:$0xff]
    %v270 = vld [vmem:[#allocation2 + $0x2f8] sm:$0xff]
    %v271 = vld [vmem:[#allocation2 + $0x300] sm:$0xff]
    %v272 = vld [vmem:[#allocation2 + $0x308] sm:$0xff]
    %v273 = vld [vmem:[#allocation2 + $0x310] sm:$0xff]
    %v274 = vld [vmem:[#allocation2 + $0x318] sm:$0xff]
    %v275 = vld [vmem:[#allocation2 + $0x320] sm:$0xff]
    %v276 = vld [vmem:[#allocation2 + $0x328] sm:$0xff]
    %v277 = vld [vmem:[#allocation2 + $0x330] sm:$0xff]
    %v278 = vld [vmem:[#allocation2 + $0x338] sm:$0xff]
    %v279 = vld [vmem:[#allocation2 + $0x340] sm:$0xff]
    %v280 = vld [vmem:[#allocation2 + $0x348] sm:$0xff]
    %v281 = vld [vmem:[#allocation2 + $0x350] sm:$0xff]
    %v282 = vld [vmem:[#allocation2 + $0x358] sm:$0xff]
    %v283 = vld [vmem:[#allocation2 + $0x360] sm:$0xff]
    %v284 = vld [vmem:[#allocation2 + $0x368] sm:$0xff]
    %v285 = vld [vmem:[#allocation2 + $0x370] sm:$0xff]
    %v286 = vld [vmem:[#allocation2 + $0x378] sm:$0xff]
    %v287 = vld [vmem:[#allocation2 + $0x380] sm:$0xff]
    %v288 = vld [vmem:[#allocation2 + $0x388] sm:$0xff]
    %v289 = vld [vmem:[#allocation2 + $0x390] sm:$0xff]
    %v290 = vld [vmem:[#allocation2 + $0x398] sm:$0xff]
    %v291 = vld [vmem:[#allocation2 + $0x3a0] sm:$0xff]
    %v292 = vld [vmem:[#allocation2 + $0x3a8] sm:$0xff]
    %v293 = vld [vmem:[#allocation2 + $0x3b0] sm:$0xff]
    %v294 = vld [vmem:[#allocation2 + $0x3b8] sm:$0xff]
    %v295 = vld [vmem:[#allocation2 + $0x3c0] sm:$0xff]
    %v296 = vld [vmem:[#allocation2 + $0x3c8] sm:$0xff]
    %v297 = vld [vmem:[#allocation2 + $0x3d0] sm:$0xff]
    %v298 = vld [vmem:[#allocation2 + $0x3d8] sm:$0xff]
    %v299 = vld [vmem:[#allocation2 + $0x3e0] sm:$0xff]
    %v300 = vld [vmem:[#allocation2 + $0x3e8] sm:$0xff]
    %v301 = vld [vmem:[#allocation2 + $0x3f0] sm:$0xff]
    %v302 = vld [vmem:[#allocation2 + $0x3f8] sm:$0xff]
    %v303 = vld [vmem:[#allocation2 + $0x400] sm:$0xff]
    %v304 = vld [vmem:[#allocation2 + $0x408] sm:$0xff]
    %v305 = vld [vmem:[#allocation2 + $0x410] sm:$0xff]
    %v306 = vld [vmem:[#allocation2 + $0x418] sm:$0xff]
    %v307 = vld [vmem:[#allocation2 + $0x420] sm:$0xff]
    %v308 = vld [vmem:[#allocation2 + $0x428] sm:$0xff]
    %v309 = vld [vmem:[#allocation2 + $0x430] sm:$0xff]
    %v310 = vld [vmem:[#allocation2 + $0x438] sm:$0xff]
    %v311 = vld [vmem:[#allocation2 + $0x440] sm:$0xff]
    %v312 = vld [vmem:[#allocation2 + $0x448] sm:$0xff]
    %v313 = vld [vmem:[#allocation2 + $0x450] sm:$0xff]
    %v314 = vld [vmem:[#allocation2 + $0x458] sm:$0xff]
    %v315 = vld [vmem:[#allocation2 + $0x460] sm:$0xff]
    %v316 = vld [vmem:[#allocation2 + $0x468] sm:$0xff]
    %v317 = vld [vmem:[#allocation2 + $0x470] sm:$0xff]
    %v318 = vld [vmem:[#allocation2 + $0x478] sm:$0xff]
    %v319 = vld [vmem:[#allocation2 + $0x480] sm:$0xff]
    %v320 = vld [vmem:[#allocation2 + $0x488] sm:$0xff]
    %v321 = vld [vmem:[#allocation2 + $0x490] sm:$0xff]
    %v322 = vld [vmem:[#allocation2 + $0x498] sm:$0xff]
    %v323 = vld [vmem:[#allocation2 + $0x4a0] sm:$0xff]
    %v324 = vld [vmem:[#allocation2 + $0x4a8] sm:$0xff]
    %v325 = vld [vmem:[#allocation2 + $0x4b0] sm:$0xff]
    %v326 = vld [vmem:[#allocation2 + $0x4b8] sm:$0xff]
    %v327 = vld [vmem:[#allocation2 + $0x4c0] sm:$0xff]
    %v328 = vld [vmem:[#allocation2 + $0x4c8] sm:$0xff]
    %v329 = vld [vmem:[#allocation2 + $0x4d0] sm:$0xff]
    %v330 = vld [vmem:[#allocation2 + $0x4d8] sm:$0xff]
    %v331 = vld [vmem:[#allocation2 + $0x4e0] sm:$0xff]
    %v332 = vld [vmem:[#allocation2 + $0x4e8] sm:$0xff]
    %v333 = vld [vmem:[#allocation2 + $0x4f0] sm:$0xff]
    %v334 = vld [vmem:[#allocation2 + $0x4f8] sm:$0xff]
    %v335 = vld [vmem:[#allocation2 + $0x500] sm:$0xff]
    %v336 = vld [vmem:[#allocation2 + $0x508] sm:$0xff]
    %v337 = vld [vmem:[#allocation2 + $0x510] sm:$0xff]
    %v338 = vld [vmem:[#allocation2 + $0x518] sm:$0xff]
    %v339 = vld [vmem:[#allocation2 + $0x520] sm:$0xff]
    %v340 = vld [vmem:[#allocation2 + $0x528] sm:$0xff]
    %v341 = vld [vmem:[#allocation2 + $0x530] sm:$0xff]
    %v342 = vld [vmem:[#allocation2 + $0x538] sm:$0xff]
    %v343 = vld [vmem:[#allocation2 + $0x540] sm:$0xff]
    %v344 = vld [vmem:[#allocation2 + $0x548] sm:$0xff]
    %v345 = vld [vmem:[#allocation2 + $0x550] sm:$0xff]
    %v346 = vld [vmem:[#allocation2 + $0x558] sm:$0xff]
    %v347 = vld [vmem:[#allocation2 + $0x560] sm:$0xff]
    %v348 = vld [vmem:[#allocation2 + $0x568] sm:$0xff]
    %v349 = vld [vmem:[#allocation2 + $0x570] sm:$0xff]
    %v350 = vld [vmem:[#allocation2 + $0x578] sm:$0xff]
    %v351 = vld [vmem:[#allocation2 + $0x580] sm:$0xff]
    %v352 = vld [vmem:[#allocation2 + $0x588] sm:$0xff]
    %v353 = vld [vmem:[#allocation2 + $0x590] sm:$0xff]
    %v354 = vld [vmem:[#allocation2 + $0x598] sm:$0xff]
    %v355 = vld [vmem:[#allocation2 + $0x5a0] sm:$0xff]
    %v356 = vld [vmem:[#allocation2 + $0x5a8] sm:$0xff]
    %v357 = vld [vmem:[#allocation2 + $0x5b0] sm:$0xff]
    %v358 = vld [vmem:[#allocation2 + $0x5b8] sm:$0xff]
    %v359 = vld [vmem:[#allocation2 + $0x5c0] sm:$0xff]
    %v360 = vld [vmem:[#allocation2 + $0x5c8] sm:$0xff]
    %v361 = vld [vmem:[#allocation2 + $0x5d0] sm:$0xff]
    %v362 = vld [vmem:[#allocation2 + $0x5d8] sm:$0xff]
    %v363 = vld [vmem:[#allocation2 + $0x5e0] sm:$0xff]
    %v364 = vld [vmem:[#allocation2 + $0x5e8] sm:$0xff]
    %v365 = vld [vmem:[#allocation2 + $0x5f0] sm:$0xff]
    %v366 = vld [vmem:[#allocation2 + $0x5f8] sm:$0xff]
    %v367 = vld [vmem:[#allocation2 + $0x600] sm:$0xff]
    %v368 = vld [vmem:[#allocation2 + $0x608] sm:$0xff]
    %v369 = vld [vmem:[#allocation2 + $0x610] sm:$0xff]
    %v370 = vld [vmem:[#allocation2 + $0x618] sm:$0xff]
    %v371 = vld [vmem:[#allocation2 + $0x620] sm:$0xff]
    %v372 = vld [vmem:[#allocation2 + $0x628] sm:$0xff]
    %v373 = vld [vmem:[#allocation2 + $0x630] sm:$0xff]
    %v374 = vld [vmem:[#allocation2 + $0x638] sm:$0xff]
    %v375 = vld [vmem:[#allocation2 + $0x640] sm:$0xff]
    %v376 = vld [vmem:[#allocation2 + $0x648] sm:$0xff]
    %v377 = vld [vmem:[#allocation2 + $0x650] sm:$0xff]
    %v378 = vld [vmem:[#allocation2 + $0x658] sm:$0xff]
    %v379 = vld [vmem:[#allocation2 + $0x660] sm:$0xff]
    %v380 = vld [vmem:[#allocation2 + $0x668] sm:$0xff]
    %v381 = vld [vmem:[#allocation2 + $0x670] sm:$0xff]
    %v382 = vld [vmem:[#allocation2 + $0x678] sm:$0xff]
    %v383 = vld [vmem:[#allocation2 + $0x680] sm:$0xff]
    %v384 = vld [vmem:[#allocation2 + $0x688] sm:$0xff]
    %v385 = vld [vmem:[#allocation2 + $0x690] sm:$0xff]
    %v386 = vld [vmem:[#allocation2 + $0x698] sm:$0xff]
    %v387 = vld [vmem:[#allocation2 + $0x6a0] sm:$0xff]
    %v388 = vld [vmem:[#allocation2 + $0x6a8] sm:$0xff]
    %v389 = vld [vmem:[#allocation2 + $0x6b0] sm:$0xff]
    %v390 = vld [vmem:[#allocation2 + $0x6b8] sm:$0xff]
    %v391 = vld [vmem:[#allocation2 + $0x6c0] sm:$0xff]
    %v392 = vld [vmem:[#allocation2 + $0x6c8] sm:$0xff]
    %v393 = vld [vmem:[#allocation2 + $0x6d0] sm:$0xff]
    %v394 = vld [vmem:[#allocation2 + $0x6d8] sm:$0xff]
    %v395 = vld [vmem:[#allocation2 + $0x6e0] sm:$0xff]
    %v396 = vld [vmem:[#allocation2 + $0x6e8] sm:$0xff]
    %v397 = vld [vmem:[#allocation2 + $0x6f0] sm:$0xff]
    %v398 = vld [vmem:[#allocation2 + $0x6f8] sm:$0xff]
    %v399 = vld [vmem:[#allocation2 + $0x700] sm:$0xff]
    %v400 = vld [vmem:[#allocation2 + $0x708] sm:$0xff]
    %v401 = vld [vmem:[#allocation2 + $0x710] sm:$0xff]
    %v402 = vld [vmem:[#allocation2 + $0x718] sm:$0xff]
    %v403 = vld [vmem:[#allocation2 + $0x720] sm:$0xff]
    %v404 = vld [vmem:[#allocation2 + $0x728] sm:$0xff]
    %v405 = vld [vmem:[#allocation2 + $0x730] sm:$0xff]
    %v406 = vld [vmem:[#allocation2 + $0x738] sm:$0xff]
    %v407 = vld [vmem:[#allocation2 + $0x740] sm:$0xff]
    %v408 = vld [vmem:[#allocation2 + $0x748] sm:$0xff]
    %v409 = vld [vmem:[#allocation2 + $0x750] sm:$0xff]
    %v410 = vld [vmem:[#allocation2 + $0x758] sm:$0xff]
    %v411 = vld [vmem:[#allocation2 + $0x760] sm:$0xff]
    %v412 = vld [vmem:[#allocation2 + $0x768] sm:$0xff]
    %v413 = vld [vmem:[#allocation2 + $0x770] sm:$0xff]
    %v414 = vld [vmem:[#allocation2 + $0x778] sm:$0xff]
    %v415 = vld [vmem:[#allocation2 + $0x780] sm:$0xff]
    %v416 = vld [vmem:[#allocation2 + $0x788] sm:$0xff]
    %v417 = vld [vmem:[#allocation2 + $0x790] sm:$0xff]
    %v418 = vld [vmem:[#allocation2 + $0x798] sm:$0xff]
    %v419 = vld [vmem:[#allocation2 + $0x7a0] sm:$0xff]
    %v420 = vld [vmem:[#allocation2 + $0x7a8] sm:$0xff]
    %v421 = vld [vmem:[#allocation2 + $0x7b0] sm:$0xff]
    %v422 = vld [vmem:[#allocation2 + $0x7b8] sm:$0xff]
    %v423 = vld [vmem:[#allocation2 + $0x7c0] sm:$0xff]
    %v424 = vld [vmem:[#allocation2 + $0x7c8] sm:$0xff]
    %v425 = vld [vmem:[#allocation2 + $0x7d0] sm:$0xff]
    %v426 = vld [vmem:[#allocation2 + $0x7d8] sm:$0xff]
    %v427 = vld [vmem:[#allocation2 + $0x7e0] sm:$0xff]
    %v428 = vld [vmem:[#allocation2 + $0x7e8] sm:$0xff]
    %v429 = vld [vmem:[#allocation2 + $0x7f0] sm:$0xff]
    %v430 = vld [vmem:[#allocation2 + $0x7f8] sm:$0xff]
    %v431 = vld [vmem:[%s3] sm:$0xf]
    %v433 = vlaneseq
    %v434 = vshrl.u32 %v433, 7
    %v435 = vsub.s32 0, %v434
    %v436 = vrot.slane %v431, %v435
    %v437 = vlaneseq
    %v438 = vshrl.u32 %v437, 7
    %v439 = vsub.s32 1, %v438
    %v440 = vrot.slane %v431, %v439
    %v441 = vlaneseq
    %v442 = vshrl.u32 %v441, 7
    %v443 = vsub.s32 2, %v442
    %v444 = vrot.slane %v431, %v443
    %v445 = vlaneseq
    %v446 = vshrl.u32 %v445, 7
    %v447 = vsub.s32 3, %v446
    %v448 = vrot.slane %v431, %v447
    %v709 = vunpack.c.l.b16 %v175
    %v710 = vunpack.c.h.b16 %v175
    %v711 = vunpack.c.l.b16 %v176
    %v712 = vunpack.c.h.b16 %v176
    %v713 = vunpack.c.l.b16 %v177
    %v714 = vunpack.c.h.b16 %v177
    %v715 = vunpack.c.l.b16 %v178
    %v716 = vunpack.c.h.b16 %v178
    %v717 = vunpack.c.l.b16 %v179
    %v718 = vunpack.c.h.b16 %v179
    %v719 = vunpack.c.l.b16 %v180
    %v720 = vunpack.c.h.b16 %v180
    %v721 = vunpack.c.l.b16 %v181
    %v722 = vunpack.c.h.b16 %v181
    %v723 = vunpack.c.l.b16 %v182
    %v724 = vunpack.c.h.b16 %v182
    %v725 = vunpack.c.l.b16 %v183
    %v726 = vunpack.c.h.b16 %v183
    %v727 = vunpack.c.l.b16 %v184
    %v728 = vunpack.c.h.b16 %v184
    %v729 = vunpack.c.l.b16 %v185
    %v730 = vunpack.c.h.b16 %v185
    %v731 = vunpack.c.l.b16 %v186
    %v732 = vunpack.c.h.b16 %v186
    %v733 = vunpack.c.l.b16 %v187
    %v734 = vunpack.c.h.b16 %v187
    %v735 = vunpack.c.l.b16 %v188
    %v736 = vunpack.c.h.b16 %v188
    %v737 = vunpack.c.l.b16 %v189
    %v738 = vunpack.c.h.b16 %v189
    %v739 = vunpack.c.l.b16 %v190
    %v740 = vunpack.c.h.b16 %v190
    %v741 = vunpack.c.l.b16 %v191
    %v742 = vunpack.c.h.b16 %v191
    %v743 = vunpack.c.l.b16 %v192
    %v744 = vunpack.c.h.b16 %v192
    %v745 = vunpack.c.l.b16 %v193
    %v746 = vunpack.c.h.b16 %v193
    %v747 = vunpack.c.l.b16 %v194
    %v748 = vunpack.c.h.b16 %v194
    %v749 = vunpack.c.l.b16 %v195
    %v750 = vunpack.c.h.b16 %v195
    %v751 = vunpack.c.l.b16 %v196
    %v752 = vunpack.c.h.b16 %v196
    %v753 = vunpack.c.l.b16 %v197
    %v754 = vunpack.c.h.b16 %v197
    %v755 = vunpack.c.l.b16 %v198
    %v756 = vunpack.c.h.b16 %v198
    %v757 = vunpack.c.l.b16 %v199
    %v758 = vunpack.c.h.b16 %v199
    %v759 = vunpack.c.l.b16 %v200
    %v760 = vunpack.c.h.b16 %v200
    %v761 = vunpack.c.l.b16 %v201
    %v762 = vunpack.c.h.b16 %v201
    %v763 = vunpack.c.l.b16 %v202
    %v764 = vunpack.c.h.b16 %v202
    %v765 = vunpack.c.l.b16 %v203
    %v766 = vunpack.c.h.b16 %v203
    %v767 = vunpack.c.l.b16 %v204
    %v768 = vunpack.c.h.b16 %v204
    %v769 = vunpack.c.l.b16 %v205
    %v770 = vunpack.c.h.b16 %v205
    %v771 = vunpack.c.l.b16 %v206
    %v772 = vunpack.c.h.b16 %v206
    %v773 = vunpack.c.l.b16 %v207
    %v774 = vunpack.c.h.b16 %v207
    %v775 = vunpack.c.l.b16 %v208
    %v776 = vunpack.c.h.b16 %v208
    %v777 = vunpack.c.l.b16 %v209
    %v778 = vunpack.c.h.b16 %v209
    %v779 = vunpack.c.l.b16 %v210
    %v780 = vunpack.c.h.b16 %v210
    %v781 = vunpack.c.l.b16 %v211
    %v782 = vunpack.c.h.b16 %v211
    %v783 = vunpack.c.l.b16 %v212
    %v784 = vunpack.c.h.b16 %v212
    %v785 = vunpack.c.l.b16 %v213
    %v786 = vunpack.c.h.b16 %v213
    %v787 = vunpack.c.l.b16 %v214
    %v788 = vunpack.c.h.b16 %v214
    %v789 = vunpack.c.l.b16 %v215
    %v790 = vunpack.c.h.b16 %v215
    %v791 = vunpack.c.l.b16 %v216
    %v792 = vunpack.c.h.b16 %v216
    %v793 = vunpack.c.l.b16 %v217
    %v794 = vunpack.c.h.b16 %v217
    %v795 = vunpack.c.l.b16 %v218
    %v796 = vunpack.c.h.b16 %v218
    %v797 = vunpack.c.l.b16 %v219
    %v798 = vunpack.c.h.b16 %v219
    %v799 = vunpack.c.l.b16 %v220
    %v800 = vunpack.c.h.b16 %v220
    %v801 = vunpack.c.l.b16 %v221
    %v802 = vunpack.c.h.b16 %v221
    %v803 = vunpack.c.l.b16 %v222
    %v804 = vunpack.c.h.b16 %v222
    %v805 = vunpack.c.l.b16 %v223
    %v806 = vunpack.c.h.b16 %v223
    %v807 = vunpack.c.l.b16 %v224
    %v808 = vunpack.c.h.b16 %v224
    %v809 = vunpack.c.l.b16 %v225
    %v810 = vunpack.c.h.b16 %v225
    %v811 = vunpack.c.l.b16 %v226
    %v812 = vunpack.c.h.b16 %v226
    %v813 = vunpack.c.l.b16 %v227
    %v814 = vunpack.c.h.b16 %v227
    %v815 = vunpack.c.l.b16 %v228
    %v816 = vunpack.c.h.b16 %v228
    %v817 = vunpack.c.l.b16 %v229
    %v818 = vunpack.c.h.b16 %v229
    %v819 = vunpack.c.l.b16 %v230
    %v820 = vunpack.c.h.b16 %v230
    %v821 = vunpack.c.l.b16 %v231
    %v822 = vunpack.c.h.b16 %v231
    %v823 = vunpack.c.l.b16 %v232
    %v824 = vunpack.c.h.b16 %v232
    %v825 = vunpack.c.l.b16 %v233
    %v826 = vunpack.c.h.b16 %v233
    %v827 = vunpack.c.l.b16 %v234
    %v828 = vunpack.c.h.b16 %v234
    %v829 = vunpack.c.l.b16 %v235
    %v830 = vunpack.c.h.b16 %v235
    %v831 = vunpack.c.l.b16 %v236
    %v832 = vunpack.c.h.b16 %v236
    %v833 = vunpack.c.l.b16 %v237
    %v834 = vunpack.c.h.b16 %v237
    %v835 = vunpack.c.l.b16 %v238
    %v836 = vunpack.c.h.b16 %v238
    %v837 = vunpack.c.l.b16 %v239
    %v838 = vunpack.c.h.b16 %v239
    %v839 = vunpack.c.l.b16 %v240
    %v840 = vunpack.c.h.b16 %v240
    %v841 = vunpack.c.l.b16 %v241
    %v842 = vunpack.c.h.b16 %v241
    %v843 = vunpack.c.l.b16 %v242
    %v844 = vunpack.c.h.b16 %v242
    %v845 = vunpack.c.l.b16 %v243
    %v846 = vunpack.c.h.b16 %v243
    %v847 = vunpack.c.l.b16 %v244
    %v848 = vunpack.c.h.b16 %v244
    %v849 = vunpack.c.l.b16 %v245
    %v850 = vunpack.c.h.b16 %v245
    %v851 = vunpack.c.l.b16 %v246
    %v852 = vunpack.c.h.b16 %v246
    %v853 = vunpack.c.l.b16 %v247
    %v854 = vunpack.c.h.b16 %v247
    %v855 = vunpack.c.l.b16 %v248
    %v856 = vunpack.c.h.b16 %v248
    %v857 = vunpack.c.l.b16 %v249
    %v858 = vunpack.c.h.b16 %v249
    %v859 = vunpack.c.l.b16 %v250
    %v860 = vunpack.c.h.b16 %v250
    %v861 = vunpack.c.l.b16 %v251
    %v862 = vunpack.c.h.b16 %v251
    %v863 = vunpack.c.l.b16 %v252
    %v864 = vunpack.c.h.b16 %v252
    %v865 = vunpack.c.l.b16 %v253
    %v866 = vunpack.c.h.b16 %v253
    %v867 = vunpack.c.l.b16 %v254
    %v868 = vunpack.c.h.b16 %v254
    %v869 = vunpack.c.l.b16 %v255
    %v870 = vunpack.c.h.b16 %v255
    %v871 = vunpack.c.l.b16 %v256
    %v872 = vunpack.c.h.b16 %v256
    %v873 = vunpack.c.l.b16 %v257
    %v874 = vunpack.c.h.b16 %v257
    %v875 = vunpack.c.l.b16 %v258
    %v876 = vunpack.c.h.b16 %v258
    %v877 = vunpack.c.l.b16 %v259
    %v878 = vunpack.c.h.b16 %v259
    %v879 = vunpack.c.l.b16 %v260
    %v880 = vunpack.c.h.b16 %v260
    %v881 = vunpack.c.l.b16 %v261
    %v882 = vunpack.c.h.b16 %v261
    %v883 = vunpack.c.l.b16 %v262
    %v884 = vunpack.c.h.b16 %v262
    %v885 = vunpack.c.l.b16 %v263
    %v886 = vunpack.c.h.b16 %v263
    %v887 = vunpack.c.l.b16 %v264
    %v888 = vunpack.c.h.b16 %v264
    %v889 = vunpack.c.l.b16 %v265
    %v890 = vunpack.c.h.b16 %v265
    %v891 = vunpack.c.l.b16 %v266
    %v892 = vunpack.c.h.b16 %v266
    %v893 = vunpack.c.l.b16 %v267
    %v894 = vunpack.c.h.b16 %v267
    %v895 = vunpack.c.l.b16 %v268
    %v896 = vunpack.c.h.b16 %v268
    %v897 = vunpack.c.l.b16 %v269
    %v898 = vunpack.c.h.b16 %v269
    %v899 = vunpack.c.l.b16 %v270
    %v900 = vunpack.c.h.b16 %v270
    %v901 = vunpack.c.l.b16 %v271
    %v902 = vunpack.c.h.b16 %v271
    %v903 = vunpack.c.l.b16 %v272
    %v904 = vunpack.c.h.b16 %v272
    %v905 = vunpack.c.l.b16 %v273
    %v906 = vunpack.c.h.b16 %v273
    %v907 = vunpack.c.l.b16 %v274
    %v908 = vunpack.c.h.b16 %v274
    %v909 = vunpack.c.l.b16 %v275
    %v910 = vunpack.c.h.b16 %v275
    %v911 = vunpack.c.l.b16 %v276
    %v912 = vunpack.c.h.b16 %v276
    %v913 = vunpack.c.l.b16 %v277
    %v914 = vunpack.c.h.b16 %v277
    %v915 = vunpack.c.l.b16 %v278
    %v916 = vunpack.c.h.b16 %v278
    %v917 = vunpack.c.l.b16 %v279
    %v918 = vunpack.c.h.b16 %v279
    %v919 = vunpack.c.l.b16 %v280
    %v920 = vunpack.c.h.b16 %v280
    %v921 = vunpack.c.l.b16 %v281
    %v922 = vunpack.c.h.b16 %v281
    %v923 = vunpack.c.l.b16 %v282
    %v924 = vunpack.c.h.b16 %v282
    %v925 = vunpack.c.l.b16 %v283
    %v926 = vunpack.c.h.b16 %v283
    %v927 = vunpack.c.l.b16 %v284
    %v928 = vunpack.c.h.b16 %v284
    %v929 = vunpack.c.l.b16 %v285
    %v930 = vunpack.c.h.b16 %v285
    %v931 = vunpack.c.l.b16 %v286
    %v932 = vunpack.c.h.b16 %v286
    %v933 = vunpack.c.l.b16 %v287
    %v934 = vunpack.c.h.b16 %v287
    %v935 = vunpack.c.l.b16 %v288
    %v936 = vunpack.c.h.b16 %v288
    %v937 = vunpack.c.l.b16 %v289
    %v938 = vunpack.c.h.b16 %v289
    %v939 = vunpack.c.l.b16 %v290
    %v940 = vunpack.c.h.b16 %v290
    %v941 = vunpack.c.l.b16 %v291
    %v942 = vunpack.c.h.b16 %v291
    %v943 = vunpack.c.l.b16 %v292
    %v944 = vunpack.c.h.b16 %v292
    %v945 = vunpack.c.l.b16 %v293
    %v946 = vunpack.c.h.b16 %v293
    %v947 = vunpack.c.l.b16 %v294
    %v948 = vunpack.c.h.b16 %v294
    %v949 = vunpack.c.l.b16 %v295
    %v950 = vunpack.c.h.b16 %v295
    %v951 = vunpack.c.l.b16 %v296
    %v952 = vunpack.c.h.b16 %v296
    %v953 = vunpack.c.l.b16 %v297
    %v954 = vunpack.c.h.b16 %v297
    %v955 = vunpack.c.l.b16 %v298
    %v956 = vunpack.c.h.b16 %v298
    %v957 = vunpack.c.l.b16 %v299
    %v958 = vunpack.c.h.b16 %v299
    %v959 = vunpack.c.l.b16 %v300
    %v960 = vunpack.c.h.b16 %v300
    %v961 = vunpack.c.l.b16 %v301
    %v962 = vunpack.c.h.b16 %v301
    %v963 = vunpack.c.l.b16 %v302
    %v964 = vunpack.c.h.b16 %v302
    %v965 = vunpack.c.l.b16 %v303
    %v966 = vunpack.c.h.b16 %v303
    %v967 = vunpack.c.l.b16 %v304
    %v968 = vunpack.c.h.b16 %v304
    %v969 = vunpack.c.l.b16 %v305
    %v970 = vunpack.c.h.b16 %v305
    %v971 = vunpack.c.l.b16 %v306
    %v972 = vunpack.c.h.b16 %v306
    %v973 = vunpack.c.l.b16 %v307
    %v974 = vunpack.c.h.b16 %v307
    %v975 = vunpack.c.l.b16 %v308
    %v976 = vunpack.c.h.b16 %v308
    %v977 = vunpack.c.l.b16 %v309
    %v978 = vunpack.c.h.b16 %v309
    %v979 = vunpack.c.l.b16 %v310
    %v980 = vunpack.c.h.b16 %v310
    %v981 = vunpack.c.l.b16 %v311
    %v982 = vunpack.c.h.b16 %v311
    %v983 = vunpack.c.l.b16 %v312
    %v984 = vunpack.c.h.b16 %v312
    %v985 = vunpack.c.l.b16 %v313
    %v986 = vunpack.c.h.b16 %v313
    %v987 = vunpack.c.l.b16 %v314
    %v988 = vunpack.c.h.b16 %v314
    %v989 = vunpack.c.l.b16 %v315
    %v990 = vunpack.c.h.b16 %v315
    %v991 = vunpack.c.l.b16 %v316
    %v992 = vunpack.c.h.b16 %v316
    %v993 = vunpack.c.l.b16 %v317
    %v994 = vunpack.c.h.b16 %v317
    %v995 = vunpack.c.l.b16 %v318
    %v996 = vunpack.c.h.b16 %v318
    %v997 = vunpack.c.l.b16 %v319
    %v998 = vunpack.c.h.b16 %v319
    %v999 = vunpack.c.l.b16 %v320
    %v1000 = vunpack.c.h.b16 %v320
    %v1001 = vunpack.c.l.b16 %v321
    %v1002 = vunpack.c.h.b16 %v321
    %v1003 = vunpack.c.l.b16 %v322
    %v1004 = vunpack.c.h.b16 %v322
    %v1005 = vunpack.c.l.b16 %v323
    %v1006 = vunpack.c.h.b16 %v323
    %v1007 = vunpack.c.l.b16 %v324
    %v1008 = vunpack.c.h.b16 %v324
    %v1009 = vunpack.c.l.b16 %v325
    %v1010 = vunpack.c.h.b16 %v325
    %v1011 = vunpack.c.l.b16 %v326
    %v1012 = vunpack.c.h.b16 %v326
    %v1013 = vunpack.c.l.b16 %v327
    %v1014 = vunpack.c.h.b16 %v327
    %v1015 = vunpack.c.l.b16 %v328
    %v1016 = vunpack.c.h.b16 %v328
    %v1017 = vunpack.c.l.b16 %v329
    %v1018 = vunpack.c.h.b16 %v329
    %v1019 = vunpack.c.l.b16 %v330
    %v1020 = vunpack.c.h.b16 %v330
    %v1021 = vunpack.c.l.b16 %v331
    %v1022 = vunpack.c.h.b16 %v331
    %v1023 = vunpack.c.l.b16 %v332
    %v1024 = vunpack.c.h.b16 %v332
    %v1025 = vunpack.c.l.b16 %v333
    %v1026 = vunpack.c.h.b16 %v333
    %v1027 = vunpack.c.l.b16 %v334
    %v1028 = vunpack.c.h.b16 %v334
    %v1029 = vunpack.c.l.b16 %v335
    %v1030 = vunpack.c.h.b16 %v335
    %v1031 = vunpack.c.l.b16 %v336
    %v1032 = vunpack.c.h.b16 %v336
    %v1033 = vunpack.c.l.b16 %v337
    %v1034 = vunpack.c.h.b16 %v337
    %v1035 = vunpack.c.l.b16 %v338
    %v1036 = vunpack.c.h.b16 %v338
    %v1037 = vunpack.c.l.b16 %v339
    %v1038 = vunpack.c.h.b16 %v339
    %v1039 = vunpack.c.l.b16 %v340
    %v1040 = vunpack.c.h.b16 %v340
    %v1041 = vunpack.c.l.b16 %v341
    %v1042 = vunpack.c.h.b16 %v341
    %v1043 = vunpack.c.l.b16 %v342
    %v1044 = vunpack.c.h.b16 %v342
    %v1045 = vunpack.c.l.b16 %v343
    %v1046 = vunpack.c.h.b16 %v343
    %v1047 = vunpack.c.l.b16 %v344
    %v1048 = vunpack.c.h.b16 %v344
    %v1049 = vunpack.c.l.b16 %v345
    %v1050 = vunpack.c.h.b16 %v345
    %v1051 = vunpack.c.l.b16 %v346
    %v1052 = vunpack.c.h.b16 %v346
    %v1053 = vunpack.c.l.b16 %v347
    %v1054 = vunpack.c.h.b16 %v347
    %v1055 = vunpack.c.l.b16 %v348
    %v1056 = vunpack.c.h.b16 %v348
    %v1057 = vunpack.c.l.b16 %v349
    %v1058 = vunpack.c.h.b16 %v349
    %v1059 = vunpack.c.l.b16 %v350
    %v1060 = vunpack.c.h.b16 %v350
    %v1061 = vunpack.c.l.b16 %v351
    %v1062 = vunpack.c.h.b16 %v351
    %v1063 = vunpack.c.l.b16 %v352
    %v1064 = vunpack.c.h.b16 %v352
    %v1065 = vunpack.c.l.b16 %v353
    %v1066 = vunpack.c.h.b16 %v353
    %v1067 = vunpack.c.l.b16 %v354
    %v1068 = vunpack.c.h.b16 %v354
    %v1069 = vunpack.c.l.b16 %v355
    %v1070 = vunpack.c.h.b16 %v355
    %v1071 = vunpack.c.l.b16 %v356
    %v1072 = vunpack.c.h.b16 %v356
    %v1073 = vunpack.c.l.b16 %v357
    %v1074 = vunpack.c.h.b16 %v357
    %v1075 = vunpack.c.l.b16 %v358
    %v1076 = vunpack.c.h.b16 %v358
    %v1077 = vunpack.c.l.b16 %v359
    %v1078 = vunpack.c.h.b16 %v359
    %v1079 = vunpack.c.l.b16 %v360
    %v1080 = vunpack.c.h.b16 %v360
    %v1081 = vunpack.c.l.b16 %v361
    %v1082 = vunpack.c.h.b16 %v361
    %v1083 = vunpack.c.l.b16 %v362
    %v1084 = vunpack.c.h.b16 %v362
    %v1085 = vunpack.c.l.b16 %v363
    %v1086 = vunpack.c.h.b16 %v363
    %v1087 = vunpack.c.l.b16 %v364
    %v1088 = vunpack.c.h.b16 %v364
    %v1089 = vunpack.c.l.b16 %v365
    %v1090 = vunpack.c.h.b16 %v365
    %v1091 = vunpack.c.l.b16 %v366
    %v1092 = vunpack.c.h.b16 %v366
    %v1093 = vunpack.c.l.b16 %v367
    %v1094 = vunpack.c.h.b16 %v367
    %v1095 = vunpack.c.l.b16 %v368
    %v1096 = vunpack.c.h.b16 %v368
    %v1097 = vunpack.c.l.b16 %v369
    %v1098 = vunpack.c.h.b16 %v369
    %v1099 = vunpack.c.l.b16 %v370
    %v1100 = vunpack.c.h.b16 %v370
    %v1101 = vunpack.c.l.b16 %v371
    %v1102 = vunpack.c.h.b16 %v371
    %v1103 = vunpack.c.l.b16 %v372
    %v1104 = vunpack.c.h.b16 %v372
    %v1105 = vunpack.c.l.b16 %v373
    %v1106 = vunpack.c.h.b16 %v373
    %v1107 = vunpack.c.l.b16 %v374
    %v1108 = vunpack.c.h.b16 %v374
    %v1109 = vunpack.c.l.b16 %v375
    %v1110 = vunpack.c.h.b16 %v375
    %v1111 = vunpack.c.l.b16 %v376
    %v1112 = vunpack.c.h.b16 %v376
    %v1113 = vunpack.c.l.b16 %v377
    %v1114 = vunpack.c.h.b16 %v377
    %v1115 = vunpack.c.l.b16 %v378
    %v1116 = vunpack.c.h.b16 %v378
    %v1117 = vunpack.c.l.b16 %v379
    %v1118 = vunpack.c.h.b16 %v379
    %v1119 = vunpack.c.l.b16 %v380
    %v1120 = vunpack.c.h.b16 %v380
    %v1121 = vunpack.c.l.b16 %v381
    %v1122 = vunpack.c.h.b16 %v381
    %v1123 = vunpack.c.l.b16 %v382
    %v1124 = vunpack.c.h.b16 %v382
    %v1125 = vunpack.c.l.b16 %v383
    %v1126 = vunpack.c.h.b16 %v383
    %v1127 = vunpack.c.l.b16 %v384
    %v1128 = vunpack.c.h.b16 %v384
    %v1129 = vunpack.c.l.b16 %v385
    %v1130 = vunpack.c.h.b16 %v385
    %v1131 = vunpack.c.l.b16 %v386
    %v1132 = vunpack.c.h.b16 %v386
    %v1133 = vunpack.c.l.b16 %v387
    %v1134 = vunpack.c.h.b16 %v387
    %v1135 = vunpack.c.l.b16 %v388
    %v1136 = vunpack.c.h.b16 %v388
    %v1137 = vunpack.c.l.b16 %v389
    %v1138 = vunpack.c.h.b16 %v389
    %v1139 = vunpack.c.l.b16 %v390
    %v1140 = vunpack.c.h.b16 %v390
    %v1141 = vunpack.c.l.b16 %v391
    %v1142 = vunpack.c.h.b16 %v391
    %v1143 = vunpack.c.l.b16 %v392
    %v1144 = vunpack.c.h.b16 %v392
    %v1145 = vunpack.c.l.b16 %v393
    %v1146 = vunpack.c.h.b16 %v393
    %v1147 = vunpack.c.l.b16 %v394
    %v1148 = vunpack.c.h.b16 %v394
    %v1149 = vunpack.c.l.b16 %v395
    %v1150 = vunpack.c.h.b16 %v395
    %v1151 = vunpack.c.l.b16 %v396
    %v1152 = vunpack.c.h.b16 %v396
    %v1153 = vunpack.c.l.b16 %v397
    %v1154 = vunpack.c.h.b16 %v397
    %v1155 = vunpack.c.l.b16 %v398
    %v1156 = vunpack.c.h.b16 %v398
    %v1157 = vunpack.c.l.b16 %v399
    %v1158 = vunpack.c.h.b16 %v399
    %v1159 = vunpack.c.l.b16 %v400
    %v1160 = vunpack.c.h.b16 %v400
    %v1161 = vunpack.c.l.b16 %v401
    %v1162 = vunpack.c.h.b16 %v401
    %v1163 = vunpack.c.l.b16 %v402
    %v1164 = vunpack.c.h.b16 %v402
    %v1165 = vunpack.c.l.b16 %v403
    %v1166 = vunpack.c.h.b16 %v403
    %v1167 = vunpack.c.l.b16 %v404
    %v1168 = vunpack.c.h.b16 %v404
    %v1169 = vunpack.c.l.b16 %v405
    %v1170 = vunpack.c.h.b16 %v405
    %v1171 = vunpack.c.l.b16 %v406
    %v1172 = vunpack.c.h.b16 %v406
    %v1173 = vunpack.c.l.b16 %v407
    %v1174 = vunpack.c.h.b16 %v407
    %v1175 = vunpack.c.l.b16 %v408
    %v1176 = vunpack.c.h.b16 %v408
    %v1177 = vunpack.c.l.b16 %v409
    %v1178 = vunpack.c.h.b16 %v409
    %v1179 = vunpack.c.l.b16 %v410
    %v1180 = vunpack.c.h.b16 %v410
    %v1181 = vunpack.c.l.b16 %v411
    %v1182 = vunpack.c.h.b16 %v411
    %v1183 = vunpack.c.l.b16 %v412
    %v1184 = vunpack.c.h.b16 %v412
    %v1185 = vunpack.c.l.b16 %v413
    %v1186 = vunpack.c.h.b16 %v413
    %v1187 = vunpack.c.l.b16 %v414
    %v1188 = vunpack.c.h.b16 %v414
    %v1189 = vunpack.c.l.b16 %v415
    %v1190 = vunpack.c.h.b16 %v415
    %v1191 = vunpack.c.l.b16 %v416
    %v1192 = vunpack.c.h.b16 %v416
    %v1193 = vunpack.c.l.b16 %v417
    %v1194 = vunpack.c.h.b16 %v417
    %v1195 = vunpack.c.l.b16 %v418
    %v1196 = vunpack.c.h.b16 %v418
    %v1197 = vunpack.c.l.b16 %v419
    %v1198 = vunpack.c.h.b16 %v419
    %v1199 = vunpack.c.l.b16 %v420
    %v1200 = vunpack.c.h.b16 %v420
    %v1201 = vunpack.c.l.b16 %v421
    %v1202 = vunpack.c.h.b16 %v421
    %v1203 = vunpack.c.l.b16 %v422
    %v1204 = vunpack.c.h.b16 %v422
    %v1205 = vunpack.c.l.b16 %v423
    %v1206 = vunpack.c.h.b16 %v423
    %v1207 = vunpack.c.l.b16 %v424
    %v1208 = vunpack.c.h.b16 %v424
    %v1209 = vunpack.c.l.b16 %v425
    %v1210 = vunpack.c.h.b16 %v425
    %v1211 = vunpack.c.l.b16 %v426
    %v1212 = vunpack.c.h.b16 %v426
    %v1213 = vunpack.c.l.b16 %v427
    %v1214 = vunpack.c.h.b16 %v427
    %v1215 = vunpack.c.l.b16 %v428
    %v1216 = vunpack.c.h.b16 %v428
    %v1217 = vunpack.c.l.b16 %v429
    %v1218 = vunpack.c.h.b16 %v429
    %v1219 = vunpack.c.l.b16 %v430
    %v1220 = vunpack.c.h.b16 %v430
    %v1221 = vpack.c.b16 %v713, %v709
    %v1222 = vpack.c.b16 %v714, %v710
    %v1223 = vpack.c.b16 %v715, %v711
    %v1224 = vpack.c.b16 %v716, %v712
    %v1225 = vpack.c.b16 %v721, %v717
    %v1226 = vpack.c.b16 %v722, %v718
    %v1227 = vpack.c.b16 %v723, %v719
    %v1228 = vpack.c.b16 %v724, %v720
    %v1229 = vpack.c.b16 %v729, %v725
    %v1230 = vpack.c.b16 %v730, %v726
    %v1231 = vpack.c.b16 %v731, %v727
    %v1232 = vpack.c.b16 %v732, %v728
    %v1233 = vpack.c.b16 %v737, %v733
    %v1234 = vpack.c.b16 %v738, %v734
    %v1235 = vpack.c.b16 %v739, %v735
    %v1236 = vpack.c.b16 %v740, %v736
    %v1237 = vpack.c.b16 %v745, %v741
    %v1238 = vpack.c.b16 %v746, %v742
    %v1239 = vpack.c.b16 %v747, %v743
    %v1240 = vpack.c.b16 %v748, %v744
    %v1241 = vpack.c.b16 %v753, %v749
    %v1242 = vpack.c.b16 %v754, %v750
    %v1243 = vpack.c.b16 %v755, %v751
    %v1244 = vpack.c.b16 %v756, %v752
    %v1245 = vpack.c.b16 %v761, %v757
    %v1246 = vpack.c.b16 %v762, %v758
    %v1247 = vpack.c.b16 %v763, %v759
    %v1248 = vpack.c.b16 %v764, %v760
    %v1249 = vpack.c.b16 %v769, %v765
    %v1250 = vpack.c.b16 %v770, %v766
    %v1251 = vpack.c.b16 %v771, %v767
    %v1252 = vpack.c.b16 %v772, %v768
    %v1253 = vpack.c.b16 %v777, %v773
    %v1254 = vpack.c.b16 %v778, %v774
    %v1255 = vpack.c.b16 %v779, %v775
    %v1256 = vpack.c.b16 %v780, %v776
    %v1257 = vpack.c.b16 %v785, %v781
    %v1258 = vpack.c.b16 %v786, %v782
    %v1259 = vpack.c.b16 %v787, %v783
    %v1260 = vpack.c.b16 %v788, %v784
    %v1261 = vpack.c.b16 %v793, %v789
    %v1262 = vpack.c.b16 %v794, %v790
    %v1263 = vpack.c.b16 %v795, %v791
    %v1264 = vpack.c.b16 %v796, %v792
    %v1265 = vpack.c.b16 %v801, %v797
    %v1266 = vpack.c.b16 %v802, %v798
    %v1267 = vpack.c.b16 %v803, %v799
    %v1268 = vpack.c.b16 %v804, %v800
    %v1269 = vpack.c.b16 %v809, %v805
    %v1270 = vpack.c.b16 %v810, %v806
    %v1271 = vpack.c.b16 %v811, %v807
    %v1272 = vpack.c.b16 %v812, %v808
    %v1273 = vpack.c.b16 %v817, %v813
    %v1274 = vpack.c.b16 %v818, %v814
    %v1275 = vpack.c.b16 %v819, %v815
    %v1276 = vpack.c.b16 %v820, %v816
    %v1277 = vpack.c.b16 %v825, %v821
    %v1278 = vpack.c.b16 %v826, %v822
    %v1279 = vpack.c.b16 %v827, %v823
    %v1280 = vpack.c.b16 %v828, %v824
    %v1281 = vpack.c.b16 %v833, %v829
    %v1282 = vpack.c.b16 %v834, %v830
    %v1283 = vpack.c.b16 %v835, %v831
    %v1284 = vpack.c.b16 %v836, %v832
    %v1285 = vpack.c.b16 %v841, %v837
    %v1286 = vpack.c.b16 %v842, %v838
    %v1287 = vpack.c.b16 %v843, %v839
    %v1288 = vpack.c.b16 %v844, %v840
    %v1289 = vpack.c.b16 %v849, %v845
    %v1290 = vpack.c.b16 %v850, %v846
    %v1291 = vpack.c.b16 %v851, %v847
    %v1292 = vpack.c.b16 %v852, %v848
    %v1293 = vpack.c.b16 %v857, %v853
    %v1294 = vpack.c.b16 %v858, %v854
    %v1295 = vpack.c.b16 %v859, %v855
    %v1296 = vpack.c.b16 %v860, %v856
    %v1297 = vpack.c.b16 %v865, %v861
    %v1298 = vpack.c.b16 %v866, %v862
    %v1299 = vpack.c.b16 %v867, %v863
    %v1300 = vpack.c.b16 %v868, %v864
    %v1301 = vpack.c.b16 %v873, %v869
    %v1302 = vpack.c.b16 %v874, %v870
    %v1303 = vpack.c.b16 %v875, %v871
    %v1304 = vpack.c.b16 %v876, %v872
    %v1305 = vpack.c.b16 %v881, %v877
    %v1306 = vpack.c.b16 %v882, %v878
    %v1307 = vpack.c.b16 %v883, %v879
    %v1308 = vpack.c.b16 %v884, %v880
    %v1309 = vpack.c.b16 %v889, %v885
    %v1310 = vpack.c.b16 %v890, %v886
    %v1311 = vpack.c.b16 %v891, %v887
    %v1312 = vpack.c.b16 %v892, %v888
    %v1313 = vpack.c.b16 %v897, %v893
    %v1314 = vpack.c.b16 %v898, %v894
    %v1315 = vpack.c.b16 %v899, %v895
    %v1316 = vpack.c.b16 %v900, %v896
    %v1317 = vpack.c.b16 %v905, %v901
    %v1318 = vpack.c.b16 %v906, %v902
    %v1319 = vpack.c.b16 %v907, %v903
    %v1320 = vpack.c.b16 %v908, %v904
    %v1321 = vpack.c.b16 %v913, %v909
    %v1322 = vpack.c.b16 %v914, %v910
    %v1323 = vpack.c.b16 %v915, %v911
    %v1324 = vpack.c.b16 %v916, %v912
    %v1325 = vpack.c.b16 %v921, %v917
    %v1326 = vpack.c.b16 %v922, %v918
    %v1327 = vpack.c.b16 %v923, %v919
    %v1328 = vpack.c.b16 %v924, %v920
    %v1329 = vpack.c.b16 %v929, %v925
    %v1330 = vpack.c.b16 %v930, %v926
    %v1331 = vpack.c.b16 %v931, %v927
    %v1332 = vpack.c.b16 %v932, %v928
    %v1333 = vpack.c.b16 %v937, %v933
    %v1334 = vpack.c.b16 %v938, %v934
    %v1335 = vpack.c.b16 %v939, %v935
    %v1336 = vpack.c.b16 %v940, %v936
    %v1337 = vpack.c.b16 %v945, %v941
    %v1338 = vpack.c.b16 %v946, %v942
    %v1339 = vpack.c.b16 %v947, %v943
    %v1340 = vpack.c.b16 %v948, %v944
    %v1341 = vpack.c.b16 %v953, %v949
    %v1342 = vpack.c.b16 %v954, %v950
    %v1343 = vpack.c.b16 %v955, %v951
    %v1344 = vpack.c.b16 %v956, %v952
    %v1345 = vpack.c.b16 %v961, %v957
    %v1346 = vpack.c.b16 %v962, %v958
    %v1347 = vpack.c.b16 %v963, %v959
    %v1348 = vpack.c.b16 %v964, %v960
    %v1349 = vpack.c.b16 %v969, %v965
    %v1350 = vpack.c.b16 %v970, %v966
    %v1351 = vpack.c.b16 %v971, %v967
    %v1352 = vpack.c.b16 %v972, %v968
    %v1353 = vpack.c.b16 %v977, %v973
    %v1354 = vpack.c.b16 %v978, %v974
    %v1355 = vpack.c.b16 %v979, %v975
    %v1356 = vpack.c.b16 %v980, %v976
    %v1357 = vpack.c.b16 %v985, %v981
    %v1358 = vpack.c.b16 %v986, %v982
    %v1359 = vpack.c.b16 %v987, %v983
    %v1360 = vpack.c.b16 %v988, %v984
    %v1361 = vpack.c.b16 %v993, %v989
    %v1362 = vpack.c.b16 %v994, %v990
    %v1363 = vpack.c.b16 %v995, %v991
    %v1364 = vpack.c.b16 %v996, %v992
    %v1365 = vpack.c.b16 %v1001, %v997
    %v1366 = vpack.c.b16 %v1002, %v998
    %v1367 = vpack.c.b16 %v1003, %v999
    %v1368 = vpack.c.b16 %v1004, %v1000
    %v1369 = vpack.c.b16 %v1009, %v1005
    %v1370 = vpack.c.b16 %v1010, %v1006
    %v1371 = vpack.c.b16 %v1011, %v1007
    %v1372 = vpack.c.b16 %v1012, %v1008
    %v1373 = vpack.c.b16 %v1017, %v1013
    %v1374 = vpack.c.b16 %v1018, %v1014
    %v1375 = vpack.c.b16 %v1019, %v1015
    %v1376 = vpack.c.b16 %v1020, %v1016
    %v1377 = vpack.c.b16 %v1025, %v1021
    %v1378 = vpack.c.b16 %v1026, %v1022
    %v1379 = vpack.c.b16 %v1027, %v1023
    %v1380 = vpack.c.b16 %v1028, %v1024
    %v1381 = vpack.c.b16 %v1033, %v1029
    %v1382 = vpack.c.b16 %v1034, %v1030
    %v1383 = vpack.c.b16 %v1035, %v1031
    %v1384 = vpack.c.b16 %v1036, %v1032
    %v1385 = vpack.c.b16 %v1041, %v1037
    %v1386 = vpack.c.b16 %v1042, %v1038
    %v1387 = vpack.c.b16 %v1043, %v1039
    %v1388 = vpack.c.b16 %v1044, %v1040
    %v1389 = vpack.c.b16 %v1049, %v1045
    %v1390 = vpack.c.b16 %v1050, %v1046
    %v1391 = vpack.c.b16 %v1051, %v1047
    %v1392 = vpack.c.b16 %v1052, %v1048
    %v1393 = vpack.c.b16 %v1057, %v1053
    %v1394 = vpack.c.b16 %v1058, %v1054
    %v1395 = vpack.c.b16 %v1059, %v1055
    %v1396 = vpack.c.b16 %v1060, %v1056
    %v1397 = vpack.c.b16 %v1065, %v1061
    %v1398 = vpack.c.b16 %v1066, %v1062
    %v1399 = vpack.c.b16 %v1067, %v1063
    %v1400 = vpack.c.b16 %v1068, %v1064
    %v1401 = vpack.c.b16 %v1073, %v1069
    %v1402 = vpack.c.b16 %v1074, %v1070
    %v1403 = vpack.c.b16 %v1075, %v1071
    %v1404 = vpack.c.b16 %v1076, %v1072
    %v1405 = vpack.c.b16 %v1081, %v1077
    %v1406 = vpack.c.b16 %v1082, %v1078
    %v1407 = vpack.c.b16 %v1083, %v1079
    %v1408 = vpack.c.b16 %v1084, %v1080
    %v1409 = vpack.c.b16 %v1089, %v1085
    %v1410 = vpack.c.b16 %v1090, %v1086
    %v1411 = vpack.c.b16 %v1091, %v1087
    %v1412 = vpack.c.b16 %v1092, %v1088
    %v1413 = vpack.c.b16 %v1097, %v1093
    %v1414 = vpack.c.b16 %v1098, %v1094
    %v1415 = vpack.c.b16 %v1099, %v1095
    %v1416 = vpack.c.b16 %v1100, %v1096
    %v1417 = vpack.c.b16 %v1105, %v1101
    %v1418 = vpack.c.b16 %v1106, %v1102
    %v1419 = vpack.c.b16 %v1107, %v1103
    %v1420 = vpack.c.b16 %v1108, %v1104
    %v1421 = vpack.c.b16 %v1113, %v1109
    %v1422 = vpack.c.b16 %v1114, %v1110
    %v1423 = vpack.c.b16 %v1115, %v1111
    %v1424 = vpack.c.b16 %v1116, %v1112
    %v1425 = vpack.c.b16 %v1121, %v1117
    %v1426 = vpack.c.b16 %v1122, %v1118
    %v1427 = vpack.c.b16 %v1123, %v1119
    %v1428 = vpack.c.b16 %v1124, %v1120
    %v1429 = vpack.c.b16 %v1129, %v1125
    %v1430 = vpack.c.b16 %v1130, %v1126
    %v1431 = vpack.c.b16 %v1131, %v1127
    %v1432 = vpack.c.b16 %v1132, %v1128
    %v1433 = vpack.c.b16 %v1137, %v1133
    %v1434 = vpack.c.b16 %v1138, %v1134
    %v1435 = vpack.c.b16 %v1139, %v1135
    %v1436 = vpack.c.b16 %v1140, %v1136
    %v1437 = vpack.c.b16 %v1145, %v1141
    %v1438 = vpack.c.b16 %v1146, %v1142
    %v1439 = vpack.c.b16 %v1147, %v1143
    %v1440 = vpack.c.b16 %v1148, %v1144
    %v1441 = vpack.c.b16 %v1153, %v1149
    %v1442 = vpack.c.b16 %v1154, %v1150
    %v1443 = vpack.c.b16 %v1155, %v1151
    %v1444 = vpack.c.b16 %v1156, %v1152
    %v1445 = vpack.c.b16 %v1161, %v1157
    %v1446 = vpack.c.b16 %v1162, %v1158
    %v1447 = vpack.c.b16 %v1163, %v1159
    %v1448 = vpack.c.b16 %v1164, %v1160
    %v1449 = vpack.c.b16 %v1169, %v1165
    %v1450 = vpack.c.b16 %v1170, %v1166
    %v1451 = vpack.c.b16 %v1171, %v1167
    %v1452 = vpack.c.b16 %v1172, %v1168
    %v1453 = vpack.c.b16 %v1177, %v1173
    %v1454 = vpack.c.b16 %v1178, %v1174
    %v1455 = vpack.c.b16 %v1179, %v1175
    %v1456 = vpack.c.b16 %v1180, %v1176
    %v1457 = vpack.c.b16 %v1185, %v1181
    %v1458 = vpack.c.b16 %v1186, %v1182
    %v1459 = vpack.c.b16 %v1187, %v1183
    %v1460 = vpack.c.b16 %v1188, %v1184
    %v1461 = vpack.c.b16 %v1193, %v1189
    %v1462 = vpack.c.b16 %v1194, %v1190
    %v1463 = vpack.c.b16 %v1195, %v1191
    %v1464 = vpack.c.b16 %v1196, %v1192
    %v1465 = vpack.c.b16 %v1201, %v1197
    %v1466 = vpack.c.b16 %v1202, %v1198
    %v1467 = vpack.c.b16 %v1203, %v1199
    %v1468 = vpack.c.b16 %v1204, %v1200
    %v1469 = vpack.c.b16 %v1209, %v1205
    %v1470 = vpack.c.b16 %v1210, %v1206
    %v1471 = vpack.c.b16 %v1211, %v1207
    %v1472 = vpack.c.b16 %v1212, %v1208
    %v1473 = vpack.c.b16 %v1217, %v1213
    %v1474 = vpack.c.b16 %v1218, %v1214
    %v1475 = vpack.c.b16 %v1219, %v1215
    %v1476 = vpack.c.b16 %v1220, %v1216
    %1733 = vmatprep.subr.bf16.mxu0 %v1222
    %1734 = vmatpush1.bf16.msra.mxu0 %v1221
    %1735 = vmatprep.subr.bf16.mxu0 %v1226
    %1736 = vmatpush1.bf16.msra.mxu0 %v1225
    %1737 = vmatprep.subr.bf16.mxu0 %v1230
    %1738 = vmatpush1.bf16.msra.mxu0 %v1229
    %1739 = vmatprep.subr.bf16.mxu0 %v1234
    %1740 = vmatpush1.bf16.msra.mxu0 %v1233
    %1741 = vmatprep.subr.bf16.mxu0 %v1238
    %1742 = vmatpush1.bf16.msra.mxu0 %v1237
    %1743 = vmatprep.subr.bf16.mxu0 %v1242
    %1744 = vmatpush1.bf16.msra.mxu0 %v1241
    %1745 = vmatprep.subr.bf16.mxu0 %v1246
    %1746 = vmatpush1.bf16.msra.mxu0 %v1245
    %1747 = vmatprep.subr.bf16.mxu0 %v1250
    %1748 = vmatpush1.bf16.msra.mxu0 %v1249
    %1749 = vmatprep.subr.bf16.mxu0 %v1254
    %1750 = vmatpush1.bf16.msra.mxu0 %v1253
    %1751 = vmatprep.subr.bf16.mxu0 %v1258
    %1752 = vmatpush1.bf16.msra.mxu0 %v1257
    %1753 = vmatprep.subr.bf16.mxu0 %v1262
    %1754 = vmatpush1.bf16.msra.mxu0 %v1261
    %1755 = vmatprep.subr.bf16.mxu0 %v1266
    %1756 = vmatpush1.bf16.msra.mxu0 %v1265
    %1757 = vmatprep.subr.bf16.mxu0 %v1270
    %1758 = vmatpush1.bf16.msra.mxu0 %v1269
    %1759 = vmatprep.subr.bf16.mxu0 %v1274
    %1760 = vmatpush1.bf16.msra.mxu0 %v1273
    %1761 = vmatprep.subr.bf16.mxu0 %v1278
    %1762 = vmatpush1.bf16.msra.mxu0 %v1277
    %1763 = vmatprep.subr.bf16.mxu0 %v1282
    %1764 = vmatpush1.bf16.msra.mxu0 %v1281
    %1765 = vmatprep.mubr.bf16.mxu0 %v168
    %1766 = vmatmul.mubr.bf16.gmra.mrb[0].mxu0 %v167
    %v1767 = vpop.f32.mrb[0].mxu0
    %v1768 = vadd.f32 %v436, %v1767
    %v1769 = vpop.f32.mrb[0].mxu0
    %v1770 = vadd.f32 %v440, %v1769
    %v1771 = vpop.f32.mrb[0].mxu0
    %v1772 = vpop.f32.mrb[0].mxu0
    %1773 = vdwg.mxu0
    %1774 = vmatprep.subr.bf16.mxu0 %v1286
    %1775 = vmatpush1.bf16.msra.mxu0 %v1285
    %1776 = vmatprep.subr.bf16.mxu0 %v1290
    %1777 = vmatpush1.bf16.msra.mxu0 %v1289
    %1778 = vmatprep.subr.bf16.mxu0 %v1294
    %1779 = vmatpush1.bf16.msra.mxu0 %v1293
    %1780 = vmatprep.subr.bf16.mxu0 %v1298
    %1781 = vmatpush1.bf16.msra.mxu0 %v1297
    %1782 = vmatprep.subr.bf16.mxu0 %v1302
    %1783 = vmatpush1.bf16.msra.mxu0 %v1301
    %1784 = vmatprep.subr.bf16.mxu0 %v1306
    %1785 = vmatpush1.bf16.msra.mxu0 %v1305
    %1786 = vmatprep.subr.bf16.mxu0 %v1310
    %1787 = vmatpush1.bf16.msra.mxu0 %v1309
    %1788 = vmatprep.subr.bf16.mxu0 %v1314
    %1789 = vmatpush1.bf16.msra.mxu0 %v1313
    %1790 = vmatprep.subr.bf16.mxu0 %v1318
    %1791 = vmatpush1.bf16.msra.mxu0 %v1317
    %1792 = vmatprep.subr.bf16.mxu0 %v1322
    %1793 = vmatpush1.bf16.msra.mxu0 %v1321
    %1794 = vmatprep.subr.bf16.mxu0 %v1326
    %1795 = vmatpush1.bf16.msra.mxu0 %v1325
    %1796 = vmatprep.subr.bf16.mxu0 %v1330
    %1797 = vmatpush1.bf16.msra.mxu0 %v1329
    %1798 = vmatprep.subr.bf16.mxu0 %v1334
    %1799 = vmatpush1.bf16.msra.mxu0 %v1333
    %1800 = vmatprep.subr.bf16.mxu0 %v1338
    %1801 = vmatpush1.bf16.msra.mxu0 %v1337
    %1802 = vmatprep.subr.bf16.mxu0 %v1342
    %1803 = vmatpush1.bf16.msra.mxu0 %v1341
    %1804 = vmatprep.subr.bf16.mxu0 %v1346
    %1805 = vmatpush1.bf16.msra.mxu0 %v1345
    %1806 = vmatprep.mubr.bf16.mxu0 %v170
    %1807 = vmatmul.mubr.bf16.gmra.mrb[0].mxu0 %v169
    %v1808 = vpop.f32.mrb[0].mxu0
    %v1809 = vadd.f32 %v1768, %v1808
    %v1810 = vpop.f32.mrb[0].mxu0
    %v1811 = vadd.f32 %v1770, %v1810
    %v1812 = vpop.f32.mrb[0].mxu0
    %v1813 = vpop.f32.mrb[0].mxu0
    %1814 = vdwg.mxu0
    %1815 = vmatprep.subr.bf16.mxu0 %v1350
    %1816 = vmatpush1.bf16.msra.mxu0 %v1349
    %1817 = vmatprep.subr.bf16.mxu0 %v1354
    %1818 = vmatpush1.bf16.msra.mxu0 %v1353
    %1819 = vmatprep.subr.bf16.mxu0 %v1358
    %1820 = vmatpush1.bf16.msra.mxu0 %v1357
    %1821 = vmatprep.subr.bf16.mxu0 %v1362
    %1822 = vmatpush1.bf16.msra.mxu0 %v1361
    %1823 = vmatprep.subr.bf16.mxu0 %v1366
    %1824 = vmatpush1.bf16.msra.mxu0 %v1365
    %1825 = vmatprep.subr.bf16.mxu0 %v1370
    %1826 = vmatpush1.bf16.msra.mxu0 %v1369
    %1827 = vmatprep.subr.bf16.mxu0 %v1374
    %1828 = vmatpush1.bf16.msra.mxu0 %v1373
    %1829 = vmatprep.subr.bf16.mxu0 %v1378
    %1830 = vmatpush1.bf16.msra.mxu0 %v1377
    %1831 = vmatprep.subr.bf16.mxu0 %v1382
    %1832 = vmatpush1.bf16.msra.mxu0 %v1381
    %1833 = vmatprep.subr.bf16.mxu0 %v1386
    %1834 = vmatpush1.bf16.msra.mxu0 %v1385
    %1835 = vmatprep.subr.bf16.mxu0 %v1390
    %1836 = vmatpush1.bf16.msra.mxu0 %v1389
    %1837 = vmatprep.subr.bf16.mxu0 %v1394
    %1838 = vmatpush1.bf16.msra.mxu0 %v1393
    %1839 = vmatprep.subr.bf16.mxu0 %v1398
    %1840 = vmatpush1.bf16.msra.mxu0 %v1397
    %1841 = vmatprep.subr.bf16.mxu0 %v1402
    %1842 = vmatpush1.bf16.msra.mxu0 %v1401
    %1843 = vmatprep.subr.bf16.mxu0 %v1406
    %1844 = vmatpush1.bf16.msra.mxu0 %v1405
    %1845 = vmatprep.subr.bf16.mxu0 %v1410
    %1846 = vmatpush1.bf16.msra.mxu0 %v1409
    %1847 = vmatprep.mubr.bf16.mxu0 %v172
    %1848 = vmatmul.mubr.bf16.gmra.mrb[0].mxu0 %v171
    %v1849 = vpop.f32.mrb[0].mxu0
    %v1850 = vadd.f32 %v1809, %v1849
    %v1851 = vpop.f32.mrb[0].mxu0
    %v1852 = vadd.f32 %v1811, %v1851
    %v1853 = vpop.f32.mrb[0].mxu0
    %v1854 = vpop.f32.mrb[0].mxu0
    %1855 = vdwg.mxu0
    %1856 = vmatprep.subr.bf16.mxu0 %v1414
    %1857 = vmatpush1.bf16.msra.mxu0 %v1413
    %1858 = vmatprep.subr.bf16.mxu0 %v1418
    %1859 = vmatpush1.bf16.msra.mxu0 %v1417
    %1860 = vmatprep.subr.bf16.mxu0 %v1422
    %1861 = vmatpush1.bf16.msra.mxu0 %v1421
    %1862 = vmatprep.subr.bf16.mxu0 %v1426
    %1863 = vmatpush1.bf16.msra.mxu0 %v1425
    %1864 = vmatprep.subr.bf16.mxu0 %v1430
    %1865 = vmatpush1.bf16.msra.mxu0 %v1429
    %1866 = vmatprep.subr.bf16.mxu0 %v1434
    %1867 = vmatpush1.bf16.msra.mxu0 %v1433
    %1868 = vmatprep.subr.bf16.mxu0 %v1438
    %1869 = vmatpush1.bf16.msra.mxu0 %v1437
    %1870 = vmatprep.subr.bf16.mxu0 %v1442
    %1871 = vmatpush1.bf16.msra.mxu0 %v1441
    %1872 = vmatprep.subr.bf16.mxu0 %v1446
    %1873 = vmatpush1.bf16.msra.mxu0 %v1445
    %1874 = vmatprep.subr.bf16.mxu0 %v1450
    %1875 = vmatpush1.bf16.msra.mxu0 %v1449
    %1876 = vmatprep.subr.bf16.mxu0 %v1454
    %1877 = vmatpush1.bf16.msra.mxu0 %v1453
    %1878 = vmatprep.subr.bf16.mxu0 %v1458
    %1879 = vmatpush1.bf16.msra.mxu0 %v1457
    %1880 = vmatprep.subr.bf16.mxu0 %v1462
    %1881 = vmatpush1.bf16.msra.mxu0 %v1461
    %1882 = vmatprep.subr.bf16.mxu0 %v1466
    %1883 = vmatpush1.bf16.msra.mxu0 %v1465
    %1884 = vmatprep.subr.bf16.mxu0 %v1470
    %1885 = vmatpush1.bf16.msra.mxu0 %v1469
    %1886 = vmatprep.subr.bf16.mxu0 %v1474
    %1887 = vmatpush1.bf16.msra.mxu0 %v1473
    %1888 = vmatprep.mubr.bf16.mxu0 %v174
    %1889 = vmatmul.mubr.bf16.gmra.mrb[0].mxu0 %v173
    %v1890 = vpop.f32.mrb[0].mxu0
    %v1891 = vadd.f32 %v1850, %v1890
    %v1892 = vpop.f32.mrb[0].mxu0
    %v1893 = vadd.f32 %v1852, %v1892
    %v1894 = vpop.f32.mrb[0].mxu0
    %v1895 = vpop.f32.mrb[0].mxu0
    %1896 = vdwg.mxu0
    %1897 = vmatprep.subr.bf16.mxu0 %v1224
    %1898 = vmatpush1.bf16.msra.mxu0 %v1223
    %1899 = vmatprep.subr.bf16.mxu0 %v1228
    %1900 = vmatpush1.bf16.msra.mxu0 %v1227
    %1901 = vmatprep.subr.bf16.mxu0 %v1232
    %1902 = vmatpush1.bf16.msra.mxu0 %v1231
    %1903 = vmatprep.subr.bf16.mxu0 %v1236
    %1904 = vmatpush1.bf16.msra.mxu0 %v1235
    %1905 = vmatprep.subr.bf16.mxu0 %v1240
    %1906 = vmatpush1.bf16.msra.mxu0 %v1239
    %1907 = vmatprep.subr.bf16.mxu0 %v1244
    %1908 = vmatpush1.bf16.msra.mxu0 %v1243
    %1909 = vmatprep.subr.bf16.mxu0 %v1248
    %1910 = vmatpush1.bf16.msra.mxu0 %v1247
    %1911 = vmatprep.subr.bf16.mxu0 %v1252
    %1912 = vmatpush1.bf16.msra.mxu0 %v1251
    %1913 = vmatprep.subr.bf16.mxu0 %v1256
    %1914 = vmatpush1.bf16.msra.mxu0 %v1255
    %1915 = vmatprep.subr.bf16.mxu0 %v1260
    %1916 = vmatpush1.bf16.msra.mxu0 %v1259
    %1917 = vmatprep.subr.bf16.mxu0 %v1264
    %1918 = vmatpush1.bf16.msra.mxu0 %v1263
    %1919 = vmatprep.subr.bf16.mxu0 %v1268
    %1920 = vmatpush1.bf16.msra.mxu0 %v1267
    %1921 = vmatprep.subr.bf16.mxu0 %v1272
    %1922 = vmatpush1.bf16.msra.mxu0 %v1271
    %1923 = vmatprep.subr.bf16.mxu0 %v1276
    %1924 = vmatpush1.bf16.msra.mxu0 %v1275
    %1925 = vmatprep.subr.bf16.mxu0 %v1280
    %1926 = vmatpush1.bf16.msra.mxu0 %v1279
    %1927 = vmatprep.subr.bf16.mxu0 %v1284
    %1928 = vmatpush1.bf16.msra.mxu0 %v1283
    %1929 = vmatprep.mubr.bf16.mxu0 %v168
    %1930 = vmatmul.mubr.bf16.gmra.mrb[0].mxu0 %v167
    %v1931 = vpop.f32.mrb[0].mxu0
    %v1932 = vadd.f32 %v444, %v1931
    %v1933 = vpop.f32.mrb[0].mxu0
    %v1934 = vadd.f32 %v448, %v1933
    %v1935 = vpop.f32.mrb[0].mxu0
    %v1936 = vpop.f32.mrb[0].mxu0
    %1937 = vdwg.mxu0
    %1938 = vmatprep.subr.bf16.mxu0 %v1288
    %1939 = vmatpush1.bf16.msra.mxu0 %v1287
    %1940 = vmatprep.subr.bf16.mxu0 %v1292
    %1941 = vmatpush1.bf16.msra.mxu0 %v1291
    %1942 = vmatprep.subr.bf16.mxu0 %v1296
    %1943 = vmatpush1.bf16.msra.mxu0 %v1295
    %1944 = vmatprep.subr.bf16.mxu0 %v1300
    %1945 = vmatpush1.bf16.msra.mxu0 %v1299
    %1946 = vmatprep.subr.bf16.mxu0 %v1304
    %1947 = vmatpush1.bf16.msra.mxu0 %v1303
    %1948 = vmatprep.subr.bf16.mxu0 %v1308
    %1949 = vmatpush1.bf16.msra.mxu0 %v1307
    %1950 = vmatprep.subr.bf16.mxu0 %v1312
    %1951 = vmatpush1.bf16.msra.mxu0 %v1311
    %1952 = vmatprep.subr.bf16.mxu0 %v1316
    %1953 = vmatpush1.bf16.msra.mxu0 %v1315
    %1954 = vmatprep.subr.bf16.mxu0 %v1320
    %1955 = vmatpush1.bf16.msra.mxu0 %v1319
    %1956 = vmatprep.subr.bf16.mxu0 %v1324
    %1957 = vmatpush1.bf16.msra.mxu0 %v1323
    %1958 = vmatprep.subr.bf16.mxu0 %v1328
    %1959 = vmatpush1.bf16.msra.mxu0 %v1327
    %1960 = vmatprep.subr.bf16.mxu0 %v1332
    %1961 = vmatpush1.bf16.msra.mxu0 %v1331
    %1962 = vmatprep.subr.bf16.mxu0 %v1336
    %1963 = vmatpush1.bf16.msra.mxu0 %v1335
    %1964 = vmatprep.subr.bf16.mxu0 %v1340
    %1965 = vmatpush1.bf16.msra.mxu0 %v1339
    %1966 = vmatprep.subr.bf16.mxu0 %v1344
    %1967 = vmatpush1.bf16.msra.mxu0 %v1343
    %1968 = vmatprep.subr.bf16.mxu0 %v1348
    %1969 = vmatpush1.bf16.msra.mxu0 %v1347
    %1970 = vmatprep.mubr.bf16.mxu0 %v170
    %1971 = vmatmul.mubr.bf16.gmra.mrb[0].mxu0 %v169
    %v1972 = vpop.f32.mrb[0].mxu0
    %v1973 = vadd.f32 %v1932, %v1972
    %v1974 = vpop.f32.mrb[0].mxu0
    %v1975 = vadd.f32 %v1934, %v1974
    %v1976 = vpop.f32.mrb[0].mxu0
    %v1977 = vpop.f32.mrb[0].mxu0
    %1978 = vdwg.mxu0
    %1979 = vmatprep.subr.bf16.mxu0 %v1352
    %1980 = vmatpush1.bf16.msra.mxu0 %v1351
    %1981 = vmatprep.subr.bf16.mxu0 %v1356
    %1982 = vmatpush1.bf16.msra.mxu0 %v1355
    %1983 = vmatprep.subr.bf16.mxu0 %v1360
    %1984 = vmatpush1.bf16.msra.mxu0 %v1359
    %1985 = vmatprep.subr.bf16.mxu0 %v1364
    %1986 = vmatpush1.bf16.msra.mxu0 %v1363
    %1987 = vmatprep.subr.bf16.mxu0 %v1368
    %1988 = vmatpush1.bf16.msra.mxu0 %v1367
    %1989 = vmatprep.subr.bf16.mxu0 %v1372
    %1990 = vmatpush1.bf16.msra.mxu0 %v1371
    %1991 = vmatprep.subr.bf16.mxu0 %v1376
    %1992 = vmatpush1.bf16.msra.mxu0 %v1375
    %1993 = vmatprep.subr.bf16.mxu0 %v1380
    %1994 = vmatpush1.bf16.msra.mxu0 %v1379
    %1995 = vmatprep.subr.bf16.mxu0 %v1384
    %1996 = vmatpush1.bf16.msra.mxu0 %v1383
    %1997 = vmatprep.subr.bf16.mxu0 %v1388
    %1998 = vmatpush1.bf16.msra.mxu0 %v1387
    %1999 = vmatprep.subr.bf16.mxu0 %v1392
    %2000 = vmatpush1.bf16.msra.mxu0 %v1391
    %2001 = vmatprep.subr.bf16.mxu0 %v1396
    %2002 = vmatpush1.bf16.msra.mxu0 %v1395
    %2003 = vmatprep.subr.bf16.mxu0 %v1400
    %2004 = vmatpush1.bf16.msra.mxu0 %v1399
    %2005 = vmatprep.subr.bf16.mxu0 %v1404
    %2006 = vmatpush1.bf16.msra.mxu0 %v1403
    %2007 = vmatprep.subr.bf16.mxu0 %v1408
    %2008 = vmatpush1.bf16.msra.mxu0 %v1407
    %2009 = vmatprep.subr.bf16.mxu0 %v1412
    %2010 = vmatpush1.bf16.msra.mxu0 %v1411
    %2011 = vmatprep.mubr.bf16.mxu0 %v172
    %2012 = vmatmul.mubr.bf16.gmra.mrb[0].mxu0 %v171
    %v2013 = vpop.f32.mrb[0].mxu0
    %v2014 = vadd.f32 %v1973, %v2013
    %v2015 = vpop.f32.mrb[0].mxu0
    %v2016 = vadd.f32 %v1975, %v2015
    %v2017 = vpop.f32.mrb[0].mxu0
    %v2018 = vpop.f32.mrb[0].mxu0
    %2019 = vdwg.mxu0
    %2020 = vmatprep.subr.bf16.mxu0 %v1416
    %2021 = vmatpush1.bf16.msra.mxu0 %v1415
    %2022 = vmatprep.subr.bf16.mxu0 %v1420
    %2023 = vmatpush1.bf16.msra.mxu0 %v1419
    %2024 = vmatprep.subr.bf16.mxu0 %v1424
    %2025 = vmatpush1.bf16.msra.mxu0 %v1423
    %2026 = vmatprep.subr.bf16.mxu0 %v1428
    %2027 = vmatpush1.bf16.msra.mxu0 %v1427
    %2028 = vmatprep.subr.bf16.mxu0 %v1432
    %2029 = vmatpush1.bf16.msra.mxu0 %v1431
    %2030 = vmatprep.subr.bf16.mxu0 %v1436
    %2031 = vmatpush1.bf16.msra.mxu0 %v1435
    %2032 = vmatprep.subr.bf16.mxu0 %v1440
    %2033 = vmatpush1.bf16.msra.mxu0 %v1439
    %2034 = vmatprep.subr.bf16.mxu0 %v1444
    %2035 = vmatpush1.bf16.msra.mxu0 %v1443
    %2036 = vmatprep.subr.bf16.mxu0 %v1448
    %2037 = vmatpush1.bf16.msra.mxu0 %v1447
    %2038 = vmatprep.subr.bf16.mxu0 %v1452
    %2039 = vmatpush1.bf16.msra.mxu0 %v1451
    %2040 = vmatprep.subr.bf16.mxu0 %v1456
    %2041 = vmatpush1.bf16.msra.mxu0 %v1455
    %2042 = vmatprep.subr.bf16.mxu0 %v1460
    %2043 = vmatpush1.bf16.msra.mxu0 %v1459
    %2044 = vmatprep.subr.bf16.mxu0 %v1464
    %2045 = vmatpush1.bf16.msra.mxu0 %v1463
    %2046 = vmatprep.subr.bf16.mxu0 %v1468
    %2047 = vmatpush1.bf16.msra.mxu0 %v1467
    %2048 = vmatprep.subr.bf16.mxu0 %v1472
    %2049 = vmatpush1.bf16.msra.mxu0 %v1471
    %2050 = vmatprep.subr.bf16.mxu0 %v1476
    %2051 = vmatpush1.bf16.msra.mxu0 %v1475
    %2052 = vmatprep.mubr.bf16.mxu0 %v174
    %2053 = vmatmul.mubr.bf16.gmra.mrb[0].mxu0 %v173
    %v2054 = vpop.f32.mrb[0].mxu0
    %v2055 = vadd.f32 %v2014, %v2054
    %v2056 = vpop.f32.mrb[0].mxu0
    %v2057 = vadd.f32 %v2016, %v2056
    %v2058 = vpop.f32.mrb[0].mxu0
    %v2059 = vpop.f32.mrb[0].mxu0
    %2060 = vdwg.mxu0
    %v2061 = vmax.f32 %v1891, 0.0
    %v2062 = vmax.f32 %v1893, 0.0
    %v2063 = vmax.f32 %v2055, 0.0
    %v2064 = vmax.f32 %v2057, 0.0
    %v2065 = vpack.c.bf16 %v2061, %v2061
    %v2066 = vpack.c.bf16 %v2062, %v2062
    %v2067 = vpack.c.bf16 %v2063, %v2063
    %v2068 = vpack.c.bf16 %v2064, %v2064
    %v2069 = vld [vmem:[%s4] sm:$0xff]
    %v2070 = vld [vmem:[%s4 + $0x8] sm:$0xff]
    %v2071 = vld [vmem:[%s4 + $0x10] sm:$0xff]
    %v2072 = vld [vmem:[%s4 + $0x18] sm:$0xff]
    %v2073 = vld [vmem:[%s4 + $0x20] sm:$0xff]
    %v2074 = vld [vmem:[%s4 + $0x28] sm:$0xff]
    %v2075 = vld [vmem:[%s4 + $0x30] sm:$0xff]
    %v2076 = vld [vmem:[%s4 + $0x38] sm:$0xff]
    %v2077 = vld [vmem:[%s4 + $0x40] sm:$0xff]
    %v2078 = vld [vmem:[%s4 + $0x48] sm:$0xff]
    %v2079 = vld [vmem:[%s4 + $0x50] sm:$0xff]
    %v2080 = vld [vmem:[%s4 + $0x58] sm:$0xff]
    %v2081 = vld [vmem:[%s4 + $0x60] sm:$0xff]
    %v2082 = vld [vmem:[%s4 + $0x68] sm:$0xff]
    %v2083 = vld [vmem:[%s4 + $0x70] sm:$0xff]
    %v2084 = vld [vmem:[%s4 + $0x78] sm:$0xff]
    %v2085 = vld [vmem:[%s4 + $0x80] sm:$0xff]
    %v2086 = vld [vmem:[%s4 + $0x88] sm:$0xff]
    %v2087 = vld [vmem:[%s4 + $0x90] sm:$0xff]
    %v2088 = vld [vmem:[%s4 + $0x98] sm:$0xff]
    %v2089 = vld [vmem:[%s4 + $0xa0] sm:$0xff]
    %v2090 = vld [vmem:[%s4 + $0xa8] sm:$0xff]
    %v2091 = vld [vmem:[%s4 + $0xb0] sm:$0xff]
    %v2092 = vld [vmem:[%s4 + $0xb8] sm:$0xff]
    %v2093 = vld [vmem:[%s4 + $0xc0] sm:$0xff]
    %v2094 = vld [vmem:[%s4 + $0xc8] sm:$0xff]
    %v2095 = vld [vmem:[%s4 + $0xd0] sm:$0xff]
    %v2096 = vld [vmem:[%s4 + $0xd8] sm:$0xff]
    %v2097 = vld [vmem:[%s4 + $0xe0] sm:$0xff]
    %v2098 = vld [vmem:[%s4 + $0xe8] sm:$0xff]
    %v2099 = vld [vmem:[%s4 + $0xf0] sm:$0xff]
    %v2100 = vld [vmem:[%s4 + $0xf8] sm:$0xff]
    %v2101 = vld [vmem:[%s4 + $0x100] sm:$0xff]
    %v2102 = vld [vmem:[%s4 + $0x108] sm:$0xff]
    %v2103 = vld [vmem:[%s4 + $0x110] sm:$0xff]
    %v2104 = vld [vmem:[%s4 + $0x118] sm:$0xff]
    %v2105 = vld [vmem:[%s4 + $0x120] sm:$0xff]
    %v2106 = vld [vmem:[%s4 + $0x128] sm:$0xff]
    %v2107 = vld [vmem:[%s4 + $0x130] sm:$0xff]
    %v2108 = vld [vmem:[%s4 + $0x138] sm:$0xff]
    %v2109 = vld [vmem:[%s4 + $0x140] sm:$0xff]
    %v2110 = vld [vmem:[%s4 + $0x148] sm:$0xff]
    %v2111 = vld [vmem:[%s4 + $0x150] sm:$0xff]
    %v2112 = vld [vmem:[%s4 + $0x158] sm:$0xff]
    %v2113 = vld [vmem:[%s4 + $0x160] sm:$0xff]
    %v2114 = vld [vmem:[%s4 + $0x168] sm:$0xff]
    %v2115 = vld [vmem:[%s4 + $0x170] sm:$0xff]
    %v2116 = vld [vmem:[%s4 + $0x178] sm:$0xff]
    %v2117 = vld [vmem:[%s4 + $0x180] sm:$0xff]
    %v2118 = vld [vmem:[%s4 + $0x188] sm:$0xff]
    %v2119 = vld [vmem:[%s4 + $0x190] sm:$0xff]
    %v2120 = vld [vmem:[%s4 + $0x198] sm:$0xff]
    %v2121 = vld [vmem:[%s4 + $0x1a0] sm:$0xff]
    %v2122 = vld [vmem:[%s4 + $0x1a8] sm:$0xff]
    %v2123 = vld [vmem:[%s4 + $0x1b0] sm:$0xff]
    %v2124 = vld [vmem:[%s4 + $0x1b8] sm:$0xff]
    %v2125 = vld [vmem:[%s4 + $0x1c0] sm:$0xff]
    %v2126 = vld [vmem:[%s4 + $0x1c8] sm:$0xff]
    %v2127 = vld [vmem:[%s4 + $0x1d0] sm:$0xff]
    %v2128 = vld [vmem:[%s4 + $0x1d8] sm:$0xff]
    %v2129 = vld [vmem:[%s4 + $0x1e0] sm:$0xff]
    %v2130 = vld [vmem:[%s4 + $0x1e8] sm:$0xff]
    %v2131 = vld [vmem:[%s4 + $0x1f0] sm:$0xff]
    %v2132 = vld [vmem:[%s4 + $0x1f8] sm:$0xff]
    %v2133 = vld [vmem:[%s5] sm:$0x3]
    %v2135 = vlaneseq
    %v2136 = vshrl.u32 %v2135, 7
    %v2137 = vsub.s32 0, %v2136
    %v2138 = vrot.slane %v2133, %v2137
    %v2139 = vlaneseq
    %v2140 = vshrl.u32 %v2139, 7
    %v2141 = vsub.s32 1, %v2140
    %v2142 = vrot.slane %v2133, %v2141
    %v2209 = vunpack.c.l.b16 %v2069
    %v2210 = vunpack.c.h.b16 %v2069
    %v2211 = vunpack.c.l.b16 %v2070
    %v2212 = vunpack.c.h.b16 %v2070
    %v2213 = vunpack.c.l.b16 %v2071
    %v2214 = vunpack.c.h.b16 %v2071
    %v2215 = vunpack.c.l.b16 %v2072
    %v2216 = vunpack.c.h.b16 %v2072
    %v2217 = vunpack.c.l.b16 %v2073
    %v2218 = vunpack.c.h.b16 %v2073
    %v2219 = vunpack.c.l.b16 %v2074
    %v2220 = vunpack.c.h.b16 %v2074
    %v2221 = vunpack.c.l.b16 %v2075
    %v2222 = vunpack.c.h.b16 %v2075
    %v2223 = vunpack.c.l.b16 %v2076
    %v2224 = vunpack.c.h.b16 %v2076
    %v2225 = vunpack.c.l.b16 %v2077
    %v2226 = vunpack.c.h.b16 %v2077
    %v2227 = vunpack.c.l.b16 %v2078
    %v2228 = vunpack.c.h.b16 %v2078
    %v2229 = vunpack.c.l.b16 %v2079
    %v2230 = vunpack.c.h.b16 %v2079
    %v2231 = vunpack.c.l.b16 %v2080
    %v2232 = vunpack.c.h.b16 %v2080
    %v2233 = vunpack.c.l.b16 %v2081
    %v2234 = vunpack.c.h.b16 %v2081
    %v2235 = vunpack.c.l.b16 %v2082
    %v2236 = vunpack.c.h.b16 %v2082
    %v2237 = vunpack.c.l.b16 %v2083
    %v2238 = vunpack.c.h.b16 %v2083
    %v2239 = vunpack.c.l.b16 %v2084
    %v2240 = vunpack.c.h.b16 %v2084
    %v2241 = vunpack.c.l.b16 %v2085
    %v2242 = vunpack.c.h.b16 %v2085
    %v2243 = vunpack.c.l.b16 %v2086
    %v2244 = vunpack.c.h.b16 %v2086
    %v2245 = vunpack.c.l.b16 %v2087
    %v2246 = vunpack.c.h.b16 %v2087
    %v2247 = vunpack.c.l.b16 %v2088
    %v2248 = vunpack.c.h.b16 %v2088
    %v2249 = vunpack.c.l.b16 %v2089
    %v2250 = vunpack.c.h.b16 %v2089
    %v2251 = vunpack.c.l.b16 %v2090
    %v2252 = vunpack.c.h.b16 %v2090
    %v2253 = vunpack.c.l.b16 %v2091
    %v2254 = vunpack.c.h.b16 %v2091
    %v2255 = vunpack.c.l.b16 %v2092
    %v2256 = vunpack.c.h.b16 %v2092
    %v2257 = vunpack.c.l.b16 %v2093
    %v2258 = vunpack.c.h.b16 %v2093
    %v2259 = vunpack.c.l.b16 %v2094
    %v2260 = vunpack.c.h.b16 %v2094
    %v2261 = vunpack.c.l.b16 %v2095
    %v2262 = vunpack.c.h.b16 %v2095
    %v2263 = vunpack.c.l.b16 %v2096
    %v2264 = vunpack.c.h.b16 %v2096
    %v2265 = vunpack.c.l.b16 %v2097
    %v2266 = vunpack.c.h.b16 %v2097
    %v2267 = vunpack.c.l.b16 %v2098
    %v2268 = vunpack.c.h.b16 %v2098
    %v2269 = vunpack.c.l.b16 %v2099
    %v2270 = vunpack.c.h.b16 %v2099
    %v2271 = vunpack.c.l.b16 %v2100
    %v2272 = vunpack.c.h.b16 %v2100
    %v2273 = vunpack.c.l.b16 %v2101
    %v2274 = vunpack.c.h.b16 %v2101
    %v2275 = vunpack.c.l.b16 %v2102
    %v2276 = vunpack.c.h.b16 %v2102
    %v2277 = vunpack.c.l.b16 %v2103
    %v2278 = vunpack.c.h.b16 %v2103
    %v2279 = vunpack.c.l.b16 %v2104
    %v2280 = vunpack.c.h.b16 %v2104
    %v2281 = vunpack.c.l.b16 %v2105
    %v2282 = vunpack.c.h.b16 %v2105
    %v2283 = vunpack.c.l.b16 %v2106
    %v2284 = vunpack.c.h.b16 %v2106
    %v2285 = vunpack.c.l.b16 %v2107
    %v2286 = vunpack.c.h.b16 %v2107
    %v2287 = vunpack.c.l.b16 %v2108
    %v2288 = vunpack.c.h.b16 %v2108
    %v2289 = vunpack.c.l.b16 %v2109
    %v2290 = vunpack.c.h.b16 %v2109
    %v2291 = vunpack.c.l.b16 %v2110
    %v2292 = vunpack.c.h.b16 %v2110
    %v2293 = vunpack.c.l.b16 %v2111
    %v2294 = vunpack.c.h.b16 %v2111
    %v2295 = vunpack.c.l.b16 %v2112
    %v2296 = vunpack.c.h.b16 %v2112
    %v2297 = vunpack.c.l.b16 %v2113
    %v2298 = vunpack.c.h.b16 %v2113
    %v2299 = vunpack.c.l.b16 %v2114
    %v2300 = vunpack.c.h.b16 %v2114
    %v2301 = vunpack.c.l.b16 %v2115
    %v2302 = vunpack.c.h.b16 %v2115
    %v2303 = vunpack.c.l.b16 %v2116
    %v2304 = vunpack.c.h.b16 %v2116
    %v2305 = vunpack.c.l.b16 %v2117
    %v2306 = vunpack.c.h.b16 %v2117
    %v2307 = vunpack.c.l.b16 %v2118
    %v2308 = vunpack.c.h.b16 %v2118
    %v2309 = vunpack.c.l.b16 %v2119
    %v2310 = vunpack.c.h.b16 %v2119
    %v2311 = vunpack.c.l.b16 %v2120
    %v2312 = vunpack.c.h.b16 %v2120
    %v2313 = vunpack.c.l.b16 %v2121
    %v2314 = vunpack.c.h.b16 %v2121
    %v2315 = vunpack.c.l.b16 %v2122
    %v2316 = vunpack.c.h.b16 %v2122
    %v2317 = vunpack.c.l.b16 %v2123
    %v2318 = vunpack.c.h.b16 %v2123
    %v2319 = vunpack.c.l.b16 %v2124
    %v2320 = vunpack.c.h.b16 %v2124
    %v2321 = vunpack.c.l.b16 %v2125
    %v2322 = vunpack.c.h.b16 %v2125
    %v2323 = vunpack.c.l.b16 %v2126
    %v2324 = vunpack.c.h.b16 %v2126
    %v2325 = vunpack.c.l.b16 %v2127
    %v2326 = vunpack.c.h.b16 %v2127
    %v2327 = vunpack.c.l.b16 %v2128
    %v2328 = vunpack.c.h.b16 %v2128
    %v2329 = vunpack.c.l.b16 %v2129
    %v2330 = vunpack.c.h.b16 %v2129
    %v2331 = vunpack.c.l.b16 %v2130
    %v2332 = vunpack.c.h.b16 %v2130
    %v2333 = vunpack.c.l.b16 %v2131
    %v2334 = vunpack.c.h.b16 %v2131
    %v2335 = vunpack.c.l.b16 %v2132
    %v2336 = vunpack.c.h.b16 %v2132
    %v2337 = vpack.c.b16 %v2211, %v2209
    %v2338 = vpack.c.b16 %v2212, %v2210
    %v2339 = vpack.c.b16 %v2215, %v2213
    %v2340 = vpack.c.b16 %v2216, %v2214
    %v2341 = vpack.c.b16 %v2219, %v2217
    %v2342 = vpack.c.b16 %v2220, %v2218
    %v2343 = vpack.c.b16 %v2223, %v2221
    %v2344 = vpack.c.b16 %v2224, %v2222
    %v2345 = vpack.c.b16 %v2227, %v2225
    %v2346 = vpack.c.b16 %v2228, %v2226
    %v2347 = vpack.c.b16 %v2231, %v2229
    %v2348 = vpack.c.b16 %v2232, %v2230
    %v2349 = vpack.c.b16 %v2235, %v2233
    %v2350 = vpack.c.b16 %v2236, %v2234
    %v2351 = vpack.c.b16 %v2239, %v2237
    %v2352 = vpack.c.b16 %v2240, %v2238
    %v2353 = vpack.c.b16 %v2243, %v2241
    %v2354 = vpack.c.b16 %v2244, %v2242
    %v2355 = vpack.c.b16 %v2247, %v2245
    %v2356 = vpack.c.b16 %v2248, %v2246
    %v2357 = vpack.c.b16 %v2251, %v2249
    %v2358 = vpack.c.b16 %v2252, %v2250
    %v2359 = vpack.c.b16 %v2255, %v2253
    %v2360 = vpack.c.b16 %v2256, %v2254
    %v2361 = vpack.c.b16 %v2259, %v2257
    %v2362 = vpack.c.b16 %v2260, %v2258
    %v2363 = vpack.c.b16 %v2263, %v2261
    %v2364 = vpack.c.b16 %v2264, %v2262
    %v2365 = vpack.c.b16 %v2267, %v2265
    %v2366 = vpack.c.b16 %v2268, %v2266
    %v2367 = vpack.c.b16 %v2271, %v2269
    %v2368 = vpack.c.b16 %v2272, %v2270
    %v2369 = vpack.c.b16 %v2275, %v2273
    %v2370 = vpack.c.b16 %v2276, %v2274
    %v2371 = vpack.c.b16 %v2279, %v2277
    %v2372 = vpack.c.b16 %v2280, %v2278
    %v2373 = vpack.c.b16 %v2283, %v2281
    %v2374 = vpack.c.b16 %v2284, %v2282
    %v2375 = vpack.c.b16 %v2287, %v2285
    %v2376 = vpack.c.b16 %v2288, %v2286
    %v2377 = vpack.c.b16 %v2291, %v2289
    %v2378 = vpack.c.b16 %v2292, %v2290
    %v2379 = vpack.c.b16 %v2295, %v2293
    %v2380 = vpack.c.b16 %v2296, %v2294
    %v2381 = vpack.c.b16 %v2299, %v2297
    %v2382 = vpack.c.b16 %v2300, %v2298
    %v2383 = vpack.c.b16 %v2303, %v2301
    %v2384 = vpack.c.b16 %v2304, %v2302
    %v2385 = vpack.c.b16 %v2307, %v2305
    %v2386 = vpack.c.b16 %v2308, %v2306
    %v2387 = vpack.c.b16 %v2311, %v2309
    %v2388 = vpack.c.b16 %v2312, %v2310
    %v2389 = vpack.c.b16 %v2315, %v2313
    %v2390 = vpack.c.b16 %v2316, %v2314
    %v2391 = vpack.c.b16 %v2319, %v2317
    %v2392 = vpack.c.b16 %v2320, %v2318
    %v2393 = vpack.c.b16 %v2323, %v2321
    %v2394 = vpack.c.b16 %v2324, %v2322
    %v2395 = vpack.c.b16 %v2327, %v2325
    %v2396 = vpack.c.b16 %v2328, %v2326
    %v2397 = vpack.c.b16 %v2331, %v2329
    %v2398 = vpack.c.b16 %v2332, %v2330
    %v2399 = vpack.c.b16 %v2335, %v2333
    %v2400 = vpack.c.b16 %v2336, %v2334
    %2465 = vmatprep.subr.bf16.mxu0 %v2338
    %2466 = vmatpush1.bf16.msra.mxu0 %v2337
    %2467 = vmatprep.subr.bf16.mxu0 %v2340
    %2468 = vmatpush1.bf16.msra.mxu0 %v2339
    %2469 = vmatprep.subr.bf16.mxu0 %v2342
    %2470 = vmatpush1.bf16.msra.mxu0 %v2341
    %2471 = vmatprep.subr.bf16.mxu0 %v2344
    %2472 = vmatpush1.bf16.msra.mxu0 %v2343
    %2473 = vmatprep.subr.bf16.mxu0 %v2346
    %2474 = vmatpush1.bf16.msra.mxu0 %v2345
    %2475 = vmatprep.subr.bf16.mxu0 %v2348
    %2476 = vmatpush1.bf16.msra.mxu0 %v2347
    %2477 = vmatprep.subr.bf16.mxu0 %v2350
    %2478 = vmatpush1.bf16.msra.mxu0 %v2349
    %2479 = vmatprep.subr.bf16.mxu0 %v2352
    %2480 = vmatpush1.bf16.msra.mxu0 %v2351
    %2481 = vmatprep.subr.bf16.mxu0 %v2354
    %2482 = vmatpush1.bf16.msra.mxu0 %v2353
    %2483 = vmatprep.subr.bf16.mxu0 %v2356
    %2484 = vmatpush1.bf16.msra.mxu0 %v2355
    %2485 = vmatprep.subr.bf16.mxu0 %v2358
    %2486 = vmatpush1.bf16.msra.mxu0 %v2357
    %2487 = vmatprep.subr.bf16.mxu0 %v2360
    %2488 = vmatpush1.bf16.msra.mxu0 %v2359
    %2489 = vmatprep.subr.bf16.mxu0 %v2362
    %2490 = vmatpush1.bf16.msra.mxu0 %v2361
    %2491 = vmatprep.subr.bf16.mxu0 %v2364
    %2492 = vmatpush1.bf16.msra.mxu0 %v2363
    %2493 = vmatprep.subr.bf16.mxu0 %v2366
    %2494 = vmatpush1.bf16.msra.mxu0 %v2365
    %2495 = vmatprep.subr.bf16.mxu0 %v2368
    %2496 = vmatpush1.bf16.msra.mxu0 %v2367
    %2497 = vmatprep.mubr.bf16.mxu0 %v2066
    %2498 = vmatmul.mubr.bf16.gmra.mrb[0].mxu0 %v2065
    %v2499 = vpop.f32.mrb[0].mxu0
    %v2500 = vadd.f32 %v2138, %v2499
    %v2501 = vpop.f32.mrb[0].mxu0
    %v2502 = vadd.f32 %v2142, %v2501
    %v2503 = vpop.f32.mrb[0].mxu0
    %v2504 = vpop.f32.mrb[0].mxu0
    %2505 = vdwg.mxu0
    %2506 = vmatprep.subr.bf16.mxu0 %v2370
    %2507 = vmatpush1.bf16.msra.mxu0 %v2369
    %2508 = vmatprep.subr.bf16.mxu0 %v2372
    %2509 = vmatpush1.bf16.msra.mxu0 %v2371
    %2510 = vmatprep.subr.bf16.mxu0 %v2374
    %2511 = vmatpush1.bf16.msra.mxu0 %v2373
    %2512 = vmatprep.subr.bf16.mxu0 %v2376
    %2513 = vmatpush1.bf16.msra.mxu0 %v2375
    %2514 = vmatprep.subr.bf16.mxu0 %v2378
    %2515 = vmatpush1.bf16.msra.mxu0 %v2377
    %2516 = vmatprep.subr.bf16.mxu0 %v2380
    %2517 = vmatpush1.bf16.msra.mxu0 %v2379
    %2518 = vmatprep.subr.bf16.mxu0 %v2382
    %2519 = vmatpush1.bf16.msra.mxu0 %v2381
    %2520 = vmatprep.subr.bf16.mxu0 %v2384
    %2521 = vmatpush1.bf16.msra.mxu0 %v2383
    %2522 = vmatprep.subr.bf16.mxu0 %v2386
    %2523 = vmatpush1.bf16.msra.mxu0 %v2385
    %2524 = vmatprep.subr.bf16.mxu0 %v2388
    %2525 = vmatpush1.bf16.msra.mxu0 %v2387
    %2526 = vmatprep.subr.bf16.mxu0 %v2390
    %2527 = vmatpush1.bf16.msra.mxu0 %v2389
    %2528 = vmatprep.subr.bf16.mxu0 %v2392
    %2529 = vmatpush1.bf16.msra.mxu0 %v2391
    %2530 = vmatprep.subr.bf16.mxu0 %v2394
    %2531 = vmatpush1.bf16.msra.mxu0 %v2393
    %2532 = vmatprep.subr.bf16.mxu0 %v2396
    %2533 = vmatpush1.bf16.msra.mxu0 %v2395
    %2534 = vmatprep.subr.bf16.mxu0 %v2398
    %2535 = vmatpush1.bf16.msra.mxu0 %v2397
    %2536 = vmatprep.subr.bf16.mxu0 %v2400
    %2537 = vmatpush1.bf16.msra.mxu0 %v2399
    %2538 = vmatprep.mubr.bf16.mxu0 %v2068
    %2539 = vmatmul.mubr.bf16.gmra.mrb[0].mxu0 %v2067
    %v2540 = vpop.f32.mrb[0].mxu0
    %v2541 = vadd.f32 %v2500, %v2540
    %v2542 = vpop.f32.mrb[0].mxu0
    %v2543 = vadd.f32 %v2502, %v2542
    %v2544 = vpop.f32.mrb[0].mxu0
    %v2545 = vpop.f32.mrb[0].mxu0
    %2546 = vdwg.mxu0
    %v2547 = vmax.f32 %v2541, 0.0
    %v2548 = vmax.f32 %v2543, 0.0
    %v2549 = vpack.c.bf16 %v2547, %v2547
    %v2550 = vpack.c.bf16 %v2548, %v2548
    %v2551 = vld [vmem:[%s6] sm:$0xf]
    %v2552 = vld [vmem:[%s6 + $0x4] sm:$0xf]
    %v2553 = vld [vmem:[%s6 + $0x8] sm:$0xf]
    %v2554 = vld [vmem:[%s6 + $0xc] sm:$0xf]
    %v2555 = vld [vmem:[%s6 + $0x10] sm:$0xf]
    %v2556 = vld [vmem:[%s6 + $0x14] sm:$0xf]
    %v2557 = vld [vmem:[%s6 + $0x18] sm:$0xf]
    %v2558 = vld [vmem:[%s6 + $0x1c] sm:$0xf]
    %v2559 = vld [vmem:[%s6 + $0x20] sm:$0xf]
    %v2560 = vld [vmem:[%s6 + $0x24] sm:$0xf]
    %v2561 = vld [vmem:[%s6 + $0x28] sm:$0xf]
    %v2562 = vld [vmem:[%s6 + $0x2c] sm:$0xf]
    %v2563 = vld [vmem:[%s6 + $0x30] sm:$0xf]
    %v2564 = vld [vmem:[%s6 + $0x34] sm:$0xf]
    %v2565 = vld [vmem:[%s6 + $0x38] sm:$0xf]
    %v2566 = vld [vmem:[%s6 + $0x3c] sm:$0xf]
    %v2567 = vld [vmem:[%s6 + $0x40] sm:$0xf]
    %v2568 = vld [vmem:[%s6 + $0x44] sm:$0xf]
    %v2569 = vld [vmem:[%s6 + $0x48] sm:$0xf]
    %v2570 = vld [vmem:[%s6 + $0x4c] sm:$0xf]
    %v2571 = vld [vmem:[%s6 + $0x50] sm:$0xf]
    %v2572 = vld [vmem:[%s6 + $0x54] sm:$0xf]
    %v2573 = vld [vmem:[%s6 + $0x58] sm:$0xf]
    %v2574 = vld [vmem:[%s6 + $0x5c] sm:$0xf]
    %v2575 = vld [vmem:[%s6 + $0x60] sm:$0xf]
    %v2576 = vld [vmem:[%s6 + $0x64] sm:$0xf]
    %v2577 = vld [vmem:[%s6 + $0x68] sm:$0xf]
    %v2578 = vld [vmem:[%s6 + $0x6c] sm:$0xf]
    %v2579 = vld [vmem:[%s6 + $0x70] sm:$0xf]
    %v2580 = vld [vmem:[%s6 + $0x74] sm:$0xf]
    %v2581 = vld [vmem:[%s6 + $0x78] sm:$0xf]
    %v2582 = vld [vmem:[%s6 + $0x7c] sm:$0xf]
    %v2583 = vld [vmem:[%s7] sm:$0x1]
    %v2585 = vlaneseq
    %v2586 = vshrl.u32 %v2585, 7
    %v2587 = vsub.s32 0, %v2586
    %v2588 = vrot.slane %v2583, %v2587
    %v2622 = vunpack.c.l.b16 %v2551
    %v2623 = vunpack.c.l.b16 %v2552
    %v2624 = vunpack.c.l.b16 %v2553
    %v2625 = vunpack.c.l.b16 %v2554
    %v2626 = vunpack.c.l.b16 %v2555
    %v2627 = vunpack.c.l.b16 %v2556
    %v2628 = vunpack.c.l.b16 %v2557
    %v2629 = vunpack.c.l.b16 %v2558
    %v2630 = vunpack.c.l.b16 %v2559
    %v2631 = vunpack.c.l.b16 %v2560
    %v2632 = vunpack.c.l.b16 %v2561
    %v2633 = vunpack.c.l.b16 %v2562
    %v2634 = vunpack.c.l.b16 %v2563
    %v2635 = vunpack.c.l.b16 %v2564
    %v2636 = vunpack.c.l.b16 %v2565
    %v2637 = vunpack.c.l.b16 %v2566
    %v2638 = vunpack.c.l.b16 %v2567
    %v2639 = vunpack.c.l.b16 %v2568
    %v2640 = vunpack.c.l.b16 %v2569
    %v2641 = vunpack.c.l.b16 %v2570
    %v2642 = vunpack.c.l.b16 %v2571
    %v2643 = vunpack.c.l.b16 %v2572
    %v2644 = vunpack.c.l.b16 %v2573
    %v2645 = vunpack.c.l.b16 %v2574
    %v2646 = vunpack.c.l.b16 %v2575
    %v2647 = vunpack.c.l.b16 %v2576
    %v2648 = vunpack.c.l.b16 %v2577
    %v2649 = vunpack.c.l.b16 %v2578
    %v2650 = vunpack.c.l.b16 %v2579
    %v2651 = vunpack.c.l.b16 %v2580
    %v2652 = vunpack.c.l.b16 %v2581
    %v2653 = vunpack.c.l.b16 %v2582
    %v2654 = vpack.c.b16 %v2623, %v2622
    %v2655 = vpack.c.b16 %v2625, %v2624
    %v2656 = vpack.c.b16 %v2627, %v2626
    %v2657 = vpack.c.b16 %v2629, %v2628
    %v2658 = vpack.c.b16 %v2631, %v2630
    %v2659 = vpack.c.b16 %v2633, %v2632
    %v2660 = vpack.c.b16 %v2635, %v2634
    %v2661 = vpack.c.b16 %v2637, %v2636
    %v2662 = vpack.c.b16 %v2639, %v2638
    %v2663 = vpack.c.b16 %v2641, %v2640
    %v2664 = vpack.c.b16 %v2643, %v2642
    %v2665 = vpack.c.b16 %v2645, %v2644
    %v2666 = vpack.c.b16 %v2647, %v2646
    %v2667 = vpack.c.b16 %v2649, %v2648
    %v2668 = vpack.c.b16 %v2651, %v2650
    %v2669 = vpack.c.b16 %v2653, %v2652
    %2686 = vmatprep.subr.bf16.mxu0 0
    %2687 = vmatpush1.bf16.msra.mxu0 %v2654
    %2688 = vmatprep.subr.bf16.mxu0 0
    %2689 = vmatpush1.bf16.msra.mxu0 %v2655
    %2690 = vmatprep.subr.bf16.mxu0 0
    %2691 = vmatpush1.bf16.msra.mxu0 %v2656
    %2692 = vmatprep.subr.bf16.mxu0 0
    %2693 = vmatpush1.bf16.msra.mxu0 %v2657
    %2694 = vmatprep.subr.bf16.mxu0 0
    %2695 = vmatpush1.bf16.msra.mxu0 %v2658
    %2696 = vmatprep.subr.bf16.mxu0 0
    %2697 = vmatpush1.bf16.msra.mxu0 %v2659
    %2698 = vmatprep.subr.bf16.mxu0 0
    %2699 = vmatpush1.bf16.msra.mxu0 %v2660
    %2700 = vmatprep.subr.bf16.mxu0 0
    %2701 = vmatpush1.bf16.msra.mxu0 %v2661
    %2702 = vmatprep.subr.bf16.mxu0 0
    %2703 = vmatpush1.bf16.msra.mxu0 %v2662
    %2704 = vmatprep.subr.bf16.mxu0 0
    %2705 = vmatpush1.bf16.msra.mxu0 %v2663
    %2706 = vmatprep.subr.bf16.mxu0 0
    %2707 = vmatpush1.bf16.msra.mxu0 %v2664
    %2708 = vmatprep.subr.bf16.mxu0 0
    %2709 = vmatpush1.bf16.msra.mxu0 %v2665
    %2710 = vmatprep.subr.bf16.mxu0 0
    %2711 = vmatpush1.bf16.msra.mxu0 %v2666
    %2712 = vmatprep.subr.bf16.mxu0 0
    %2713 = vmatpush1.bf16.msra.mxu0 %v2667
    %2714 = vmatprep.subr.bf16.mxu0 0
    %2715 = vmatpush1.bf16.msra.mxu0 %v2668
    %2716 = vmatprep.subr.bf16.mxu0 0
    %2717 = vmatpush1.bf16.msra.mxu0 %v2669
    %2718 = vmatprep.mubr.bf16.mxu0 %v2550
    %2719 = vmatmul.mubr.bf16.gmra.mrb[0].mxu0 %v2549
    %v2720 = vpop.f32.mrb[0].mxu0
    %v2721 = vadd.f32 %v2588, %v2720
    %v2722 = vpop.f32.mrb[0].mxu0
    %v2723 = vpop.f32.mrb[0].mxu0
    %v2724 = vpop.f32.mrb[0].mxu0
    %2725 = vdwg.mxu0
    %vm2726 = vcmask 66560
    %2727 = vst.msk [vmem:[%s8] sm:$0x3] %vm2726, %v2721
    %v2728 = vmul.f32 %v2721, %v2721
    %vm2729 = vcmask 17408
    %v2730 = vsel %vm2729, %v2728, 0.0
    %2731 = vadd.xlane.f32.xlu0 %v2730
    %v2732 = vpop.xlane.xlu0 %2731
    %2734 = vrot.lane.b32.xlu0 %v2728, 125
    %v2735 = vpop.permute.xlu0 %2734
    %v2737 = vsel %vm2729, %v2735, 0.0
    %2738 = vadd.xlane.f32.xlu0 %v2737
    %v2739 = vpop.xlane.xlu0 %2738
    %2740 = vrot.lane.b32.xlu0 %v2728, 122
    %v2741 = vpop.permute.xlu0 %2740
    %v2743 = vsel %vm2729, %v2741, 0.0
    %2744 = vadd.xlane.f32.xlu0 %v2743
    %v2745 = vpop.xlane.xlu0 %2744
    %2747 = vrot.lane.b32.xlu0 %v2721, 125
    %v2748 = vpop.permute.xlu0 %2747
    %v2750 = vmul.f32 %v2721, %v2748
    %v2751 = vsel %vm2729, %v2750, 0.0
    %2752 = vadd.xlane.f32.xlu0 %v2751
    %v2753 = vpop.xlane.xlu0 %2752
    %2754 = vrot.lane.b32.xlu0 %v2721, 122
    %v2755 = vpop.permute.xlu0 %2754
    %v2757 = vmul.f32 %v2721, %v2755
    %v2758 = vsel %vm2729, %v2757, 0.0
    %2759 = vadd.xlane.f32.xlu0 %v2758
    %v2760 = vpop.xlane.xlu0 %2759
    %2762 = vrot.lane.b32.xlu0 %v2750, 125
    %v2763 = vpop.permute.xlu0 %2762
    %v2765 = vsel %vm2729, %v2763, 0.0
    %2766 = vadd.xlane.f32.xlu0 %v2765
    %v2767 = vpop.xlane.xlu0 %2766
    %v2768 = vsub.f32 %v2732, 1.0
    %v2769 = vmul.f32 %v2768, %v2768
    %v2770 = vsub.f32 %v2739, 1.0
    %v2771 = vmul.f32 %v2770, %v2770
    %v2772 = vadd.f32 %v2769, %v2771
    %v2773 = vsub.f32 %v2745, 1.0
    %v2774 = vmul.f32 %v2773, %v2773
    %v2775 = vadd.f32 %v2772, %v2774
    %v2776 = vmul.f32 %v2753, %v2753
    %v2777 = vmul.f32 %v2760, %v2760
    %v2778 = vadd.f32 %v2776, %v2777
    %v2779 = vmul.f32 %v2767, %v2767
    %v2780 = vadd.f32 %v2778, %v2779
    %v2781 = vmul.f32 %v2780, 2.0
    %v2782 = vadd.f32 %v2775, %v2781
    %v2783 = vrsqrt.pop %v2782
    %v2784 = vmul.f32 %v2782, %v2783
    %vm2785 = vcmp.eq.f32.partialorder %v2782, inf
    %v2786 = vsel %vm2785, %v2782, %v2784
    %vm2787 = vcmp.eq.f32.partialorder %v2782, 0.0
    %v2788 = vand.u32 %v2782, 2147483648
    %v2789 = vsel %vm2787, %v2788, %v2786
    %vm2790 = vcmask 1041408
    %v2791 = vsel %vm2790, %v2789, 0.0
    %v2792 = vrot.slane %v2791, 4
    %v2793 = vadd.f32 %v2791, %v2792
    %v2794 = vrot.slane %v2793, 2
    %v2795 = vadd.f32 %v2793, %v2794
    %v2796 = vrot.slane %v2795, 1
    %v2797 = vadd.f32 %v2795, %v2796
    %v2798 = vrcp.pop 2.0
    %v2799 = vmul.f32 %v2797, %v2798
    %vm2800 = vcmask 0
    %2801 = vst.msk [vmem:[#allocation5] sm:$0x1] %vm2800, %v2799
    // Predicated region
    $region38: #{enhanced_stn_forward.3} parent=1 // pred_check
      _
    $region39: #{enhanced_stn_forward.3} parent=1 // pred_check_branch
      %2803 = sbr.rel (0) target = $region41
    $region40: #{enhanced_stn_forward.3} parent=1 // pred_region
      _
    $region41: #{enhanced_stn_forward.3} parent=1 // pred_fallthru
      _
    // Predicated region
    $region42: #{enhanced_stn_forward.3} parent=1 // pred_check
      _
    $region43: #{enhanced_stn_forward.3} parent=1 // pred_check_branch
      %2805 = sbr.rel (0) target = $region45
    $region44: #{enhanced_stn_forward.3} parent=1 // pred_region
      %s2807 = ssub.s32 16, 16
      %2808 = vsyncadd [#allocation4], %s2807
      %s2810 = sshll.u32 [#allocation5], 4
      %s2811 = int_to_ptr.vmem [resolvable:$true] %s2810
      %2813 = dma.vmem_to_hbm [thread:$0]  %s2811, 16, %s9, [#allocation4]
    $region45: #{enhanced_stn_forward.3} parent=1 // pred_fallthru
      _
    // Predicated region
    $region46: #{enhanced_stn_forward.3} parent=1 // pred_check
      _
    $region47: #{enhanced_stn_forward.3} parent=1 // pred_check_branch
      %2815 = sbr.rel (0) target = $region49
    $region48: #{enhanced_stn_forward.3} parent=1 // pred_region
      _
    $region49: #{enhanced_stn_forward.3} parent=1 // pred_fallthru
      _
    // Predicated region
    $region50: #{enhanced_stn_forward.3} parent=1 // pred_check
      _
    $region51: #{enhanced_stn_forward.3} parent=1 // pred_check_branch
      %2817 = sbr.rel (0) target = $region53
    $region52: #{enhanced_stn_forward.3} parent=1 // pred_region
      %2818 = dma.done [#allocation4], 16
    $region53: #{enhanced_stn_forward.3} parent=1 // pred_fallthru
      _
    %2819 = vsyncpa [#allocation3], 1
    %2820 = vsyncpa [#allocation4], 1

</llo_original>
